<compile_context>
chip_gen: v7x
topology: tpu7x:2x2x1
jax: 0.10.0
libtpu: 0.0.40
codegen_flags: <defaults>
</compile_context>

<pallas_src>
import numpy as np
import jax
import jax.numpy as jnp
from jax import lax
from jax.experimental import pallas as pl
from jax.experimental.pallas import tpu as pltpu


# ------------------------------------------------------------------ helpers

def _device_kind():
    try:
        return jax.devices()[0].device_kind.lower()
    except Exception:
        return ""


def _vmem_capacity_bytes():
    try:
        return int(pltpu.get_tpu_info().vmem_capacity_bytes)
    except Exception:
        return 64 * 1024 * 1024        # conservative (v7x-sized) fallback


def _choose_lane_planes(W, max_wt=512):
    """Planes packed side-by-side along the lane axis so Wt = PL*W % 128 == 0."""
    if W % 128 == 0:
        return 1                       # already lane-dense -> free reshape pack
    p = 1
    while p * W <= max_wt:
        if (p * W) % 128 == 0:
            return p
        p += 1
    return 1                           # fallback: accept partial last-vreg waste


def _choose_ps(n_groups, H, Wt, budget_bytes, use_mxu):
    """Plane-groups per grid step: as many as fit the budget, keeping G >= 2."""
    def step_bytes(ps):
        th = 2 * ps * H                           # x stacked on top of target
        plane = th * Wt * 4
        io = 2 * 2 * (ps * H * Wt * 4)            # 2 inputs x 2 pipeline buffers
        temps = 12 * plane                        # live f32 temporaries (upper bound)
        bands = 2 * 2 * Wt * Wt * 4 if use_mxu else 0
        return io + temps + bands

    if step_bytes(1) > budget_bytes:
        # TODO(synk): row-strip (halo) tiling instead of refusing.
        raise ValueError(
            "soft_edge_loss: one fused plane group (2*%d x %d f32) needs ~%d B "
            "of VMEM, over the per-step budget of %d B; halo tiling not implemented."
            % (H, Wt, step_bytes(1), budget_bytes))

    best = 1
    for ps in range(1, n_groups + 1):
        if n_groups % ps:
            continue
        if step_bytes(ps) > budget_bytes:
            continue
        if n_groups >= 2 and n_groups // ps < 2:
            continue                    # keep >=2 steps so v7x megacore can split
        best = ps
    return best


def _band_matrices(W, Wt):
    """Block-diagonal banded matrices B so that (tile @ B) is the W-direction
    3-tap pass with zero padding at every packed-plane boundary."""
    idx = np.arange(Wt)
    same = (idx[:, None] // W) == (idx[None, :] // W)
    d = idx[None, :] - idx[:, None]               # out_col - in_col
    bd = (same & (d == 1)).astype(np.float32) - (same & (d == -1)).astype(np.float32)
    bs = (same & (np.abs(d) == 1)).astype(np.float32) + 2.0 * (d == 0).astype(np.float32)
    return jnp.asarray(bd), jnp.asarray(bs)


# ------------------------------------------------------------------ kernel

def _make_kernel(H, W, PS, PL, Wt, use_mxu):
    Th = 2 * PS * H            # fused tile height: x planes on top, target below
    half = PS * H

    def _mod(v, m):
        if m & (m - 1) == 0:                       # power of two -> cheap AND
            return jnp.bitwise_and(v, m - 1)
        return v % m

    def _row_masks():
        row = lax.broadcasted_iota(jnp.int32, (Th, Wt), 0)
        rm = _mod(row, H)                          # plane seams (incl. x/t seam)
        return rm == 0, rm == H - 1

    def _col_masks():
        col = lax.broadcasted_iota(jnp.int32, (Th, Wt), 1)
        if PL == 1:
            return col == 0, col == Wt - 1
        cm = _mod(col, W)
        return cm == 0, cm == W - 1

    def _divergence(xt, h_shifts, wdiff, wsmooth):
        # Separable Sobel (cross-correlation, zero 'SAME' padding):
        #   KX = [1,2,1]_H (x) [1,0,-1]_W ,  KY = [1,0,-1]_H (x) [1,2,1]_W
        up, dn = h_shifts(xt)
        smooth_h = up + 2.0 * xt + dn              # [1,2,1] along H
        diff_h = up - dn                           # [1,0,-1] along H
        gx = wdiff(smooth_h)                       # conv(x, KX)
        gy = wsmooth(diff_h)                       # conv(x, KY)
        inv = lax.rsqrt(1.0 + gx * gx + gy * gy)   # EUP; multiplies, no divides
        gx = gx * inv
        gy = gy * inv
        gxu, gxd = h_shifts(gx)
        sm2 = gxu + 2.0 * gx + gxd
        gyu, gyd = h_shifts(gy)
        df2 = gyu - gyd
        return wdiff(sm2) + wsmooth(df2)           # conv(gx,KX) + conv(gy,KY)

    def _body(x_ref, t_ref, out_ref, wdiff, wsmooth):
        # Fuse x / target into one tile -> one pass, half the instruction count.
        xt = jnp.concatenate([x_ref[0], t_ref[0]], axis=0)
        row_first, row_last = _row_masks()

        def h_shifts(a):
            up = jnp.where(row_first, 0.0, pltpu.roll(a, shift=1, axis=0))
            dn = jnp.where(row_last, 0.0, pltpu.roll(a, shift=Th - 1, axis=0))
            return up, dn

        div = _divergence(xt, h_shifts, wdiff, wsmooth)
        xd = jnp.maximum(div[:half], 0.0)          # relu(soft_divergence(x))
        td = jnp.maximum(div[half:], 0.0)          # relu(soft_divergence(target))
        out_ref[...] = jnp.broadcast_to(jnp.sum(jnp.abs(xd - td)), (1, 1, 1))

    if use_mxu:
        def kernel(x_ref, t_ref, bd_ref, bs_ref, out_ref):
            bd = bd_ref[...]
            bs = bs_ref[...]
            # precision=HIGHEST: exact-f32 banded matmul (band values exact in bf16).
            wdiff = lambda a: jnp.dot(a, bd, preferred_element_type=jnp.float32,
                                      precision=lax.Precision.HIGHEST)
            wsmooth = lambda a: jnp.dot(a, bs, preferred_element_type=jnp.float32,
                                        precision=lax.Precision.HIGHEST)
            _body(x_ref, t_ref, out_ref, wdiff, wsmooth)
        return kernel

    def kernel(x_ref, t_ref, out_ref):
        col_first, col_last = _col_masks()

        def wdiff(a):
            lf = jnp.where(col_first, 0.0, pltpu.roll(a, shift=1, axis=1))
            rt = jnp.where(col_last, 0.0, pltpu.roll(a, shift=Wt - 1, axis=1))
            return lf - rt

        def wsmooth(a):
            lf = jnp.where(col_first, 0.0, pltpu.roll(a, shift=1, axis=1))
            rt = jnp.where(col_last, 0.0, pltpu.roll(a, shift=Wt - 1, axis=1))
            return lf + 2.0 * a + rt

        _body(x_ref, t_ref, out_ref, wdiff, wsmooth)
    return kernel


# ------------------------------------------------------------------ wrapper

def soft_edge_loss(x, target, *, use_mxu_wpass=None):
    """x, target: (B, 3, H, W).  Returns the scalar L1 loss (mean), matching
    soft_edge_loss.forward of the PyTorch module."""
    assert x.shape == target.shape
    B, C, H, W = x.shape
    assert C == 3, "soft_edge_loss operates on the 3 (RGB) channels"
    N = B * C

    # ---- packing geometry (lane-dense vregs, HBM-cheap when W % 128 == 0) ----
    PL = _choose_lane_planes(W)
    Wt = PL * W
    Npad = ((N + PL - 1) // PL) * PL               # zero-plane padding (contributes 0)
    n_groups = Npad // PL

    kind = _device_kind()
    if use_mxu_wpass is None:
        # Banded-MXU W pass only where its 4*Wt*3 bf16 MACs/elem stay below the
        # ~16 VALU ops/elem it replaces: post-v5 chips and Wt == 128 exactly.
        use_mxu = (Wt % 128 == 0 and Wt <= 128
                   and not any(v in kind for v in ("v2", "v3", "v4", "v5")))
    else:
        use_mxu = bool(use_mxu_wpass) and Wt % 128 == 0

    # ---- generation-aware VMEM budget ----
    vmem_cap = _vmem_capacity_bytes()
    vmem_limit = max(16 * 2**20, min(vmem_cap // 2, 64 * 2**20))
    step_budget = vmem_limit // 2

    PS = _choose_ps(n_groups, H, Wt, step_budget, use_mxu)
    G = n_groups // PS

    def pack(a):
        a = a.astype(jnp.float32).reshape(N, H, W)
        if Npad != N:
            a = jnp.concatenate([a, jnp.zeros((Npad - N, H, W), jnp.float32)], 0)
        if PL > 1:   # lane-pack PL planes side by side (only needed when W < 128)
            a = a.reshape(n_groups, PL, H, W).transpose(0, 2, 1, 3)
        return a.reshape(G, PS * H, Wt)            # PS groups stacked along sublanes

    xp = pack(x)
    tp = pack(target)

    kernel = _make_kernel(H, W, PS, PL, Wt, use_mxu)
    in_specs = [pl.BlockSpec((1, PS * H, Wt), lambda i: (i, 0, 0)),
                pl.BlockSpec((1, PS * H, Wt), lambda i: (i, 0, 0))]
    args = [xp, tp]
    if use_mxu:
        bd, bs = _band_matrices(W, Wt)
        in_specs += [pl.BlockSpec((Wt, Wt), lambda i: (0, 0)),   # resident in VMEM
                     pl.BlockSpec((Wt, Wt), lambda i: (0, 0))]
        args += [bd, bs]

    partials = pl.pallas_call(
        kernel,
        out_shape=jax.ShapeDtypeStruct((G, 1, 1), jnp.float32),
        grid_spec=pltpu.PrefetchScalarGridSpec(
            num_scalar_prefetch=0,
            grid=(G,),
            in_specs=in_specs,
            out_specs=pl.BlockSpec((1, 1, 1), lambda i: (i, 0, 0))),
        compiler_params=pltpu.CompilerParams(
            dimension_semantics=("parallel",),     # independent steps -> both TCs on v7x
            vmem_limit_bytes=int(vmem_limit)),
    )(*args)

    # torch.nn.L1Loss(reduction='mean') over the TRUE B*3*H*W elements.
    return jnp.sum(partials) / jnp.float32(N * H * W)


# ---------------- pure-JAX reference (for validation) ----------------
KX = ((1.0, 0.0, -1.0), (2.0, 0.0, -2.0), (1.0, 0.0, -1.0))
KY = ((1.0, 2.0, 1.0), (0.0, 0.0, 0.0), (-1.0, -2.0, -1.0))


def _ref_soft_divergence(x):
    kx = jnp.asarray(KX, jnp.float32).reshape(1, 1, 3, 3)
    ky = jnp.asarray(KY, jnp.float32).reshape(1, 1, 3, 3)

    def conv(img, k):  # img: (N,1,H,W)
        return lax.conv_general_dilated(
            img, k, (1, 1), 'SAME',
            dimension_numbers=('NCHW', 'OIHW', 'NCHW'),
            precision=lax.Precision.HIGHEST)

    outs = []
    for c in range(3):
        xc = x[:, c:c + 1]
        gx = conv(xc, kx)
        gy = conv(xc, ky)
        m = jnp.sqrt(1.0 + gx * gx + gy * gy)
        outs.append(conv(gx / m, kx) + conv(gy / m, ky))
    return jnp.concatenate(outs, axis=1)


def _ref_loss(x, target):
    xd = jax.nn.relu(_ref_soft_divergence(x))
    td = jax.nn.relu(_ref_soft_divergence(target))
    return jnp.mean(jnp.abs(xd - td))


if __name__ == "__main__":
    key = jax.random.PRNGKey(0)
    k1, k2 = jax.random.split(key)
    B, C, H, W = 2, 3, 16, 16
    x = jax.random.normal(k1, (B, C, H, W), dtype=jnp.float32)
    target = jax.random.normal(k2, (B, C, H, W), dtype=jnp.float32)

    ref = jax.block_until_ready(_ref_loss(x, target))

    # Auto path (banded-MXU W pass on v6e/v7x, rolls on v5e).
    loss = jax.block_until_ready(jax.jit(soft_edge_loss)(x, target))
    assert jnp.allclose(loss, ref, atol=1e-4, rtol=1e-4), (loss, ref)

    # Roll-only path (used for W >= 128 and on v5e) checked at tight f32 tolerance.
    loss_rolls = jax.block_until_ready(
        jax.jit(lambda a, b: soft_edge_loss(a, b, use_mxu_wpass=False))(x, target))
    assert jnp.allclose(loss_rolls, ref, atol=2e-5, rtol=2e-5), (loss_rolls, ref)

    print("KERNEL_OK")
</pallas_src>

<mosaic_0001>
module attributes {stable_mosaic.version = 11 : i64} {
  func.func @kernel(%arg0: i32, %arg1: memref<1x16x128xf32, #tpu.memory_space<vmem>>, %arg2: memref<1x16x128xf32, #tpu.memory_space<vmem>>, %arg3: memref<128x128xf32, #tpu.memory_space<vmem>>, %arg4: memref<128x128xf32, #tpu.memory_space<vmem>>, %arg5: memref<1x1x1xf32, #tpu.memory_space<vmem>>) attributes {dimension_semantics = [#tpu.dimension_semantics<parallel>], iteration_bounds = array<i64: 1>, scalar_prefetch = 0 : i64, scratch_operands = 0 : i64, tpu.core_type = #tpu.core_type<tc>, window_params = [{transform_indices = @transform_0, window_bounds = array<i64: 1, 16, 128>}, {transform_indices = @transform_1, window_bounds = array<i64: 1, 16, 128>}, {pipeline_mode = #tpu.pipeline_mode<synchronous>, transform_indices = @transform_2, window_bounds = array<i64: 128, 128>}, {pipeline_mode = #tpu.pipeline_mode<synchronous>, transform_indices = @transform_3, window_bounds = array<i64: 128, 128>}, {transform_indices = @transform_4, window_bounds = array<i64: 1, 1, 1>}]} {
    %c0 = arith.constant 0 : index
    %c0_0 = arith.constant 0 : index
    %0 = vector.load %arg3[%c0, %c0_0] : memref<128x128xf32, #tpu.memory_space<vmem>>, vector<128x128xf32>
    %c0_1 = arith.constant 0 : index
    %c0_2 = arith.constant 0 : index
    %1 = vector.load %arg4[%c0_1, %c0_2] : memref<128x128xf32, #tpu.memory_space<vmem>>, vector<128x128xf32>
    %c0_3 = arith.constant 0 : index
    %c0_4 = arith.constant 0 : index
    %c0_5 = arith.constant 0 : index
    %2 = vector.load %arg1[%c0_3, %c0_4, %c0_5] : memref<1x16x128xf32, #tpu.memory_space<vmem>>, vector<1x16x128xf32>
    %3 = vector.shape_cast %2 : vector<1x16x128xf32> to vector<16x128xf32>
    %c0_6 = arith.constant 0 : index
    %c0_7 = arith.constant 0 : index
    %c0_8 = arith.constant 0 : index
    %4 = vector.load %arg2[%c0_6, %c0_7, %c0_8] : memref<1x16x128xf32, #tpu.memory_space<vmem>>, vector<1x16x128xf32>
    %5 = vector.shape_cast %4 : vector<1x16x128xf32> to vector<16x128xf32>
    %6 = tpu.concatenate %3, %5 in 0 : vector<16x128xf32>, vector<16x128xf32> -> vector<32x128xf32>
    %7 = tpu.iota {dimensions = array<i32: 0>} : vector<32x128xi32>
    %c15_i32 = arith.constant 15 : i32
    %8 = vector.broadcast %c15_i32 : i32 to vector<32x128xi32>
    %9 = arith.andi %7, %8 : vector<32x128xi32>
    %c0_i32 = arith.constant 0 : i32
    %10 = vector.broadcast %c0_i32 : i32 to vector<32x128xi32>
    %11 = arith.cmpi eq, %9, %10 : vector<32x128xi32>
    %c15_i32_9 = arith.constant 15 : i32
    %12 = vector.broadcast %c15_i32_9 : i32 to vector<32x128xi32>
    %13 = arith.cmpi eq, %9, %12 : vector<32x128xi32>
    %c1_i32 = arith.constant 1 : i32
    %14 = tpu.dynamic_rotate %6 by %c1_i32 dim 0 : vector<32x128xf32>, i32 -> vector<32x128xf32>
    %cst = arith.constant 0.000000e+00 : f32
    %15 = vector.broadcast %cst : f32 to vector<32x128xf32>
    %16 = arith.select %11, %15, %14 : vector<32x128xi1>, vector<32x128xf32>
    %c31_i32 = arith.constant 31 : i32
    %17 = tpu.dynamic_rotate %6 by %c31_i32 dim 0 : vector<32x128xf32>, i32 -> vector<32x128xf32>
    %cst_10 = arith.constant 0.000000e+00 : f32
    %18 = vector.broadcast %cst_10 : f32 to vector<32x128xf32>
    %19 = arith.select %13, %18, %17 : vector<32x128xi1>, vector<32x128xf32>
    %cst_11 = arith.constant 2.000000e+00 : f32
    %20 = vector.broadcast %cst_11 : f32 to vector<32x128xf32>
    %21 = arith.mulf %20, %6 : vector<32x128xf32>
    %22 = arith.addf %16, %21 : vector<32x128xf32>
    %23 = arith.addf %22, %19 : vector<32x128xf32>
    %24 = arith.subf %16, %19 : vector<32x128xf32>
    %cst_12 = arith.constant dense<0.000000e+00> : vector<32x128xf32>
    %25 = tpu.matmul %23, %0, %cst_12 {dimension_numbers = #tpu.dot_dimension_numbers<[1], [0], [0], [1], [0, 0, 1, 1], [], []>, precision = #tpu.contract_precision<fp32>} : vector<32x128xf32>, vector<128x128xf32>, vector<32x128xf32> -> vector<32x128xf32>
    %cst_13 = arith.constant dense<0.000000e+00> : vector<32x128xf32>
    %26 = tpu.matmul %24, %1, %cst_13 {dimension_numbers = #tpu.dot_dimension_numbers<[1], [0], [0], [1], [0, 0, 1, 1], [], []>, precision = #tpu.contract_precision<fp32>} : vector<32x128xf32>, vector<128x128xf32>, vector<32x128xf32> -> vector<32x128xf32>
    %27 = arith.mulf %25, %25 : vector<32x128xf32>
    %cst_14 = arith.constant 1.000000e+00 : f32
    %28 = vector.broadcast %cst_14 : f32 to vector<32x128xf32>
    %29 = arith.addf %28, %27 : vector<32x128xf32>
    %30 = arith.mulf %26, %26 : vector<32x128xf32>
    %31 = arith.addf %29, %30 : vector<32x128xf32>
    %32 = math.rsqrt %31 : vector<32x128xf32>
    %33 = arith.mulf %25, %32 : vector<32x128xf32>
    %34 = arith.mulf %26, %32 : vector<32x128xf32>
    %c1_i32_15 = arith.constant 1 : i32
    %35 = tpu.dynamic_rotate %33 by %c1_i32_15 dim 0 : vector<32x128xf32>, i32 -> vector<32x128xf32>
    %cst_16 = arith.constant 0.000000e+00 : f32
    %36 = vector.broadcast %cst_16 : f32 to vector<32x128xf32>
    %37 = arith.select %11, %36, %35 : vector<32x128xi1>, vector<32x128xf32>
    %c31_i32_17 = arith.constant 31 : i32
    %38 = tpu.dynamic_rotate %33 by %c31_i32_17 dim 0 : vector<32x128xf32>, i32 -> vector<32x128xf32>
    %cst_18 = arith.constant 0.000000e+00 : f32
    %39 = vector.broadcast %cst_18 : f32 to vector<32x128xf32>
    %40 = arith.select %13, %39, %38 : vector<32x128xi1>, vector<32x128xf32>
    %cst_19 = arith.constant 2.000000e+00 : f32
    %41 = vector.broadcast %cst_19 : f32 to vector<32x128xf32>
    %42 = arith.mulf %41, %33 : vector<32x128xf32>
    %43 = arith.addf %37, %42 : vector<32x128xf32>
    %44 = arith.addf %43, %40 : vector<32x128xf32>
    %c1_i32_20 = arith.constant 1 : i32
    %45 = tpu.dynamic_rotate %34 by %c1_i32_20 dim 0 : vector<32x128xf32>, i32 -> vector<32x128xf32>
    %cst_21 = arith.constant 0.000000e+00 : f32
    %46 = vector.broadcast %cst_21 : f32 to vector<32x128xf32>
    %47 = arith.select %11, %46, %45 : vector<32x128xi1>, vector<32x128xf32>
    %c31_i32_22 = arith.constant 31 : i32
    %48 = tpu.dynamic_rotate %34 by %c31_i32_22 dim 0 : vector<32x128xf32>, i32 -> vector<32x128xf32>
    %cst_23 = arith.constant 0.000000e+00 : f32
    %49 = vector.broadcast %cst_23 : f32 to vector<32x128xf32>
    %50 = arith.select %13, %49, %48 : vector<32x128xi1>, vector<32x128xf32>
    %51 = arith.subf %47, %50 : vector<32x128xf32>
    %cst_24 = arith.constant dense<0.000000e+00> : vector<32x128xf32>
    %52 = tpu.matmul %44, %0, %cst_24 {dimension_numbers = #tpu.dot_dimension_numbers<[1], [0], [0], [1], [0, 0, 1, 1], [], []>, precision = #tpu.contract_precision<fp32>} : vector<32x128xf32>, vector<128x128xf32>, vector<32x128xf32> -> vector<32x128xf32>
    %cst_25 = arith.constant dense<0.000000e+00> : vector<32x128xf32>
    %53 = tpu.matmul %51, %1, %cst_25 {dimension_numbers = #tpu.dot_dimension_numbers<[1], [0], [0], [1], [0, 0, 1, 1], [], []>, precision = #tpu.contract_precision<fp32>} : vector<32x128xf32>, vector<128x128xf32>, vector<32x128xf32> -> vector<32x128xf32>
    %54 = arith.addf %52, %53 : vector<32x128xf32>
    %55 = vector.extract_strided_slice %54 {offsets = [0, 0], sizes = [16, 128], strides = [1, 1]} : vector<32x128xf32> to vector<16x128xf32>
    %cst_26 = arith.constant 0.000000e+00 : f32
    %56 = vector.broadcast %cst_26 : f32 to vector<16x128xf32>
    %57 = arith.maximumf %55, %56 : vector<16x128xf32>
    %58 = vector.extract_strided_slice %54 {offsets = [16, 0], sizes = [16, 128], strides = [1, 1]} : vector<32x128xf32> to vector<16x128xf32>
    %cst_27 = arith.constant 0.000000e+00 : f32
    %59 = vector.broadcast %cst_27 : f32 to vector<16x128xf32>
    %60 = arith.maximumf %58, %59 : vector<16x128xf32>
    %61 = arith.subf %57, %60 : vector<16x128xf32>
    %62 = math.absf %61 : vector<16x128xf32>
    %63 = vector.shape_cast %62 : vector<16x128xf32> to vector<1x16x128xf32>
    %cst_28 = arith.constant dense<0.000000e+00> : vector<1xf32>
    %64 = vector.multi_reduction <add>, %63, %cst_28 [1, 2] : vector<1x16x128xf32> to vector<1xf32>
    %65 = vector.shape_cast %64 : vector<1xf32> to vector<1x1x1xf32>
    %66 = vector.extract %65[0, 0, 0] : f32 from vector<1x1x1xf32>
    %67 = vector.broadcast %66 : f32 to vector<1x1x1xf32>
    %c0_29 = arith.constant 0 : index
    %c0_30 = arith.constant 0 : index
    %c0_31 = arith.constant 0 : index
    %68 = vector.load %arg5[%c0_29, %c0_30, %c0_31] : memref<1x1x1xf32, #tpu.memory_space<vmem>>, vector<1x1x1xf32>
    tpu.vector_store %arg5[%c0_29, %c0_30, %c0_31], %67 {strides = array<i32>} : memref<1x1x1xf32, #tpu.memory_space<vmem>>, vector<1x1x1xf32>,
    return
  }
  func.func @transform_0(%arg0: i32) -> (i32, i32, i32) {
    %c0_i32 = arith.constant 0 : i32
    %c0_i32_0 = arith.constant 0 : i32
    %c0_i32_1 = arith.constant 0 : i32
    return %arg0, %c0_i32, %c0_i32_0 : i32, i32, i32
  }
  func.func @transform_1(%arg0: i32) -> (i32, i32, i32) {
    %c0_i32 = arith.constant 0 : i32
    %c0_i32_0 = arith.constant 0 : i32
    %c0_i32_1 = arith.constant 0 : i32
    return %arg0, %c0_i32, %c0_i32_0 : i32, i32, i32
  }
  func.func @transform_2(%arg0: i32) -> (i32, i32) {
    %c0_i32 = arith.constant 0 : i32
    %c0_i32_0 = arith.constant 0 : i32
    %c0_i32_1 = arith.constant 0 : i32
    return %c0_i32, %c0_i32_0 : i32, i32
  }
  func.func @transform_3(%arg0: i32) -> (i32, i32) {
    %c0_i32 = arith.constant 0 : i32
    %c0_i32_0 = arith.constant 0 : i32
    %c0_i32_1 = arith.constant 0 : i32
    return %c0_i32, %c0_i32_0 : i32, i32
  }
  func.func @transform_4(%arg0: i32) -> (i32, i32, i32) {
    %c0_i32 = arith.constant 0 : i32
    %c0_i32_0 = arith.constant 0 : i32
    %c0_i32_1 = arith.constant 0 : i32
    return %arg0, %c0_i32, %c0_i32_0 : i32, i32, i32
  }
}

</mosaic_0001>

<llo_original>
// kernel: soft_edge_loss.1
$region0: #{soft_edge_loss.1}
  #allocation0 [shape = 'u32[]', space=smem, size = 0x4, offset = 0x4, fixed_abs, tag = 'smem constant byte address 0x4 - core index']
  #allocation1 [shape = 'u32[144,128]{1,0:T(1,128)}', space=vmem, size = 0x12000, scoped, tag = 'internal scratch']
  %s0 = inlined_call_operand.vmem [shape: f32[1,16,128], index: 0, kind: input, shape index: {}]
  %s1 = inlined_call_operand.vmem [shape: f32[1,16,128], index: 1, kind: input, shape index: {}]
  %s2 = inlined_call_operand.vmem [shape: f32[128,128], index: 2, kind: input, shape index: {}]
  %s3 = inlined_call_operand.vmem [shape: f32[128,128], index: 3, kind: input, shape index: {}]
  %s4 = inlined_call_operand.hbm [shape: f32[1,1,1], index: 4, kind: output, shape index: {}]
  %s5 = sld [smem:[#allocation0]]
  $region26: #{soft_edge_loss.1} parent=0
    _
  %s7 = ssub.s32 1, %s5
  %s8 = scalar_select 0, %s7, %s5
  $region1: #{soft_edge_loss.1} parent=0
    #allocation2 [shape = 'u8[512]{0}', space=vmem, size = 0x400, scoped, tag = 'output window, operand 0, single buffered']
    #allocation3 [shape = 's32[1]{0}', space=sflag, size = 0x4, scoped, tag = 'scoped memory for soft_edge_loss.1']
    %9 = vsyncpa [#allocation3], 0
    // Predicated region
    $region2: #{soft_edge_loss.1} parent=1 // pred_check
      _
    $region3: #{soft_edge_loss.1} parent=1 // pred_check_branch
      %11 = sbr.rel (0) target = $region5
    $region4: #{soft_edge_loss.1} parent=1 // pred_region
      _
    $region5: #{soft_edge_loss.1} parent=1 // pred_fallthru
      _
    // Predicated region
    $region6: #{soft_edge_loss.1} parent=1 // pred_check
      _
    $region7: #{soft_edge_loss.1} parent=1 // pred_check_branch
      %13 = sbr.rel (0) target = $region9
    $region8: #{soft_edge_loss.1} parent=1 // pred_region
      _
    $region9: #{soft_edge_loss.1} parent=1 // pred_fallthru
      _
    // Predicated region
    $region10: #{soft_edge_loss.1} parent=1 // pred_check
      _
    $region11: #{soft_edge_loss.1} parent=1 // pred_check_branch
      %15 = sbr.rel (0) target = $region13
    $region12: #{soft_edge_loss.1} parent=1 // pred_region
      _
    $region13: #{soft_edge_loss.1} parent=1 // pred_fallthru
      _
    // Predicated region
    $region14: #{soft_edge_loss.1} parent=1 // pred_check
      _
    $region15: #{soft_edge_loss.1} parent=1 // pred_check_branch
      %17 = sbr.rel (0) target = $region17
    $region16: #{soft_edge_loss.1} parent=1 // pred_region
      _
    $region17: #{soft_edge_loss.1} parent=1 // pred_fallthru
      _
    %v18 = vld [vmem:[%s2] sm:$0xff]
    %v19 = vld [vmem:[%s2 + $0x8] sm:$0xff]
    %v20 = vld [vmem:[%s2 + $0x10] sm:$0xff]
    %v21 = vld [vmem:[%s2 + $0x18] sm:$0xff]
    %v22 = vld [vmem:[%s2 + $0x20] sm:$0xff]
    %v23 = vld [vmem:[%s2 + $0x28] sm:$0xff]
    %v24 = vld [vmem:[%s2 + $0x30] sm:$0xff]
    %v25 = vld [vmem:[%s2 + $0x38] sm:$0xff]
    %v26 = vld [vmem:[%s2 + $0x40] sm:$0xff]
    %v27 = vld [vmem:[%s2 + $0x48] sm:$0xff]
    %v28 = vld [vmem:[%s2 + $0x50] sm:$0xff]
    %v29 = vld [vmem:[%s2 + $0x58] sm:$0xff]
    %v30 = vld [vmem:[%s2 + $0x60] sm:$0xff]
    %v31 = vld [vmem:[%s2 + $0x68] sm:$0xff]
    %v32 = vld [vmem:[%s2 + $0x70] sm:$0xff]
    %v33 = vld [vmem:[%s2 + $0x78] sm:$0xff]
    %v34 = vld [vmem:[%s3] sm:$0xff]
    %v35 = vld [vmem:[%s3 + $0x8] sm:$0xff]
    %v36 = vld [vmem:[%s3 + $0x10] sm:$0xff]
    %v37 = vld [vmem:[%s3 + $0x18] sm:$0xff]
    %v38 = vld [vmem:[%s3 + $0x20] sm:$0xff]
    %v39 = vld [vmem:[%s3 + $0x28] sm:$0xff]
    %v40 = vld [vmem:[%s3 + $0x30] sm:$0xff]
    %v41 = vld [vmem:[%s3 + $0x38] sm:$0xff]
    %v42 = vld [vmem:[%s3 + $0x40] sm:$0xff]
    %v43 = vld [vmem:[%s3 + $0x48] sm:$0xff]
    %v44 = vld [vmem:[%s3 + $0x50] sm:$0xff]
    %v45 = vld [vmem:[%s3 + $0x58] sm:$0xff]
    %v46 = vld [vmem:[%s3 + $0x60] sm:$0xff]
    %v47 = vld [vmem:[%s3 + $0x68] sm:$0xff]
    %v48 = vld [vmem:[%s3 + $0x70] sm:$0xff]
    %v49 = vld [vmem:[%s3 + $0x78] sm:$0xff]
    %v50 = vld [vmem:[%s0] sm:$0xff]
    %v51 = vld [vmem:[%s0 + $0x8] sm:$0xff]
    %v52 = vld [vmem:[%s1] sm:$0xff]
    %v53 = vld [vmem:[%s1 + $0x8] sm:$0xff]
    %v54 = vlaneseq
    %v55 = vshrl.u32 %v54, 7
    %v56 = vadd.s32 %v55, 8
    %v57 = vadd.s32 %v55, 16
    %v58 = vadd.s32 %v55, 24
    %v59 = vand.u32 %v55, 15
    %v60 = vand.u32 %v56, 15
    %v61 = vand.u32 %v57, 15
    %v62 = vand.u32 %v58, 15
    %vm63 = vcmp.eq.s32.totalorder %v59, 0
    %vm64 = vcmp.eq.s32.totalorder %v60, 0
    %vm65 = vcmp.eq.s32.totalorder %v61, 0
    %vm66 = vcmp.eq.s32.totalorder %v62, 0
    %vm67 = vcmp.eq.s32.totalorder %v59, 15
    %vm68 = vcmp.eq.s32.totalorder %v60, 15
    %vm69 = vcmp.eq.s32.totalorder %v61, 15
    %vm70 = vcmp.eq.s32.totalorder %v62, 15
    %v71 = vrot.slane %v50, 7
    %v72 = vrot.slane %v51, 7
    %v73 = vrot.slane %v52, 7
    %v74 = vrot.slane %v53, 7
    %vm75 = vcmp.lt.s32.totalorder %v55, 1
    %v76 = vsel %vm75, %v73, %v74
    %v77 = vsel %vm75, %v72, %v73
    %v78 = vsel %vm75, %v71, %v72
    %v79 = vsel %vm75, %v74, %v71
    %v80 = vsel %vm63, 0.0, %v79
    %v81 = vsel %vm64, 0.0, %v78
    %v82 = vsel %vm65, 0.0, %v77
    %v83 = vsel %vm66, 0.0, %v76
    %v84 = vrot.slane %v50, 1
    %v85 = vrot.slane %v51, 1
    %v86 = vrot.slane %v52, 1
    %v87 = vrot.slane %v53, 1
    %vm88 = vcmp.lt.s32.totalorder %v55, 7
    %v89 = vsel %vm88, %v86, %v87
    %v90 = vsel %vm88, %v85, %v86
    %v91 = vsel %vm88, %v84, %v85
    %v92 = vsel %vm88, %v87, %v84
    %v93 = vsel %vm67, 0.0, %v91
    %v94 = vsel %vm68, 0.0, %v90
    %v95 = vsel %vm69, 0.0, %v89
    %v96 = vsel %vm70, 0.0, %v92
    %v97 = vmul.f32 %v50, 2.0
    %v98 = vmul.f32 %v51, 2.0
    %v99 = vmul.f32 %v52, 2.0
    %v100 = vmul.f32 %v53, 2.0
    %v101 = vadd.f32 %v80, %v97
    %v102 = vadd.f32 %v81, %v98
    %v103 = vadd.f32 %v82, %v99
    %v104 = vadd.f32 %v83, %v100
    %v105 = vadd.f32 %v101, %v93
    %v106 = vadd.f32 %v102, %v94
    %v107 = vadd.f32 %v103, %v95
    %v108 = vadd.f32 %v104, %v96
    %v109 = vsub.f32 %v80, %v93
    %v110 = vsub.f32 %v81, %v94
    %v111 = vsub.f32 %v82, %v95
    %v112 = vsub.f32 %v83, %v96
    %113 = vmatprep.subr.mxu0 0.0
    %v114 = vand.u32 %v18, 4294901760
    %115 = vmatpush1.msra.mxu0 %v114
    %116 = vmatprep.subr.mxu0 0.0
    %v117 = vand.u32 %v19, 4294901760
    %118 = vmatpush1.msra.mxu0 %v117
    %119 = vmatprep.subr.mxu0 0.0
    %v120 = vand.u32 %v20, 4294901760
    %121 = vmatpush1.msra.mxu0 %v120
    %122 = vmatprep.subr.mxu0 0.0
    %v123 = vand.u32 %v21, 4294901760
    %124 = vmatpush1.msra.mxu0 %v123
    %125 = vmatprep.subr.mxu0 0.0
    %v126 = vand.u32 %v22, 4294901760
    %127 = vmatpush1.msra.mxu0 %v126
    %128 = vmatprep.subr.mxu0 0.0
    %v129 = vand.u32 %v23, 4294901760
    %130 = vmatpush1.msra.mxu0 %v129
    %131 = vmatprep.subr.mxu0 0.0
    %v132 = vand.u32 %v24, 4294901760
    %133 = vmatpush1.msra.mxu0 %v132
    %134 = vmatprep.subr.mxu0 0.0
    %v135 = vand.u32 %v25, 4294901760
    %136 = vmatpush1.msra.mxu0 %v135
    %137 = vmatprep.subr.mxu0 0.0
    %v138 = vand.u32 %v26, 4294901760
    %139 = vmatpush1.msra.mxu0 %v138
    %140 = vmatprep.subr.mxu0 0.0
    %v141 = vand.u32 %v27, 4294901760
    %142 = vmatpush1.msra.mxu0 %v141
    %143 = vmatprep.subr.mxu0 0.0
    %v144 = vand.u32 %v28, 4294901760
    %145 = vmatpush1.msra.mxu0 %v144
    %146 = vmatprep.subr.mxu0 0.0
    %v147 = vand.u32 %v29, 4294901760
    %148 = vmatpush1.msra.mxu0 %v147
    %149 = vmatprep.subr.mxu0 0.0
    %v150 = vand.u32 %v30, 4294901760
    %151 = vmatpush1.msra.mxu0 %v150
    %152 = vmatprep.subr.mxu0 0.0
    %v153 = vand.u32 %v31, 4294901760
    %154 = vmatpush1.msra.mxu0 %v153
    %155 = vmatprep.subr.mxu0 0.0
    %v156 = vand.u32 %v32, 4294901760
    %157 = vmatpush1.msra.mxu0 %v156
    %158 = vmatprep.subr.mxu0 0.0
    %v159 = vand.u32 %v33, 4294901760
    %160 = vmatpush1.msra.mxu0 %v159
    %161 = vmatprep.subr.mxu0 0.0
    %162 = vmatpush1.msra.mxu0 0.0
    %163 = vmatprep.subr.mxu0 0.0
    %164 = vmatpush1.msra.mxu0 0.0
    %165 = vmatprep.subr.mxu0 0.0
    %166 = vmatpush1.msra.mxu0 0.0
    %167 = vmatprep.subr.mxu0 0.0
    %168 = vmatpush1.msra.mxu0 0.0
    %169 = vmatprep.subr.mxu0 0.0
    %170 = vmatpush1.msra.mxu0 0.0
    %171 = vmatprep.subr.mxu0 0.0
    %172 = vmatpush1.msra.mxu0 0.0
    %173 = vmatprep.subr.mxu0 0.0
    %174 = vmatpush1.msra.mxu0 0.0
    %175 = vmatprep.subr.mxu0 0.0
    %176 = vmatpush1.msra.mxu0 0.0
    %177 = vmatprep.subr.mxu0 0.0
    %178 = vmatpush1.msra.mxu0 0.0
    %179 = vmatprep.subr.mxu0 0.0
    %180 = vmatpush1.msra.mxu0 0.0
    %181 = vmatprep.subr.mxu0 0.0
    %182 = vmatpush1.msra.mxu0 0.0
    %183 = vmatprep.subr.mxu0 0.0
    %184 = vmatpush1.msra.mxu0 0.0
    %185 = vmatprep.subr.mxu0 0.0
    %186 = vmatpush1.msra.mxu0 0.0
    %187 = vmatprep.subr.mxu0 0.0
    %188 = vmatpush1.msra.mxu0 0.0
    %189 = vmatprep.subr.mxu0 0.0
    %190 = vmatpush1.msra.mxu0 0.0
    %191 = vmatprep.subr.mxu0 0.0
    %192 = vmatpush1.msra.mxu0 0.0
    %193 = vmatprep.mubr.f32.mxu0 0.0
    %v194 = vand.u32 %v105, 4294901760
    %v195 = vsub.f32 %v105, %v194
    %v196 = vand.u32 %v195, 4294901760
    %v197 = vsub.f32 %v195, %v196
    %v198 = vand.u32 %v197, 4294901760
    %199 = vmatmul.mubr.f32.gmra.mrb[0].mxu0 %v198
    %v200 = vpop.f32.mrb[0].mxu0
    %v201 = vadd.f32 0.0, %v200
    %v202 = vpop.f32.mrb[0].mxu0
    %203 = vmatprep.mubr.f32.mxu0 0.0
    %v204 = vand.u32 %v106, 4294901760
    %v205 = vsub.f32 %v106, %v204
    %v206 = vand.u32 %v205, 4294901760
    %v207 = vsub.f32 %v205, %v206
    %v208 = vand.u32 %v207, 4294901760
    %209 = vmatmul.mubr.f32.gmra.mrb[0].mxu0 %v208
    %v210 = vpop.f32.mrb[0].mxu0
    %v211 = vadd.f32 0.0, %v210
    %v212 = vpop.f32.mrb[0].mxu0
    %213 = vmatprep.mubr.f32.mxu0 0.0
    %v214 = vand.u32 %v107, 4294901760
    %v215 = vsub.f32 %v107, %v214
    %v216 = vand.u32 %v215, 4294901760
    %v217 = vsub.f32 %v215, %v216
    %v218 = vand.u32 %v217, 4294901760
    %219 = vmatmul.mubr.f32.gmra.mrb[0].mxu0 %v218
    %v220 = vpop.f32.mrb[0].mxu0
    %v221 = vadd.f32 0.0, %v220
    %v222 = vpop.f32.mrb[0].mxu0
    %223 = vmatprep.mubr.f32.mxu0 0.0
    %v224 = vand.u32 %v108, 4294901760
    %v225 = vsub.f32 %v108, %v224
    %v226 = vand.u32 %v225, 4294901760
    %v227 = vsub.f32 %v225, %v226
    %v228 = vand.u32 %v227, 4294901760
    %229 = vmatmul.mubr.f32.gmra.mrb[0].mxu0 %v228
    %v230 = vpop.f32.mrb[0].mxu0
    %v231 = vadd.f32 0.0, %v230
    %v232 = vpop.f32.mrb[0].mxu0
    %233 = vdwg.mxu0
    %234 = vmatprep.subr.mxu0 0.0
    %v235 = vand.u32 %v18, 4294901760
    %v236 = vsub.f32 %v18, %v235
    %v237 = vand.u32 %v236, 4294901760
    %v238 = vsub.f32 %v236, %v237
    %v239 = vand.u32 %v238, 4294901760
    %240 = vmatpush1.msra.mxu0 %v239
    %241 = vmatprep.subr.mxu0 0.0
    %v242 = vand.u32 %v19, 4294901760
    %v243 = vsub.f32 %v19, %v242
    %v244 = vand.u32 %v243, 4294901760
    %v245 = vsub.f32 %v243, %v244
    %v246 = vand.u32 %v245, 4294901760
    %247 = vmatpush1.msra.mxu0 %v246
    %248 = vmatprep.subr.mxu0 0.0
    %v249 = vand.u32 %v20, 4294901760
    %v250 = vsub.f32 %v20, %v249
    %v251 = vand.u32 %v250, 4294901760
    %v252 = vsub.f32 %v250, %v251
    %v253 = vand.u32 %v252, 4294901760
    %254 = vmatpush1.msra.mxu0 %v253
    %255 = vmatprep.subr.mxu0 0.0
    %v256 = vand.u32 %v21, 4294901760
    %v257 = vsub.f32 %v21, %v256
    %v258 = vand.u32 %v257, 4294901760
    %v259 = vsub.f32 %v257, %v258
    %v260 = vand.u32 %v259, 4294901760
    %261 = vmatpush1.msra.mxu0 %v260
    %262 = vmatprep.subr.mxu0 0.0
    %v263 = vand.u32 %v22, 4294901760
    %v264 = vsub.f32 %v22, %v263
    %v265 = vand.u32 %v264, 4294901760
    %v266 = vsub.f32 %v264, %v265
    %v267 = vand.u32 %v266, 4294901760
    %268 = vmatpush1.msra.mxu0 %v267
    %269 = vmatprep.subr.mxu0 0.0
    %v270 = vand.u32 %v23, 4294901760
    %v271 = vsub.f32 %v23, %v270
    %v272 = vand.u32 %v271, 4294901760
    %v273 = vsub.f32 %v271, %v272
    %v274 = vand.u32 %v273, 4294901760
    %275 = vmatpush1.msra.mxu0 %v274
    %276 = vmatprep.subr.mxu0 0.0
    %v277 = vand.u32 %v24, 4294901760
    %v278 = vsub.f32 %v24, %v277
    %v279 = vand.u32 %v278, 4294901760
    %v280 = vsub.f32 %v278, %v279
    %v281 = vand.u32 %v280, 4294901760
    %282 = vmatpush1.msra.mxu0 %v281
    %283 = vmatprep.subr.mxu0 0.0
    %v284 = vand.u32 %v25, 4294901760
    %v285 = vsub.f32 %v25, %v284
    %v286 = vand.u32 %v285, 4294901760
    %v287 = vsub.f32 %v285, %v286
    %v288 = vand.u32 %v287, 4294901760
    %289 = vmatpush1.msra.mxu0 %v288
    %290 = vmatprep.subr.mxu0 0.0
    %v291 = vand.u32 %v26, 4294901760
    %v292 = vsub.f32 %v26, %v291
    %v293 = vand.u32 %v292, 4294901760
    %v294 = vsub.f32 %v292, %v293
    %v295 = vand.u32 %v294, 4294901760
    %296 = vmatpush1.msra.mxu0 %v295
    %297 = vmatprep.subr.mxu0 0.0
    %v298 = vand.u32 %v27, 4294901760
    %v299 = vsub.f32 %v27, %v298
    %v300 = vand.u32 %v299, 4294901760
    %v301 = vsub.f32 %v299, %v300
    %v302 = vand.u32 %v301, 4294901760
    %303 = vmatpush1.msra.mxu0 %v302
    %304 = vmatprep.subr.mxu0 0.0
    %v305 = vand.u32 %v28, 4294901760
    %v306 = vsub.f32 %v28, %v305
    %v307 = vand.u32 %v306, 4294901760
    %v308 = vsub.f32 %v306, %v307
    %v309 = vand.u32 %v308, 4294901760
    %310 = vmatpush1.msra.mxu0 %v309
    %311 = vmatprep.subr.mxu0 0.0
    %v312 = vand.u32 %v29, 4294901760
    %v313 = vsub.f32 %v29, %v312
    %v314 = vand.u32 %v313, 4294901760
    %v315 = vsub.f32 %v313, %v314
    %v316 = vand.u32 %v315, 4294901760
    %317 = vmatpush1.msra.mxu0 %v316
    %318 = vmatprep.subr.mxu0 0.0
    %v319 = vand.u32 %v30, 4294901760
    %v320 = vsub.f32 %v30, %v319
    %v321 = vand.u32 %v320, 4294901760
    %v322 = vsub.f32 %v320, %v321
    %v323 = vand.u32 %v322, 4294901760
    %324 = vmatpush1.msra.mxu0 %v323
    %325 = vmatprep.subr.mxu0 0.0
    %v326 = vand.u32 %v31, 4294901760
    %v327 = vsub.f32 %v31, %v326
    %v328 = vand.u32 %v327, 4294901760
    %v329 = vsub.f32 %v327, %v328
    %v330 = vand.u32 %v329, 4294901760
    %331 = vmatpush1.msra.mxu0 %v330
    %332 = vmatprep.subr.mxu0 0.0
    %v333 = vand.u32 %v32, 4294901760
    %v334 = vsub.f32 %v32, %v333
    %v335 = vand.u32 %v334, 4294901760
    %v336 = vsub.f32 %v334, %v335
    %v337 = vand.u32 %v336, 4294901760
    %338 = vmatpush1.msra.mxu0 %v337
    %339 = vmatprep.subr.mxu0 0.0
    %v340 = vand.u32 %v33, 4294901760
    %v341 = vsub.f32 %v33, %v340
    %v342 = vand.u32 %v341, 4294901760
    %v343 = vsub.f32 %v341, %v342
    %v344 = vand.u32 %v343, 4294901760
    %345 = vmatpush1.msra.mxu0 %v344
    %346 = vmatprep.subr.mxu0 0.0
    %347 = vmatpush1.msra.mxu0 0.0
    %348 = vmatprep.subr.mxu0 0.0
    %349 = vmatpush1.msra.mxu0 0.0
    %350 = vmatprep.subr.mxu0 0.0
    %351 = vmatpush1.msra.mxu0 0.0
    %352 = vmatprep.subr.mxu0 0.0
    %353 = vmatpush1.msra.mxu0 0.0
    %354 = vmatprep.subr.mxu0 0.0
    %355 = vmatpush1.msra.mxu0 0.0
    %356 = vmatprep.subr.mxu0 0.0
    %357 = vmatpush1.msra.mxu0 0.0
    %358 = vmatprep.subr.mxu0 0.0
    %359 = vmatpush1.msra.mxu0 0.0
    %360 = vmatprep.subr.mxu0 0.0
    %361 = vmatpush1.msra.mxu0 0.0
    %362 = vmatprep.subr.mxu0 0.0
    %363 = vmatpush1.msra.mxu0 0.0
    %364 = vmatprep.subr.mxu0 0.0
    %365 = vmatpush1.msra.mxu0 0.0
    %366 = vmatprep.subr.mxu0 0.0
    %367 = vmatpush1.msra.mxu0 0.0
    %368 = vmatprep.subr.mxu0 0.0
    %369 = vmatpush1.msra.mxu0 0.0
    %370 = vmatprep.subr.mxu0 0.0
    %371 = vmatpush1.msra.mxu0 0.0
    %372 = vmatprep.subr.mxu0 0.0
    %373 = vmatpush1.msra.mxu0 0.0
    %374 = vmatprep.subr.mxu0 0.0
    %375 = vmatpush1.msra.mxu0 0.0
    %376 = vmatprep.subr.mxu0 0.0
    %377 = vmatpush1.msra.mxu0 0.0
    %378 = vmatprep.mubr.f32.mxu0 0.0
    %v379 = vand.u32 %v105, 4294901760
    %380 = vmatmul.mubr.f32.gmra.mrb[0].mxu0 %v379
    %v381 = vpop.f32.mrb[0].mxu0
    %v382 = vadd.f32 %v201, %v381
    %v383 = vpop.f32.mrb[0].mxu0
    %384 = vmatprep.mubr.f32.mxu0 0.0
    %v385 = vand.u32 %v106, 4294901760
    %386 = vmatmul.mubr.f32.gmra.mrb[0].mxu0 %v385
    %v387 = vpop.f32.mrb[0].mxu0
    %v388 = vadd.f32 %v211, %v387
    %v389 = vpop.f32.mrb[0].mxu0
    %390 = vmatprep.mubr.f32.mxu0 0.0
    %v391 = vand.u32 %v107, 4294901760
    %392 = vmatmul.mubr.f32.gmra.mrb[0].mxu0 %v391
    %v393 = vpop.f32.mrb[0].mxu0
    %v394 = vadd.f32 %v221, %v393
    %v395 = vpop.f32.mrb[0].mxu0
    %396 = vmatprep.mubr.f32.mxu0 0.0
    %v397 = vand.u32 %v108, 4294901760
    %398 = vmatmul.mubr.f32.gmra.mrb[0].mxu0 %v397
    %v399 = vpop.f32.mrb[0].mxu0
    %v400 = vadd.f32 %v231, %v399
    %v401 = vpop.f32.mrb[0].mxu0
    %402 = vdwg.mxu0
    %403 = vmatprep.subr.mxu0 0.0
    %v404 = vand.u32 %v18, 4294901760
    %v405 = vsub.f32 %v18, %v404
    %406 = vmatpush1.msra.mxu0 %v405
    %407 = vmatprep.subr.mxu0 0.0
    %v408 = vand.u32 %v19, 4294901760
    %v409 = vsub.f32 %v19, %v408
    %410 = vmatpush1.msra.mxu0 %v409
    %411 = vmatprep.subr.mxu0 0.0
    %v412 = vand.u32 %v20, 4294901760
    %v413 = vsub.f32 %v20, %v412
    %414 = vmatpush1.msra.mxu0 %v413
    %415 = vmatprep.subr.mxu0 0.0
    %v416 = vand.u32 %v21, 4294901760
    %v417 = vsub.f32 %v21, %v416
    %418 = vmatpush1.msra.mxu0 %v417
    %419 = vmatprep.subr.mxu0 0.0
    %v420 = vand.u32 %v22, 4294901760
    %v421 = vsub.f32 %v22, %v420
    %422 = vmatpush1.msra.mxu0 %v421
    %423 = vmatprep.subr.mxu0 0.0
    %v424 = vand.u32 %v23, 4294901760
    %v425 = vsub.f32 %v23, %v424
    %426 = vmatpush1.msra.mxu0 %v425
    %427 = vmatprep.subr.mxu0 0.0
    %v428 = vand.u32 %v24, 4294901760
    %v429 = vsub.f32 %v24, %v428
    %430 = vmatpush1.msra.mxu0 %v429
    %431 = vmatprep.subr.mxu0 0.0
    %v432 = vand.u32 %v25, 4294901760
    %v433 = vsub.f32 %v25, %v432
    %434 = vmatpush1.msra.mxu0 %v433
    %435 = vmatprep.subr.mxu0 0.0
    %v436 = vand.u32 %v26, 4294901760
    %v437 = vsub.f32 %v26, %v436
    %438 = vmatpush1.msra.mxu0 %v437
    %439 = vmatprep.subr.mxu0 0.0
    %v440 = vand.u32 %v27, 4294901760
    %v441 = vsub.f32 %v27, %v440
    %442 = vmatpush1.msra.mxu0 %v441
    %443 = vmatprep.subr.mxu0 0.0
    %v444 = vand.u32 %v28, 4294901760
    %v445 = vsub.f32 %v28, %v444
    %446 = vmatpush1.msra.mxu0 %v445
    %447 = vmatprep.subr.mxu0 0.0
    %v448 = vand.u32 %v29, 4294901760
    %v449 = vsub.f32 %v29, %v448
    %450 = vmatpush1.msra.mxu0 %v449
    %451 = vmatprep.subr.mxu0 0.0
    %v452 = vand.u32 %v30, 4294901760
    %v453 = vsub.f32 %v30, %v452
    %454 = vmatpush1.msra.mxu0 %v453
    %455 = vmatprep.subr.mxu0 0.0
    %v456 = vand.u32 %v31, 4294901760
    %v457 = vsub.f32 %v31, %v456
    %458 = vmatpush1.msra.mxu0 %v457
    %459 = vmatprep.subr.mxu0 0.0
    %v460 = vand.u32 %v32, 4294901760
    %v461 = vsub.f32 %v32, %v460
    %462 = vmatpush1.msra.mxu0 %v461
    %463 = vmatprep.subr.mxu0 0.0
    %v464 = vand.u32 %v33, 4294901760
    %v465 = vsub.f32 %v33, %v464
    %466 = vmatpush1.msra.mxu0 %v465
    %467 = vmatprep.subr.mxu0 0.0
    %468 = vmatpush1.msra.mxu0 0.0
    %469 = vmatprep.subr.mxu0 0.0
    %470 = vmatpush1.msra.mxu0 0.0
    %471 = vmatprep.subr.mxu0 0.0
    %472 = vmatpush1.msra.mxu0 0.0
    %473 = vmatprep.subr.mxu0 0.0
    %474 = vmatpush1.msra.mxu0 0.0
    %475 = vmatprep.subr.mxu0 0.0
    %476 = vmatpush1.msra.mxu0 0.0
    %477 = vmatprep.subr.mxu0 0.0
    %478 = vmatpush1.msra.mxu0 0.0
    %479 = vmatprep.subr.mxu0 0.0
    %480 = vmatpush1.msra.mxu0 0.0
    %481 = vmatprep.subr.mxu0 0.0
    %482 = vmatpush1.msra.mxu0 0.0
    %483 = vmatprep.subr.mxu0 0.0
    %484 = vmatpush1.msra.mxu0 0.0
    %485 = vmatprep.subr.mxu0 0.0
    %486 = vmatpush1.msra.mxu0 0.0
    %487 = vmatprep.subr.mxu0 0.0
    %488 = vmatpush1.msra.mxu0 0.0
    %489 = vmatprep.subr.mxu0 0.0
    %490 = vmatpush1.msra.mxu0 0.0
    %491 = vmatprep.subr.mxu0 0.0
    %492 = vmatpush1.msra.mxu0 0.0
    %493 = vmatprep.subr.mxu0 0.0
    %494 = vmatpush1.msra.mxu0 0.0
    %495 = vmatprep.subr.mxu0 0.0
    %496 = vmatpush1.msra.mxu0 0.0
    %497 = vmatprep.subr.mxu0 0.0
    %498 = vmatpush1.msra.mxu0 0.0
    %499 = vmatprep.mubr.f32.mxu0 0.0
    %v500 = vand.u32 %v105, 4294901760
    %v501 = vsub.f32 %v105, %v500
    %502 = vmatmul.mubr.f32.gmra.mrb[0].mxu0 %v501
    %v503 = vpop.f32.mrb[0].mxu0
    %v504 = vadd.f32 %v382, %v503
    %v505 = vpop.f32.mrb[0].mxu0
    %506 = vmatprep.mubr.f32.mxu0 0.0
    %v507 = vand.u32 %v106, 4294901760
    %v508 = vsub.f32 %v106, %v507
    %509 = vmatmul.mubr.f32.gmra.mrb[0].mxu0 %v508
    %v510 = vpop.f32.mrb[0].mxu0
    %v511 = vadd.f32 %v388, %v510
    %v512 = vpop.f32.mrb[0].mxu0
    %513 = vmatprep.mubr.f32.mxu0 0.0
    %v514 = vand.u32 %v107, 4294901760
    %v515 = vsub.f32 %v107, %v514
    %516 = vmatmul.mubr.f32.gmra.mrb[0].mxu0 %v515
    %v517 = vpop.f32.mrb[0].mxu0
    %v518 = vadd.f32 %v394, %v517
    %v519 = vpop.f32.mrb[0].mxu0
    %520 = vmatprep.mubr.f32.mxu0 0.0
    %v521 = vand.u32 %v108, 4294901760
    %v522 = vsub.f32 %v108, %v521
    %523 = vmatmul.mubr.f32.gmra.mrb[0].mxu0 %v522
    %v524 = vpop.f32.mrb[0].mxu0
    %v525 = vadd.f32 %v400, %v524
    %v526 = vpop.f32.mrb[0].mxu0
    %527 = vdwg.mxu0
    %528 = vmatprep.subr.mxu0 0.0
    %v529 = vand.u32 %v18, 4294901760
    %530 = vmatpush1.msra.mxu0 %v529
    %531 = vmatprep.subr.mxu0 0.0
    %v532 = vand.u32 %v19, 4294901760
    %533 = vmatpush1.msra.mxu0 %v532
    %534 = vmatprep.subr.mxu0 0.0
    %v535 = vand.u32 %v20, 4294901760
    %536 = vmatpush1.msra.mxu0 %v535
    %537 = vmatprep.subr.mxu0 0.0
    %v538 = vand.u32 %v21, 4294901760
    %539 = vmatpush1.msra.mxu0 %v538
    %540 = vmatprep.subr.mxu0 0.0
    %v541 = vand.u32 %v22, 4294901760
    %542 = vmatpush1.msra.mxu0 %v541
    %543 = vmatprep.subr.mxu0 0.0
    %v544 = vand.u32 %v23, 4294901760
    %545 = vmatpush1.msra.mxu0 %v544
    %546 = vmatprep.subr.mxu0 0.0
    %v547 = vand.u32 %v24, 4294901760
    %548 = vmatpush1.msra.mxu0 %v547
    %549 = vmatprep.subr.mxu0 0.0
    %v550 = vand.u32 %v25, 4294901760
    %551 = vmatpush1.msra.mxu0 %v550
    %552 = vmatprep.subr.mxu0 0.0
    %v553 = vand.u32 %v26, 4294901760
    %554 = vmatpush1.msra.mxu0 %v553
    %555 = vmatprep.subr.mxu0 0.0
    %v556 = vand.u32 %v27, 4294901760
    %557 = vmatpush1.msra.mxu0 %v556
    %558 = vmatprep.subr.mxu0 0.0
    %v559 = vand.u32 %v28, 4294901760
    %560 = vmatpush1.msra.mxu0 %v559
    %561 = vmatprep.subr.mxu0 0.0
    %v562 = vand.u32 %v29, 4294901760
    %563 = vmatpush1.msra.mxu0 %v562
    %564 = vmatprep.subr.mxu0 0.0
    %v565 = vand.u32 %v30, 4294901760
    %566 = vmatpush1.msra.mxu0 %v565
    %567 = vmatprep.subr.mxu0 0.0
    %v568 = vand.u32 %v31, 4294901760
    %569 = vmatpush1.msra.mxu0 %v568
    %570 = vmatprep.subr.mxu0 0.0
    %v571 = vand.u32 %v32, 4294901760
    %572 = vmatpush1.msra.mxu0 %v571
    %573 = vmatprep.subr.mxu0 0.0
    %v574 = vand.u32 %v33, 4294901760
    %575 = vmatpush1.msra.mxu0 %v574
    %576 = vmatprep.subr.mxu0 0.0
    %577 = vmatpush1.msra.mxu0 0.0
    %578 = vmatprep.subr.mxu0 0.0
    %579 = vmatpush1.msra.mxu0 0.0
    %580 = vmatprep.subr.mxu0 0.0
    %581 = vmatpush1.msra.mxu0 0.0
    %582 = vmatprep.subr.mxu0 0.0
    %583 = vmatpush1.msra.mxu0 0.0
    %584 = vmatprep.subr.mxu0 0.0
    %585 = vmatpush1.msra.mxu0 0.0
    %586 = vmatprep.subr.mxu0 0.0
    %587 = vmatpush1.msra.mxu0 0.0
    %588 = vmatprep.subr.mxu0 0.0
    %589 = vmatpush1.msra.mxu0 0.0
    %590 = vmatprep.subr.mxu0 0.0
    %591 = vmatpush1.msra.mxu0 0.0
    %592 = vmatprep.subr.mxu0 0.0
    %593 = vmatpush1.msra.mxu0 0.0
    %594 = vmatprep.subr.mxu0 0.0
    %595 = vmatpush1.msra.mxu0 0.0
    %596 = vmatprep.subr.mxu0 0.0
    %597 = vmatpush1.msra.mxu0 0.0
    %598 = vmatprep.subr.mxu0 0.0
    %599 = vmatpush1.msra.mxu0 0.0
    %600 = vmatprep.subr.mxu0 0.0
    %601 = vmatpush1.msra.mxu0 0.0
    %602 = vmatprep.subr.mxu0 0.0
    %603 = vmatpush1.msra.mxu0 0.0
    %604 = vmatprep.subr.mxu0 0.0
    %605 = vmatpush1.msra.mxu0 0.0
    %606 = vmatprep.subr.mxu0 0.0
    %607 = vmatpush1.msra.mxu0 0.0
    %608 = vmatprep.mubr.f32.mxu0 0.0
    %v609 = vand.u32 %v105, 4294901760
    %v610 = vsub.f32 %v105, %v609
    %v611 = vand.u32 %v610, 4294901760
    %612 = vmatmul.mubr.f32.gmra.mrb[0].mxu0 %v611
    %v613 = vpop.f32.mrb[0].mxu0
    %v614 = vadd.f32 %v504, %v613
    %v615 = vpop.f32.mrb[0].mxu0
    %616 = vmatprep.mubr.f32.mxu0 0.0
    %v617 = vand.u32 %v106, 4294901760
    %v618 = vsub.f32 %v106, %v617
    %v619 = vand.u32 %v618, 4294901760
    %620 = vmatmul.mubr.f32.gmra.mrb[0].mxu0 %v619
    %v621 = vpop.f32.mrb[0].mxu0
    %v622 = vadd.f32 %v511, %v621
    %v623 = vpop.f32.mrb[0].mxu0
    %624 = vmatprep.mubr.f32.mxu0 0.0
    %v625 = vand.u32 %v107, 4294901760
    %v626 = vsub.f32 %v107, %v625
    %v627 = vand.u32 %v626, 4294901760
    %628 = vmatmul.mubr.f32.gmra.mrb[0].mxu0 %v627
    %v629 = vpop.f32.mrb[0].mxu0
    %v630 = vadd.f32 %v518, %v629
    %v631 = vpop.f32.mrb[0].mxu0
    %632 = vmatprep.mubr.f32.mxu0 0.0
    %v633 = vand.u32 %v108, 4294901760
    %v634 = vsub.f32 %v108, %v633
    %v635 = vand.u32 %v634, 4294901760
    %636 = vmatmul.mubr.f32.gmra.mrb[0].mxu0 %v635
    %v637 = vpop.f32.mrb[0].mxu0
    %v638 = vadd.f32 %v525, %v637
    %v639 = vpop.f32.mrb[0].mxu0
    %640 = vdwg.mxu0
    %641 = vmatprep.subr.mxu0 0.0
    %v642 = vand.u32 %v18, 4294901760
    %v643 = vsub.f32 %v18, %v642
    %v644 = vand.u32 %v643, 4294901760
    %645 = vmatpush1.msra.mxu0 %v644
    %646 = vmatprep.subr.mxu0 0.0
    %v647 = vand.u32 %v19, 4294901760
    %v648 = vsub.f32 %v19, %v647
    %v649 = vand.u32 %v648, 4294901760
    %650 = vmatpush1.msra.mxu0 %v649
    %651 = vmatprep.subr.mxu0 0.0
    %v652 = vand.u32 %v20, 4294901760
    %v653 = vsub.f32 %v20, %v652
    %v654 = vand.u32 %v653, 4294901760
    %655 = vmatpush1.msra.mxu0 %v654
    %656 = vmatprep.subr.mxu0 0.0
    %v657 = vand.u32 %v21, 4294901760
    %v658 = vsub.f32 %v21, %v657
    %v659 = vand.u32 %v658, 4294901760
    %660 = vmatpush1.msra.mxu0 %v659
    %661 = vmatprep.subr.mxu0 0.0
    %v662 = vand.u32 %v22, 4294901760
    %v663 = vsub.f32 %v22, %v662
    %v664 = vand.u32 %v663, 4294901760
    %665 = vmatpush1.msra.mxu0 %v664
    %666 = vmatprep.subr.mxu0 0.0
    %v667 = vand.u32 %v23, 4294901760
    %v668 = vsub.f32 %v23, %v667
    %v669 = vand.u32 %v668, 4294901760
    %670 = vmatpush1.msra.mxu0 %v669
    %671 = vmatprep.subr.mxu0 0.0
    %v672 = vand.u32 %v24, 4294901760
    %v673 = vsub.f32 %v24, %v672
    %v674 = vand.u32 %v673, 4294901760
    %675 = vmatpush1.msra.mxu0 %v674
    %676 = vmatprep.subr.mxu0 0.0
    %v677 = vand.u32 %v25, 4294901760
    %v678 = vsub.f32 %v25, %v677
    %v679 = vand.u32 %v678, 4294901760
    %680 = vmatpush1.msra.mxu0 %v679
    %681 = vmatprep.subr.mxu0 0.0
    %v682 = vand.u32 %v26, 4294901760
    %v683 = vsub.f32 %v26, %v682
    %v684 = vand.u32 %v683, 4294901760
    %685 = vmatpush1.msra.mxu0 %v684
    %686 = vmatprep.subr.mxu0 0.0
    %v687 = vand.u32 %v27, 4294901760
    %v688 = vsub.f32 %v27, %v687
    %v689 = vand.u32 %v688, 4294901760
    %690 = vmatpush1.msra.mxu0 %v689
    %691 = vmatprep.subr.mxu0 0.0
    %v692 = vand.u32 %v28, 4294901760
    %v693 = vsub.f32 %v28, %v692
    %v694 = vand.u32 %v693, 4294901760
    %695 = vmatpush1.msra.mxu0 %v694
    %696 = vmatprep.subr.mxu0 0.0
    %v697 = vand.u32 %v29, 4294901760
    %v698 = vsub.f32 %v29, %v697
    %v699 = vand.u32 %v698, 4294901760
    %700 = vmatpush1.msra.mxu0 %v699
    %701 = vmatprep.subr.mxu0 0.0
    %v702 = vand.u32 %v30, 4294901760
    %v703 = vsub.f32 %v30, %v702
    %v704 = vand.u32 %v703, 4294901760
    %705 = vmatpush1.msra.mxu0 %v704
    %706 = vmatprep.subr.mxu0 0.0
    %v707 = vand.u32 %v31, 4294901760
    %v708 = vsub.f32 %v31, %v707
    %v709 = vand.u32 %v708, 4294901760
    %710 = vmatpush1.msra.mxu0 %v709
    %711 = vmatprep.subr.mxu0 0.0
    %v712 = vand.u32 %v32, 4294901760
    %v713 = vsub.f32 %v32, %v712
    %v714 = vand.u32 %v713, 4294901760
    %715 = vmatpush1.msra.mxu0 %v714
    %716 = vmatprep.subr.mxu0 0.0
    %v717 = vand.u32 %v33, 4294901760
    %v718 = vsub.f32 %v33, %v717
    %v719 = vand.u32 %v718, 4294901760
    %720 = vmatpush1.msra.mxu0 %v719
    %721 = vmatprep.subr.mxu0 0.0
    %722 = vmatpush1.msra.mxu0 0.0
    %723 = vmatprep.subr.mxu0 0.0
    %724 = vmatpush1.msra.mxu0 0.0
    %725 = vmatprep.subr.mxu0 0.0
    %726 = vmatpush1.msra.mxu0 0.0
    %727 = vmatprep.subr.mxu0 0.0
    %728 = vmatpush1.msra.mxu0 0.0
    %729 = vmatprep.subr.mxu0 0.0
    %730 = vmatpush1.msra.mxu0 0.0
    %731 = vmatprep.subr.mxu0 0.0
    %732 = vmatpush1.msra.mxu0 0.0
    %733 = vmatprep.subr.mxu0 0.0
    %734 = vmatpush1.msra.mxu0 0.0
    %735 = vmatprep.subr.mxu0 0.0
    %736 = vmatpush1.msra.mxu0 0.0
    %737 = vmatprep.subr.mxu0 0.0
    %738 = vmatpush1.msra.mxu0 0.0
    %739 = vmatprep.subr.mxu0 0.0
    %740 = vmatpush1.msra.mxu0 0.0
    %741 = vmatprep.subr.mxu0 0.0
    %742 = vmatpush1.msra.mxu0 0.0
    %743 = vmatprep.subr.mxu0 0.0
    %744 = vmatpush1.msra.mxu0 0.0
    %745 = vmatprep.subr.mxu0 0.0
    %746 = vmatpush1.msra.mxu0 0.0
    %747 = vmatprep.subr.mxu0 0.0
    %748 = vmatpush1.msra.mxu0 0.0
    %749 = vmatprep.subr.mxu0 0.0
    %750 = vmatpush1.msra.mxu0 0.0
    %751 = vmatprep.subr.mxu0 0.0
    %752 = vmatpush1.msra.mxu0 0.0
    %753 = vmatprep.mubr.f32.mxu0 0.0
    %v754 = vand.u32 %v105, 4294901760
    %755 = vmatmul.mubr.f32.gmra.mrb[0].mxu0 %v754
    %v756 = vpop.f32.mrb[0].mxu0
    %v757 = vadd.f32 %v614, %v756
    %v758 = vpop.f32.mrb[0].mxu0
    %759 = vmatprep.mubr.f32.mxu0 0.0
    %v760 = vand.u32 %v106, 4294901760
    %761 = vmatmul.mubr.f32.gmra.mrb[0].mxu0 %v760
    %v762 = vpop.f32.mrb[0].mxu0
    %v763 = vadd.f32 %v622, %v762
    %v764 = vpop.f32.mrb[0].mxu0
    %765 = vmatprep.mubr.f32.mxu0 0.0
    %v766 = vand.u32 %v107, 4294901760
    %767 = vmatmul.mubr.f32.gmra.mrb[0].mxu0 %v766
    %v768 = vpop.f32.mrb[0].mxu0
    %v769 = vadd.f32 %v630, %v768
    %v770 = vpop.f32.mrb[0].mxu0
    %771 = vmatprep.mubr.f32.mxu0 0.0
    %v772 = vand.u32 %v108, 4294901760
    %773 = vmatmul.mubr.f32.gmra.mrb[0].mxu0 %v772
    %v774 = vpop.f32.mrb[0].mxu0
    %v775 = vadd.f32 %v638, %v774
    %v776 = vpop.f32.mrb[0].mxu0
    %777 = vdwg.mxu0
    %778 = vmatprep.subr.mxu0 0.0
    %v779 = vand.u32 %v18, 4294901760
    %780 = vmatpush1.msra.mxu0 %v779
    %781 = vmatprep.subr.mxu0 0.0
    %v782 = vand.u32 %v19, 4294901760
    %783 = vmatpush1.msra.mxu0 %v782
    %784 = vmatprep.subr.mxu0 0.0
    %v785 = vand.u32 %v20, 4294901760
    %786 = vmatpush1.msra.mxu0 %v785
    %787 = vmatprep.subr.mxu0 0.0
    %v788 = vand.u32 %v21, 4294901760
    %789 = vmatpush1.msra.mxu0 %v788
    %790 = vmatprep.subr.mxu0 0.0
    %v791 = vand.u32 %v22, 4294901760
    %792 = vmatpush1.msra.mxu0 %v791
    %793 = vmatprep.subr.mxu0 0.0
    %v794 = vand.u32 %v23, 4294901760
    %795 = vmatpush1.msra.mxu0 %v794
    %796 = vmatprep.subr.mxu0 0.0
    %v797 = vand.u32 %v24, 4294901760
    %798 = vmatpush1.msra.mxu0 %v797
    %799 = vmatprep.subr.mxu0 0.0
    %v800 = vand.u32 %v25, 4294901760
    %801 = vmatpush1.msra.mxu0 %v800
    %802 = vmatprep.subr.mxu0 0.0
    %v803 = vand.u32 %v26, 4294901760
    %804 = vmatpush1.msra.mxu0 %v803
    %805 = vmatprep.subr.mxu0 0.0
    %v806 = vand.u32 %v27, 4294901760
    %807 = vmatpush1.msra.mxu0 %v806
    %808 = vmatprep.subr.mxu0 0.0
    %v809 = vand.u32 %v28, 4294901760
    %810 = vmatpush1.msra.mxu0 %v809
    %811 = vmatprep.subr.mxu0 0.0
    %v812 = vand.u32 %v29, 4294901760
    %813 = vmatpush1.msra.mxu0 %v812
    %814 = vmatprep.subr.mxu0 0.0
    %v815 = vand.u32 %v30, 4294901760
    %816 = vmatpush1.msra.mxu0 %v815
    %817 = vmatprep.subr.mxu0 0.0
    %v818 = vand.u32 %v31, 4294901760
    %819 = vmatpush1.msra.mxu0 %v818
    %820 = vmatprep.subr.mxu0 0.0
    %v821 = vand.u32 %v32, 4294901760
    %822 = vmatpush1.msra.mxu0 %v821
    %823 = vmatprep.subr.mxu0 0.0
    %v824 = vand.u32 %v33, 4294901760
    %825 = vmatpush1.msra.mxu0 %v824
    %826 = vmatprep.subr.mxu0 0.0
    %827 = vmatpush1.msra.mxu0 0.0
    %828 = vmatprep.subr.mxu0 0.0
    %829 = vmatpush1.msra.mxu0 0.0
    %830 = vmatprep.subr.mxu0 0.0
    %831 = vmatpush1.msra.mxu0 0.0
    %832 = vmatprep.subr.mxu0 0.0
    %833 = vmatpush1.msra.mxu0 0.0
    %834 = vmatprep.subr.mxu0 0.0
    %835 = vmatpush1.msra.mxu0 0.0
    %836 = vmatprep.subr.mxu0 0.0
    %837 = vmatpush1.msra.mxu0 0.0
    %838 = vmatprep.subr.mxu0 0.0
    %839 = vmatpush1.msra.mxu0 0.0
    %840 = vmatprep.subr.mxu0 0.0
    %841 = vmatpush1.msra.mxu0 0.0
    %842 = vmatprep.subr.mxu0 0.0
    %843 = vmatpush1.msra.mxu0 0.0
    %844 = vmatprep.subr.mxu0 0.0
    %845 = vmatpush1.msra.mxu0 0.0
    %846 = vmatprep.subr.mxu0 0.0
    %847 = vmatpush1.msra.mxu0 0.0
    %848 = vmatprep.subr.mxu0 0.0
    %849 = vmatpush1.msra.mxu0 0.0
    %850 = vmatprep.subr.mxu0 0.0
    %851 = vmatpush1.msra.mxu0 0.0
    %852 = vmatprep.subr.mxu0 0.0
    %853 = vmatpush1.msra.mxu0 0.0
    %854 = vmatprep.subr.mxu0 0.0
    %855 = vmatpush1.msra.mxu0 0.0
    %856 = vmatprep.subr.mxu0 0.0
    %857 = vmatpush1.msra.mxu0 0.0
    %858 = vmatprep.mubr.f32.mxu0 0.0
    %v859 = vand.u32 %v105, 4294901760
    %860 = vmatmul.mubr.f32.gmra.mrb[0].mxu0 %v859
    %v861 = vpop.f32.mrb[0].mxu0
    %v862 = vadd.f32 %v757, %v861
    %v863 = vpop.f32.mrb[0].mxu0
    %864 = vmatprep.mubr.f32.mxu0 0.0
    %v865 = vand.u32 %v106, 4294901760
    %866 = vmatmul.mubr.f32.gmra.mrb[0].mxu0 %v865
    %v867 = vpop.f32.mrb[0].mxu0
    %v868 = vadd.f32 %v763, %v867
    %v869 = vpop.f32.mrb[0].mxu0
    %870 = vmatprep.mubr.f32.mxu0 0.0
    %v871 = vand.u32 %v107, 4294901760
    %872 = vmatmul.mubr.f32.gmra.mrb[0].mxu0 %v871
    %v873 = vpop.f32.mrb[0].mxu0
    %v874 = vadd.f32 %v769, %v873
    %v875 = vpop.f32.mrb[0].mxu0
    %876 = vmatprep.mubr.f32.mxu0 0.0
    %v877 = vand.u32 %v108, 4294901760
    %878 = vmatmul.mubr.f32.gmra.mrb[0].mxu0 %v877
    %v879 = vpop.f32.mrb[0].mxu0
    %v880 = vadd.f32 %v775, %v879
    %v881 = vpop.f32.mrb[0].mxu0
    %882 = vdwg.mxu0
    %883 = vmatprep.subr.mxu0 0.0
    %v884 = vand.u32 %v34, 4294901760
    %885 = vmatpush1.msra.mxu0 %v884
    %886 = vmatprep.subr.mxu0 0.0
    %v887 = vand.u32 %v35, 4294901760
    %888 = vmatpush1.msra.mxu0 %v887
    %889 = vmatprep.subr.mxu0 0.0
    %v890 = vand.u32 %v36, 4294901760
    %891 = vmatpush1.msra.mxu0 %v890
    %892 = vmatprep.subr.mxu0 0.0
    %v893 = vand.u32 %v37, 4294901760
    %894 = vmatpush1.msra.mxu0 %v893
    %895 = vmatprep.subr.mxu0 0.0
    %v896 = vand.u32 %v38, 4294901760
    %897 = vmatpush1.msra.mxu0 %v896
    %898 = vmatprep.subr.mxu0 0.0
    %v899 = vand.u32 %v39, 4294901760
    %900 = vmatpush1.msra.mxu0 %v899
    %901 = vmatprep.subr.mxu0 0.0
    %v902 = vand.u32 %v40, 4294901760
    %903 = vmatpush1.msra.mxu0 %v902
    %904 = vmatprep.subr.mxu0 0.0
    %v905 = vand.u32 %v41, 4294901760
    %906 = vmatpush1.msra.mxu0 %v905
    %907 = vmatprep.subr.mxu0 0.0
    %v908 = vand.u32 %v42, 4294901760
    %909 = vmatpush1.msra.mxu0 %v908
    %910 = vmatprep.subr.mxu0 0.0
    %v911 = vand.u32 %v43, 4294901760
    %912 = vmatpush1.msra.mxu0 %v911
    %913 = vmatprep.subr.mxu0 0.0
    %v914 = vand.u32 %v44, 4294901760
    %915 = vmatpush1.msra.mxu0 %v914
    %916 = vmatprep.subr.mxu0 0.0
    %v917 = vand.u32 %v45, 4294901760
    %918 = vmatpush1.msra.mxu0 %v917
    %919 = vmatprep.subr.mxu0 0.0
    %v920 = vand.u32 %v46, 4294901760
    %921 = vmatpush1.msra.mxu0 %v920
    %922 = vmatprep.subr.mxu0 0.0
    %v923 = vand.u32 %v47, 4294901760
    %924 = vmatpush1.msra.mxu0 %v923
    %925 = vmatprep.subr.mxu0 0.0
    %v926 = vand.u32 %v48, 4294901760
    %927 = vmatpush1.msra.mxu0 %v926
    %928 = vmatprep.subr.mxu0 0.0
    %v929 = vand.u32 %v49, 4294901760
    %930 = vmatpush1.msra.mxu0 %v929
    %931 = vmatprep.subr.mxu0 0.0
    %932 = vmatpush1.msra.mxu0 0.0
    %933 = vmatprep.subr.mxu0 0.0
    %934 = vmatpush1.msra.mxu0 0.0
    %935 = vmatprep.subr.mxu0 0.0
    %936 = vmatpush1.msra.mxu0 0.0
    %937 = vmatprep.subr.mxu0 0.0
    %938 = vmatpush1.msra.mxu0 0.0
    %939 = vmatprep.subr.mxu0 0.0
    %940 = vmatpush1.msra.mxu0 0.0
    %941 = vmatprep.subr.mxu0 0.0
    %942 = vmatpush1.msra.mxu0 0.0
    %943 = vmatprep.subr.mxu0 0.0
    %944 = vmatpush1.msra.mxu0 0.0
    %945 = vmatprep.subr.mxu0 0.0
    %946 = vmatpush1.msra.mxu0 0.0
    %947 = vmatprep.subr.mxu0 0.0
    %948 = vmatpush1.msra.mxu0 0.0
    %949 = vmatprep.subr.mxu0 0.0
    %950 = vmatpush1.msra.mxu0 0.0
    %951 = vmatprep.subr.mxu0 0.0
    %952 = vmatpush1.msra.mxu0 0.0
    %953 = vmatprep.subr.mxu0 0.0
    %954 = vmatpush1.msra.mxu0 0.0
    %955 = vmatprep.subr.mxu0 0.0
    %956 = vmatpush1.msra.mxu0 0.0
    %957 = vmatprep.subr.mxu0 0.0
    %958 = vmatpush1.msra.mxu0 0.0
    %959 = vmatprep.subr.mxu0 0.0
    %960 = vmatpush1.msra.mxu0 0.0
    %961 = vmatprep.subr.mxu0 0.0
    %962 = vmatpush1.msra.mxu0 0.0
    %963 = vmatprep.mubr.f32.mxu0 0.0
    %v964 = vand.u32 %v109, 4294901760
    %v965 = vsub.f32 %v109, %v964
    %v966 = vand.u32 %v965, 4294901760
    %v967 = vsub.f32 %v965, %v966
    %v968 = vand.u32 %v967, 4294901760
    %969 = vmatmul.mubr.f32.gmra.mrb[0].mxu0 %v968
    %v970 = vpop.f32.mrb[0].mxu0
    %v971 = vadd.f32 0.0, %v970
    %v972 = vpop.f32.mrb[0].mxu0
    %973 = vmatprep.mubr.f32.mxu0 0.0
    %v974 = vand.u32 %v110, 4294901760
    %v975 = vsub.f32 %v110, %v974
    %v976 = vand.u32 %v975, 4294901760
    %v977 = vsub.f32 %v975, %v976
    %v978 = vand.u32 %v977, 4294901760
    %979 = vmatmul.mubr.f32.gmra.mrb[0].mxu0 %v978
    %v980 = vpop.f32.mrb[0].mxu0
    %v981 = vadd.f32 0.0, %v980
    %v982 = vpop.f32.mrb[0].mxu0
    %983 = vmatprep.mubr.f32.mxu0 0.0
    %v984 = vand.u32 %v111, 4294901760
    %v985 = vsub.f32 %v111, %v984
    %v986 = vand.u32 %v985, 4294901760
    %v987 = vsub.f32 %v985, %v986
    %v988 = vand.u32 %v987, 4294901760
    %989 = vmatmul.mubr.f32.gmra.mrb[0].mxu0 %v988
    %v990 = vpop.f32.mrb[0].mxu0
    %v991 = vadd.f32 0.0, %v990
    %v992 = vpop.f32.mrb[0].mxu0
    %993 = vmatprep.mubr.f32.mxu0 0.0
    %v994 = vand.u32 %v112, 4294901760
    %v995 = vsub.f32 %v112, %v994
    %v996 = vand.u32 %v995, 4294901760
    %v997 = vsub.f32 %v995, %v996
    %v998 = vand.u32 %v997, 4294901760
    %999 = vmatmul.mubr.f32.gmra.mrb[0].mxu0 %v998
    %v1000 = vpop.f32.mrb[0].mxu0
    %v1001 = vadd.f32 0.0, %v1000
    %v1002 = vpop.f32.mrb[0].mxu0
    %1003 = vdwg.mxu0
    %1004 = vmatprep.subr.mxu0 0.0
    %v1005 = vand.u32 %v34, 4294901760
    %v1006 = vsub.f32 %v34, %v1005
    %v1007 = vand.u32 %v1006, 4294901760
    %v1008 = vsub.f32 %v1006, %v1007
    %v1009 = vand.u32 %v1008, 4294901760
    %1010 = vmatpush1.msra.mxu0 %v1009
    %1011 = vmatprep.subr.mxu0 0.0
    %v1012 = vand.u32 %v35, 4294901760
    %v1013 = vsub.f32 %v35, %v1012
    %v1014 = vand.u32 %v1013, 4294901760
    %v1015 = vsub.f32 %v1013, %v1014
    %v1016 = vand.u32 %v1015, 4294901760
    %1017 = vmatpush1.msra.mxu0 %v1016
    %1018 = vmatprep.subr.mxu0 0.0
    %v1019 = vand.u32 %v36, 4294901760
    %v1020 = vsub.f32 %v36, %v1019
    %v1021 = vand.u32 %v1020, 4294901760
    %v1022 = vsub.f32 %v1020, %v1021
    %v1023 = vand.u32 %v1022, 4294901760
    %1024 = vmatpush1.msra.mxu0 %v1023
    %1025 = vmatprep.subr.mxu0 0.0
    %v1026 = vand.u32 %v37, 4294901760
    %v1027 = vsub.f32 %v37, %v1026
    %v1028 = vand.u32 %v1027, 4294901760
    %v1029 = vsub.f32 %v1027, %v1028
    %v1030 = vand.u32 %v1029, 4294901760
    %1031 = vmatpush1.msra.mxu0 %v1030
    %1032 = vmatprep.subr.mxu0 0.0
    %v1033 = vand.u32 %v38, 4294901760
    %v1034 = vsub.f32 %v38, %v1033
    %v1035 = vand.u32 %v1034, 4294901760
    %v1036 = vsub.f32 %v1034, %v1035
    %v1037 = vand.u32 %v1036, 4294901760
    %1038 = vmatpush1.msra.mxu0 %v1037
    %1039 = vmatprep.subr.mxu0 0.0
    %v1040 = vand.u32 %v39, 4294901760
    %v1041 = vsub.f32 %v39, %v1040
    %v1042 = vand.u32 %v1041, 4294901760
    %v1043 = vsub.f32 %v1041, %v1042
    %v1044 = vand.u32 %v1043, 4294901760
    %1045 = vmatpush1.msra.mxu0 %v1044
    %1046 = vmatprep.subr.mxu0 0.0
    %v1047 = vand.u32 %v40, 4294901760
    %v1048 = vsub.f32 %v40, %v1047
    %v1049 = vand.u32 %v1048, 4294901760
    %v1050 = vsub.f32 %v1048, %v1049
    %v1051 = vand.u32 %v1050, 4294901760
    %1052 = vmatpush1.msra.mxu0 %v1051
    %1053 = vmatprep.subr.mxu0 0.0
    %v1054 = vand.u32 %v41, 4294901760
    %v1055 = vsub.f32 %v41, %v1054
    %v1056 = vand.u32 %v1055, 4294901760
    %v1057 = vsub.f32 %v1055, %v1056
    %v1058 = vand.u32 %v1057, 4294901760
    %1059 = vmatpush1.msra.mxu0 %v1058
    %1060 = vmatprep.subr.mxu0 0.0
    %v1061 = vand.u32 %v42, 4294901760
    %v1062 = vsub.f32 %v42, %v1061
    %v1063 = vand.u32 %v1062, 4294901760
    %v1064 = vsub.f32 %v1062, %v1063
    %v1065 = vand.u32 %v1064, 4294901760
    %1066 = vmatpush1.msra.mxu0 %v1065
    %1067 = vmatprep.subr.mxu0 0.0
    %v1068 = vand.u32 %v43, 4294901760
    %v1069 = vsub.f32 %v43, %v1068
    %v1070 = vand.u32 %v1069, 4294901760
    %v1071 = vsub.f32 %v1069, %v1070
    %v1072 = vand.u32 %v1071, 4294901760
    %1073 = vmatpush1.msra.mxu0 %v1072
    %1074 = vmatprep.subr.mxu0 0.0
    %v1075 = vand.u32 %v44, 4294901760
    %v1076 = vsub.f32 %v44, %v1075
    %v1077 = vand.u32 %v1076, 4294901760
    %v1078 = vsub.f32 %v1076, %v1077
    %v1079 = vand.u32 %v1078, 4294901760
    %1080 = vmatpush1.msra.mxu0 %v1079
    %1081 = vmatprep.subr.mxu0 0.0
    %v1082 = vand.u32 %v45, 4294901760
    %v1083 = vsub.f32 %v45, %v1082
    %v1084 = vand.u32 %v1083, 4294901760
    %v1085 = vsub.f32 %v1083, %v1084
    %v1086 = vand.u32 %v1085, 4294901760
    %1087 = vmatpush1.msra.mxu0 %v1086
    %1088 = vmatprep.subr.mxu0 0.0
    %v1089 = vand.u32 %v46, 4294901760
    %v1090 = vsub.f32 %v46, %v1089
    %v1091 = vand.u32 %v1090, 4294901760
    %v1092 = vsub.f32 %v1090, %v1091
    %v1093 = vand.u32 %v1092, 4294901760
    %1094 = vmatpush1.msra.mxu0 %v1093
    %1095 = vmatprep.subr.mxu0 0.0
    %v1096 = vand.u32 %v47, 4294901760
    %v1097 = vsub.f32 %v47, %v1096
    %v1098 = vand.u32 %v1097, 4294901760
    %v1099 = vsub.f32 %v1097, %v1098
    %v1100 = vand.u32 %v1099, 4294901760
    %1101 = vmatpush1.msra.mxu0 %v1100
    %1102 = vmatprep.subr.mxu0 0.0
    %v1103 = vand.u32 %v48, 4294901760
    %v1104 = vsub.f32 %v48, %v1103
    %v1105 = vand.u32 %v1104, 4294901760
    %v1106 = vsub.f32 %v1104, %v1105
    %v1107 = vand.u32 %v1106, 4294901760
    %1108 = vmatpush1.msra.mxu0 %v1107
    %1109 = vmatprep.subr.mxu0 0.0
    %v1110 = vand.u32 %v49, 4294901760
    %v1111 = vsub.f32 %v49, %v1110
    %v1112 = vand.u32 %v1111, 4294901760
    %v1113 = vsub.f32 %v1111, %v1112
    %v1114 = vand.u32 %v1113, 4294901760
    %1115 = vmatpush1.msra.mxu0 %v1114
    %1116 = vmatprep.subr.mxu0 0.0
    %1117 = vmatpush1.msra.mxu0 0.0
    %1118 = vmatprep.subr.mxu0 0.0
    %1119 = vmatpush1.msra.mxu0 0.0
    %1120 = vmatprep.subr.mxu0 0.0
    %1121 = vmatpush1.msra.mxu0 0.0
    %1122 = vmatprep.subr.mxu0 0.0
    %1123 = vmatpush1.msra.mxu0 0.0
    %1124 = vmatprep.subr.mxu0 0.0
    %1125 = vmatpush1.msra.mxu0 0.0
    %1126 = vmatprep.subr.mxu0 0.0
    %1127 = vmatpush1.msra.mxu0 0.0
    %1128 = vmatprep.subr.mxu0 0.0
    %1129 = vmatpush1.msra.mxu0 0.0
    %1130 = vmatprep.subr.mxu0 0.0
    %1131 = vmatpush1.msra.mxu0 0.0
    %1132 = vmatprep.subr.mxu0 0.0
    %1133 = vmatpush1.msra.mxu0 0.0
    %1134 = vmatprep.subr.mxu0 0.0
    %1135 = vmatpush1.msra.mxu0 0.0
    %1136 = vmatprep.subr.mxu0 0.0
    %1137 = vmatpush1.msra.mxu0 0.0
    %1138 = vmatprep.subr.mxu0 0.0
    %1139 = vmatpush1.msra.mxu0 0.0
    %1140 = vmatprep.subr.mxu0 0.0
    %1141 = vmatpush1.msra.mxu0 0.0
    %1142 = vmatprep.subr.mxu0 0.0
    %1143 = vmatpush1.msra.mxu0 0.0
    %1144 = vmatprep.subr.mxu0 0.0
    %1145 = vmatpush1.msra.mxu0 0.0
    %1146 = vmatprep.subr.mxu0 0.0
    %1147 = vmatpush1.msra.mxu0 0.0
    %1148 = vmatprep.mubr.f32.mxu0 0.0
    %v1149 = vand.u32 %v109, 4294901760
    %1150 = vmatmul.mubr.f32.gmra.mrb[0].mxu0 %v1149
    %v1151 = vpop.f32.mrb[0].mxu0
    %v1152 = vadd.f32 %v971, %v1151
    %v1153 = vpop.f32.mrb[0].mxu0
    %1154 = vmatprep.mubr.f32.mxu0 0.0
    %v1155 = vand.u32 %v110, 4294901760
    %1156 = vmatmul.mubr.f32.gmra.mrb[0].mxu0 %v1155
    %v1157 = vpop.f32.mrb[0].mxu0
    %v1158 = vadd.f32 %v981, %v1157
    %v1159 = vpop.f32.mrb[0].mxu0
    %1160 = vmatprep.mubr.f32.mxu0 0.0
    %v1161 = vand.u32 %v111, 4294901760
    %1162 = vmatmul.mubr.f32.gmra.mrb[0].mxu0 %v1161
    %v1163 = vpop.f32.mrb[0].mxu0
    %v1164 = vadd.f32 %v991, %v1163
    %v1165 = vpop.f32.mrb[0].mxu0
    %1166 = vmatprep.mubr.f32.mxu0 0.0
    %v1167 = vand.u32 %v112, 4294901760
    %1168 = vmatmul.mubr.f32.gmra.mrb[0].mxu0 %v1167
    %v1169 = vpop.f32.mrb[0].mxu0
    %v1170 = vadd.f32 %v1001, %v1169
    %v1171 = vpop.f32.mrb[0].mxu0
    %1172 = vdwg.mxu0
    %1173 = vmatprep.subr.mxu0 0.0
    %v1174 = vand.u32 %v34, 4294901760
    %v1175 = vsub.f32 %v34, %v1174
    %1176 = vmatpush1.msra.mxu0 %v1175
    %1177 = vmatprep.subr.mxu0 0.0
    %v1178 = vand.u32 %v35, 4294901760
    %v1179 = vsub.f32 %v35, %v1178
    %1180 = vmatpush1.msra.mxu0 %v1179
    %1181 = vmatprep.subr.mxu0 0.0
    %v1182 = vand.u32 %v36, 4294901760
    %v1183 = vsub.f32 %v36, %v1182
    %1184 = vmatpush1.msra.mxu0 %v1183
    %1185 = vmatprep.subr.mxu0 0.0
    %v1186 = vand.u32 %v37, 4294901760
    %v1187 = vsub.f32 %v37, %v1186
    %1188 = vmatpush1.msra.mxu0 %v1187
    %1189 = vmatprep.subr.mxu0 0.0
    %v1190 = vand.u32 %v38, 4294901760
    %v1191 = vsub.f32 %v38, %v1190
    %1192 = vmatpush1.msra.mxu0 %v1191
    %1193 = vmatprep.subr.mxu0 0.0
    %v1194 = vand.u32 %v39, 4294901760
    %v1195 = vsub.f32 %v39, %v1194
    %1196 = vmatpush1.msra.mxu0 %v1195
    %1197 = vmatprep.subr.mxu0 0.0
    %v1198 = vand.u32 %v40, 4294901760
    %v1199 = vsub.f32 %v40, %v1198
    %1200 = vmatpush1.msra.mxu0 %v1199
    %1201 = vmatprep.subr.mxu0 0.0
    %v1202 = vand.u32 %v41, 4294901760
    %v1203 = vsub.f32 %v41, %v1202
    %1204 = vmatpush1.msra.mxu0 %v1203
    %1205 = vmatprep.subr.mxu0 0.0
    %v1206 = vand.u32 %v42, 4294901760
    %v1207 = vsub.f32 %v42, %v1206
    %1208 = vmatpush1.msra.mxu0 %v1207
    %1209 = vmatprep.subr.mxu0 0.0
    %v1210 = vand.u32 %v43, 4294901760
    %v1211 = vsub.f32 %v43, %v1210
    %1212 = vmatpush1.msra.mxu0 %v1211
    %1213 = vmatprep.subr.mxu0 0.0
    %v1214 = vand.u32 %v44, 4294901760
    %v1215 = vsub.f32 %v44, %v1214
    %1216 = vmatpush1.msra.mxu0 %v1215
    %1217 = vmatprep.subr.mxu0 0.0
    %v1218 = vand.u32 %v45, 4294901760
    %v1219 = vsub.f32 %v45, %v1218
    %1220 = vmatpush1.msra.mxu0 %v1219
    %1221 = vmatprep.subr.mxu0 0.0
    %v1222 = vand.u32 %v46, 4294901760
    %v1223 = vsub.f32 %v46, %v1222
    %1224 = vmatpush1.msra.mxu0 %v1223
    %1225 = vmatprep.subr.mxu0 0.0
    %v1226 = vand.u32 %v47, 4294901760
    %v1227 = vsub.f32 %v47, %v1226
    %1228 = vmatpush1.msra.mxu0 %v1227
    %1229 = vmatprep.subr.mxu0 0.0
    %v1230 = vand.u32 %v48, 4294901760
    %v1231 = vsub.f32 %v48, %v1230
    %1232 = vmatpush1.msra.mxu0 %v1231
    %1233 = vmatprep.subr.mxu0 0.0
    %v1234 = vand.u32 %v49, 4294901760
    %v1235 = vsub.f32 %v49, %v1234
    %1236 = vmatpush1.msra.mxu0 %v1235
    %1237 = vmatprep.subr.mxu0 0.0
    %1238 = vmatpush1.msra.mxu0 0.0
    %1239 = vmatprep.subr.mxu0 0.0
    %1240 = vmatpush1.msra.mxu0 0.0
    %1241 = vmatprep.subr.mxu0 0.0
    %1242 = vmatpush1.msra.mxu0 0.0
    %1243 = vmatprep.subr.mxu0 0.0
    %1244 = vmatpush1.msra.mxu0 0.0
    %1245 = vmatprep.subr.mxu0 0.0
    %1246 = vmatpush1.msra.mxu0 0.0
    %1247 = vmatprep.subr.mxu0 0.0
    %1248 = vmatpush1.msra.mxu0 0.0
    %1249 = vmatprep.subr.mxu0 0.0
    %1250 = vmatpush1.msra.mxu0 0.0
    %1251 = vmatprep.subr.mxu0 0.0
    %1252 = vmatpush1.msra.mxu0 0.0
    %1253 = vmatprep.subr.mxu0 0.0
    %1254 = vmatpush1.msra.mxu0 0.0
    %1255 = vmatprep.subr.mxu0 0.0
    %1256 = vmatpush1.msra.mxu0 0.0
    %1257 = vmatprep.subr.mxu0 0.0
    %1258 = vmatpush1.msra.mxu0 0.0
    %1259 = vmatprep.subr.mxu0 0.0
    %1260 = vmatpush1.msra.mxu0 0.0
    %1261 = vmatprep.subr.mxu0 0.0
    %1262 = vmatpush1.msra.mxu0 0.0
    %1263 = vmatprep.subr.mxu0 0.0
    %1264 = vmatpush1.msra.mxu0 0.0
    %1265 = vmatprep.subr.mxu0 0.0
    %1266 = vmatpush1.msra.mxu0 0.0
    %1267 = vmatprep.subr.mxu0 0.0
    %1268 = vmatpush1.msra.mxu0 0.0
    %1269 = vmatprep.mubr.f32.mxu0 0.0
    %v1270 = vand.u32 %v109, 4294901760
    %v1271 = vsub.f32 %v109, %v1270
    %1272 = vmatmul.mubr.f32.gmra.mrb[0].mxu0 %v1271
    %v1273 = vpop.f32.mrb[0].mxu0
    %v1274 = vadd.f32 %v1152, %v1273
    %v1275 = vpop.f32.mrb[0].mxu0
    %1276 = vmatprep.mubr.f32.mxu0 0.0
    %v1277 = vand.u32 %v110, 4294901760
    %v1278 = vsub.f32 %v110, %v1277
    %1279 = vmatmul.mubr.f32.gmra.mrb[0].mxu0 %v1278
    %v1280 = vpop.f32.mrb[0].mxu0
    %v1281 = vadd.f32 %v1158, %v1280
    %v1282 = vpop.f32.mrb[0].mxu0
    %1283 = vmatprep.mubr.f32.mxu0 0.0
    %v1284 = vand.u32 %v111, 4294901760
    %v1285 = vsub.f32 %v111, %v1284
    %1286 = vmatmul.mubr.f32.gmra.mrb[0].mxu0 %v1285
    %v1287 = vpop.f32.mrb[0].mxu0
    %v1288 = vadd.f32 %v1164, %v1287
    %v1289 = vpop.f32.mrb[0].mxu0
    %1290 = vmatprep.mubr.f32.mxu0 0.0
    %v1291 = vand.u32 %v112, 4294901760
    %v1292 = vsub.f32 %v112, %v1291
    %1293 = vmatmul.mubr.f32.gmra.mrb[0].mxu0 %v1292
    %v1294 = vpop.f32.mrb[0].mxu0
    %v1295 = vadd.f32 %v1170, %v1294
    %v1296 = vpop.f32.mrb[0].mxu0
    %1297 = vdwg.mxu0
    %1298 = vmatprep.subr.mxu0 0.0
    %v1299 = vand.u32 %v34, 4294901760
    %1300 = vmatpush1.msra.mxu0 %v1299
    %1301 = vmatprep.subr.mxu0 0.0
    %v1302 = vand.u32 %v35, 4294901760
    %1303 = vmatpush1.msra.mxu0 %v1302
    %1304 = vmatprep.subr.mxu0 0.0
    %v1305 = vand.u32 %v36, 4294901760
    %1306 = vmatpush1.msra.mxu0 %v1305
    %1307 = vmatprep.subr.mxu0 0.0
    %v1308 = vand.u32 %v37, 4294901760
    %1309 = vmatpush1.msra.mxu0 %v1308
    %1310 = vmatprep.subr.mxu0 0.0
    %v1311 = vand.u32 %v38, 4294901760
    %1312 = vmatpush1.msra.mxu0 %v1311
    %1313 = vmatprep.subr.mxu0 0.0
    %v1314 = vand.u32 %v39, 4294901760
    %1315 = vmatpush1.msra.mxu0 %v1314
    %1316 = vmatprep.subr.mxu0 0.0
    %v1317 = vand.u32 %v40, 4294901760
    %1318 = vmatpush1.msra.mxu0 %v1317
    %1319 = vmatprep.subr.mxu0 0.0
    %v1320 = vand.u32 %v41, 4294901760
    %1321 = vmatpush1.msra.mxu0 %v1320
    %1322 = vmatprep.subr.mxu0 0.0
    %v1323 = vand.u32 %v42, 4294901760
    %1324 = vmatpush1.msra.mxu0 %v1323
    %1325 = vmatprep.subr.mxu0 0.0
    %v1326 = vand.u32 %v43, 4294901760
    %1327 = vmatpush1.msra.mxu0 %v1326
    %1328 = vmatprep.subr.mxu0 0.0
    %v1329 = vand.u32 %v44, 4294901760
    %1330 = vmatpush1.msra.mxu0 %v1329
    %1331 = vmatprep.subr.mxu0 0.0
    %v1332 = vand.u32 %v45, 4294901760
    %1333 = vmatpush1.msra.mxu0 %v1332
    %1334 = vmatprep.subr.mxu0 0.0
    %v1335 = vand.u32 %v46, 4294901760
    %1336 = vmatpush1.msra.mxu0 %v1335
    %1337 = vmatprep.subr.mxu0 0.0
    %v1338 = vand.u32 %v47, 4294901760
    %1339 = vmatpush1.msra.mxu0 %v1338
    %1340 = vmatprep.subr.mxu0 0.0
    %v1341 = vand.u32 %v48, 4294901760
    %1342 = vmatpush1.msra.mxu0 %v1341
    %1343 = vmatprep.subr.mxu0 0.0
    %v1344 = vand.u32 %v49, 4294901760
    %1345 = vmatpush1.msra.mxu0 %v1344
    %1346 = vmatprep.subr.mxu0 0.0
    %1347 = vmatpush1.msra.mxu0 0.0
    %1348 = vmatprep.subr.mxu0 0.0
    %1349 = vmatpush1.msra.mxu0 0.0
    %1350 = vmatprep.subr.mxu0 0.0
    %1351 = vmatpush1.msra.mxu0 0.0
    %1352 = vmatprep.subr.mxu0 0.0
    %1353 = vmatpush1.msra.mxu0 0.0
    %1354 = vmatprep.subr.mxu0 0.0
    %1355 = vmatpush1.msra.mxu0 0.0
    %1356 = vmatprep.subr.mxu0 0.0
    %1357 = vmatpush1.msra.mxu0 0.0
    %1358 = vmatprep.subr.mxu0 0.0
    %1359 = vmatpush1.msra.mxu0 0.0
    %1360 = vmatprep.subr.mxu0 0.0
    %1361 = vmatpush1.msra.mxu0 0.0
    %1362 = vmatprep.subr.mxu0 0.0
    %1363 = vmatpush1.msra.mxu0 0.0
    %1364 = vmatprep.subr.mxu0 0.0
    %1365 = vmatpush1.msra.mxu0 0.0
    %1366 = vmatprep.subr.mxu0 0.0
    %1367 = vmatpush1.msra.mxu0 0.0
    %1368 = vmatprep.subr.mxu0 0.0
    %1369 = vmatpush1.msra.mxu0 0.0
    %1370 = vmatprep.subr.mxu0 0.0
    %1371 = vmatpush1.msra.mxu0 0.0
    %1372 = vmatprep.subr.mxu0 0.0
    %1373 = vmatpush1.msra.mxu0 0.0
    %1374 = vmatprep.subr.mxu0 0.0
    %1375 = vmatpush1.msra.mxu0 0.0
    %1376 = vmatprep.subr.mxu0 0.0
    %1377 = vmatpush1.msra.mxu0 0.0
    %1378 = vmatprep.mubr.f32.mxu0 0.0
    %v1379 = vand.u32 %v109, 4294901760
    %v1380 = vsub.f32 %v109, %v1379
    %v1381 = vand.u32 %v1380, 4294901760
    %1382 = vmatmul.mubr.f32.gmra.mrb[0].mxu0 %v1381
    %v1383 = vpop.f32.mrb[0].mxu0
    %v1384 = vadd.f32 %v1274, %v1383
    %v1385 = vpop.f32.mrb[0].mxu0
    %1386 = vmatprep.mubr.f32.mxu0 0.0
    %v1387 = vand.u32 %v110, 4294901760
    %v1388 = vsub.f32 %v110, %v1387
    %v1389 = vand.u32 %v1388, 4294901760
    %1390 = vmatmul.mubr.f32.gmra.mrb[0].mxu0 %v1389
    %v1391 = vpop.f32.mrb[0].mxu0
    %v1392 = vadd.f32 %v1281, %v1391
    %v1393 = vpop.f32.mrb[0].mxu0
    %1394 = vmatprep.mubr.f32.mxu0 0.0
    %v1395 = vand.u32 %v111, 4294901760
    %v1396 = vsub.f32 %v111, %v1395
    %v1397 = vand.u32 %v1396, 4294901760
    %1398 = vmatmul.mubr.f32.gmra.mrb[0].mxu0 %v1397
    %v1399 = vpop.f32.mrb[0].mxu0
    %v1400 = vadd.f32 %v1288, %v1399
    %v1401 = vpop.f32.mrb[0].mxu0
    %1402 = vmatprep.mubr.f32.mxu0 0.0
    %v1403 = vand.u32 %v112, 4294901760
    %v1404 = vsub.f32 %v112, %v1403
    %v1405 = vand.u32 %v1404, 4294901760
    %1406 = vmatmul.mubr.f32.gmra.mrb[0].mxu0 %v1405
    %v1407 = vpop.f32.mrb[0].mxu0
    %v1408 = vadd.f32 %v1295, %v1407
    %v1409 = vpop.f32.mrb[0].mxu0
    %1410 = vdwg.mxu0
    %1411 = vmatprep.subr.mxu0 0.0
    %v1412 = vand.u32 %v34, 4294901760
    %v1413 = vsub.f32 %v34, %v1412
    %v1414 = vand.u32 %v1413, 4294901760
    %1415 = vmatpush1.msra.mxu0 %v1414
    %1416 = vmatprep.subr.mxu0 0.0
    %v1417 = vand.u32 %v35, 4294901760
    %v1418 = vsub.f32 %v35, %v1417
    %v1419 = vand.u32 %v1418, 4294901760
    %1420 = vmatpush1.msra.mxu0 %v1419
    %1421 = vmatprep.subr.mxu0 0.0
    %v1422 = vand.u32 %v36, 4294901760
    %v1423 = vsub.f32 %v36, %v1422
    %v1424 = vand.u32 %v1423, 4294901760
    %1425 = vmatpush1.msra.mxu0 %v1424
    %1426 = vmatprep.subr.mxu0 0.0
    %v1427 = vand.u32 %v37, 4294901760
    %v1428 = vsub.f32 %v37, %v1427
    %v1429 = vand.u32 %v1428, 4294901760
    %1430 = vmatpush1.msra.mxu0 %v1429
    %1431 = vmatprep.subr.mxu0 0.0
    %v1432 = vand.u32 %v38, 4294901760
    %v1433 = vsub.f32 %v38, %v1432
    %v1434 = vand.u32 %v1433, 4294901760
    %1435 = vmatpush1.msra.mxu0 %v1434
    %1436 = vmatprep.subr.mxu0 0.0
    %v1437 = vand.u32 %v39, 4294901760
    %v1438 = vsub.f32 %v39, %v1437
    %v1439 = vand.u32 %v1438, 4294901760
    %1440 = vmatpush1.msra.mxu0 %v1439
    %1441 = vmatprep.subr.mxu0 0.0
    %v1442 = vand.u32 %v40, 4294901760
    %v1443 = vsub.f32 %v40, %v1442
    %v1444 = vand.u32 %v1443, 4294901760
    %1445 = vmatpush1.msra.mxu0 %v1444
    %1446 = vmatprep.subr.mxu0 0.0
    %v1447 = vand.u32 %v41, 4294901760
    %v1448 = vsub.f32 %v41, %v1447
    %v1449 = vand.u32 %v1448, 4294901760
    %1450 = vmatpush1.msra.mxu0 %v1449
    %1451 = vmatprep.subr.mxu0 0.0
    %v1452 = vand.u32 %v42, 4294901760
    %v1453 = vsub.f32 %v42, %v1452
    %v1454 = vand.u32 %v1453, 4294901760
    %1455 = vmatpush1.msra.mxu0 %v1454
    %1456 = vmatprep.subr.mxu0 0.0
    %v1457 = vand.u32 %v43, 4294901760
    %v1458 = vsub.f32 %v43, %v1457
    %v1459 = vand.u32 %v1458, 4294901760
    %1460 = vmatpush1.msra.mxu0 %v1459
    %1461 = vmatprep.subr.mxu0 0.0
    %v1462 = vand.u32 %v44, 4294901760
    %v1463 = vsub.f32 %v44, %v1462
    %v1464 = vand.u32 %v1463, 4294901760
    %1465 = vmatpush1.msra.mxu0 %v1464
    %1466 = vmatprep.subr.mxu0 0.0
    %v1467 = vand.u32 %v45, 4294901760
    %v1468 = vsub.f32 %v45, %v1467
    %v1469 = vand.u32 %v1468, 4294901760
    %1470 = vmatpush1.msra.mxu0 %v1469
    %1471 = vmatprep.subr.mxu0 0.0
    %v1472 = vand.u32 %v46, 4294901760
    %v1473 = vsub.f32 %v46, %v1472
    %v1474 = vand.u32 %v1473, 4294901760
    %1475 = vmatpush1.msra.mxu0 %v1474
    %1476 = vmatprep.subr.mxu0 0.0
    %v1477 = vand.u32 %v47, 4294901760
    %v1478 = vsub.f32 %v47, %v1477
    %v1479 = vand.u32 %v1478, 4294901760
    %1480 = vmatpush1.msra.mxu0 %v1479
    %1481 = vmatprep.subr.mxu0 0.0
    %v1482 = vand.u32 %v48, 4294901760
    %v1483 = vsub.f32 %v48, %v1482
    %v1484 = vand.u32 %v1483, 4294901760
    %1485 = vmatpush1.msra.mxu0 %v1484
    %1486 = vmatprep.subr.mxu0 0.0
    %v1487 = vand.u32 %v49, 4294901760
    %v1488 = vsub.f32 %v49, %v1487
    %v1489 = vand.u32 %v1488, 4294901760
    %1490 = vmatpush1.msra.mxu0 %v1489
    %1491 = vmatprep.subr.mxu0 0.0
    %1492 = vmatpush1.msra.mxu0 0.0
    %1493 = vmatprep.subr.mxu0 0.0
    %1494 = vmatpush1.msra.mxu0 0.0
    %1495 = vmatprep.subr.mxu0 0.0
    %1496 = vmatpush1.msra.mxu0 0.0
    %1497 = vmatprep.subr.mxu0 0.0
    %1498 = vmatpush1.msra.mxu0 0.0
    %1499 = vmatprep.subr.mxu0 0.0
    %1500 = vmatpush1.msra.mxu0 0.0
    %1501 = vmatprep.subr.mxu0 0.0
    %1502 = vmatpush1.msra.mxu0 0.0
    %1503 = vmatprep.subr.mxu0 0.0
    %1504 = vmatpush1.msra.mxu0 0.0
    %1505 = vmatprep.subr.mxu0 0.0
    %1506 = vmatpush1.msra.mxu0 0.0
    %1507 = vmatprep.subr.mxu0 0.0
    %1508 = vmatpush1.msra.mxu0 0.0
    %1509 = vmatprep.subr.mxu0 0.0
    %1510 = vmatpush1.msra.mxu0 0.0
    %1511 = vmatprep.subr.mxu0 0.0
    %1512 = vmatpush1.msra.mxu0 0.0
    %1513 = vmatprep.subr.mxu0 0.0
    %1514 = vmatpush1.msra.mxu0 0.0
    %1515 = vmatprep.subr.mxu0 0.0
    %1516 = vmatpush1.msra.mxu0 0.0
    %1517 = vmatprep.subr.mxu0 0.0
    %1518 = vmatpush1.msra.mxu0 0.0
    %1519 = vmatprep.subr.mxu0 0.0
    %1520 = vmatpush1.msra.mxu0 0.0
    %1521 = vmatprep.subr.mxu0 0.0
    %1522 = vmatpush1.msra.mxu0 0.0
    %1523 = vmatprep.mubr.f32.mxu0 0.0
    %v1524 = vand.u32 %v109, 4294901760
    %1525 = vmatmul.mubr.f32.gmra.mrb[0].mxu0 %v1524
    %v1526 = vpop.f32.mrb[0].mxu0
    %v1527 = vadd.f32 %v1384, %v1526
    %v1528 = vpop.f32.mrb[0].mxu0
    %1529 = vmatprep.mubr.f32.mxu0 0.0
    %v1530 = vand.u32 %v110, 4294901760
    %1531 = vmatmul.mubr.f32.gmra.mrb[0].mxu0 %v1530
    %v1532 = vpop.f32.mrb[0].mxu0
    %v1533 = vadd.f32 %v1392, %v1532
    %v1534 = vpop.f32.mrb[0].mxu0
    %1535 = vmatprep.mubr.f32.mxu0 0.0
    %v1536 = vand.u32 %v111, 4294901760
    %1537 = vmatmul.mubr.f32.gmra.mrb[0].mxu0 %v1536
    %v1538 = vpop.f32.mrb[0].mxu0
    %v1539 = vadd.f32 %v1400, %v1538
    %v1540 = vpop.f32.mrb[0].mxu0
    %1541 = vmatprep.mubr.f32.mxu0 0.0
    %v1542 = vand.u32 %v112, 4294901760
    %1543 = vmatmul.mubr.f32.gmra.mrb[0].mxu0 %v1542
    %v1544 = vpop.f32.mrb[0].mxu0
    %v1545 = vadd.f32 %v1408, %v1544
    %v1546 = vpop.f32.mrb[0].mxu0
    %1547 = vdwg.mxu0
    %1548 = vmatprep.subr.mxu0 0.0
    %v1549 = vand.u32 %v34, 4294901760
    %1550 = vmatpush1.msra.mxu0 %v1549
    %1551 = vmatprep.subr.mxu0 0.0
    %v1552 = vand.u32 %v35, 4294901760
    %1553 = vmatpush1.msra.mxu0 %v1552
    %1554 = vmatprep.subr.mxu0 0.0
    %v1555 = vand.u32 %v36, 4294901760
    %1556 = vmatpush1.msra.mxu0 %v1555
    %1557 = vmatprep.subr.mxu0 0.0
    %v1558 = vand.u32 %v37, 4294901760
    %1559 = vmatpush1.msra.mxu0 %v1558
    %1560 = vmatprep.subr.mxu0 0.0
    %v1561 = vand.u32 %v38, 4294901760
    %1562 = vmatpush1.msra.mxu0 %v1561
    %1563 = vmatprep.subr.mxu0 0.0
    %v1564 = vand.u32 %v39, 4294901760
    %1565 = vmatpush1.msra.mxu0 %v1564
    %1566 = vmatprep.subr.mxu0 0.0
    %v1567 = vand.u32 %v40, 4294901760
    %1568 = vmatpush1.msra.mxu0 %v1567
    %1569 = vmatprep.subr.mxu0 0.0
    %v1570 = vand.u32 %v41, 4294901760
    %1571 = vmatpush1.msra.mxu0 %v1570
    %1572 = vmatprep.subr.mxu0 0.0
    %v1573 = vand.u32 %v42, 4294901760
    %1574 = vmatpush1.msra.mxu0 %v1573
    %1575 = vmatprep.subr.mxu0 0.0
    %v1576 = vand.u32 %v43, 4294901760
    %1577 = vmatpush1.msra.mxu0 %v1576
    %1578 = vmatprep.subr.mxu0 0.0
    %v1579 = vand.u32 %v44, 4294901760
    %1580 = vmatpush1.msra.mxu0 %v1579
    %1581 = vmatprep.subr.mxu0 0.0
    %v1582 = vand.u32 %v45, 4294901760
    %1583 = vmatpush1.msra.mxu0 %v1582
    %1584 = vmatprep.subr.mxu0 0.0
    %v1585 = vand.u32 %v46, 4294901760
    %1586 = vmatpush1.msra.mxu0 %v1585
    %1587 = vmatprep.subr.mxu0 0.0
    %v1588 = vand.u32 %v47, 4294901760
    %1589 = vmatpush1.msra.mxu0 %v1588
    %1590 = vmatprep.subr.mxu0 0.0
    %v1591 = vand.u32 %v48, 4294901760
    %1592 = vmatpush1.msra.mxu0 %v1591
    %1593 = vmatprep.subr.mxu0 0.0
    %v1594 = vand.u32 %v49, 4294901760
    %1595 = vmatpush1.msra.mxu0 %v1594
    %1596 = vmatprep.subr.mxu0 0.0
    %1597 = vmatpush1.msra.mxu0 0.0
    %1598 = vmatprep.subr.mxu0 0.0
    %1599 = vmatpush1.msra.mxu0 0.0
    %1600 = vmatprep.subr.mxu0 0.0
    %1601 = vmatpush1.msra.mxu0 0.0
    %1602 = vmatprep.subr.mxu0 0.0
    %1603 = vmatpush1.msra.mxu0 0.0
    %1604 = vmatprep.subr.mxu0 0.0
    %1605 = vmatpush1.msra.mxu0 0.0
    %1606 = vmatprep.subr.mxu0 0.0
    %1607 = vmatpush1.msra.mxu0 0.0
    %1608 = vmatprep.subr.mxu0 0.0
    %1609 = vmatpush1.msra.mxu0 0.0
    %1610 = vmatprep.subr.mxu0 0.0
    %1611 = vmatpush1.msra.mxu0 0.0
    %1612 = vmatprep.subr.mxu0 0.0
    %1613 = vmatpush1.msra.mxu0 0.0
    %1614 = vmatprep.subr.mxu0 0.0
    %1615 = vmatpush1.msra.mxu0 0.0
    %1616 = vmatprep.subr.mxu0 0.0
    %1617 = vmatpush1.msra.mxu0 0.0
    %1618 = vmatprep.subr.mxu0 0.0
    %1619 = vmatpush1.msra.mxu0 0.0
    %1620 = vmatprep.subr.mxu0 0.0
    %1621 = vmatpush1.msra.mxu0 0.0
    %1622 = vmatprep.subr.mxu0 0.0
    %1623 = vmatpush1.msra.mxu0 0.0
    %1624 = vmatprep.subr.mxu0 0.0
    %1625 = vmatpush1.msra.mxu0 0.0
    %1626 = vmatprep.subr.mxu0 0.0
    %1627 = vmatpush1.msra.mxu0 0.0
    %1628 = vmatprep.mubr.f32.mxu0 0.0
    %v1629 = vand.u32 %v109, 4294901760
    %1630 = vmatmul.mubr.f32.gmra.mrb[0].mxu0 %v1629
    %v1631 = vpop.f32.mrb[0].mxu0
    %v1632 = vadd.f32 %v1527, %v1631
    %v1633 = vpop.f32.mrb[0].mxu0
    %1634 = vmatprep.mubr.f32.mxu0 0.0
    %v1635 = vand.u32 %v110, 4294901760
    %1636 = vmatmul.mubr.f32.gmra.mrb[0].mxu0 %v1635
    %v1637 = vpop.f32.mrb[0].mxu0
    %v1638 = vadd.f32 %v1533, %v1637
    %v1639 = vpop.f32.mrb[0].mxu0
    %1640 = vmatprep.mubr.f32.mxu0 0.0
    %v1641 = vand.u32 %v111, 4294901760
    %1642 = vmatmul.mubr.f32.gmra.mrb[0].mxu0 %v1641
    %v1643 = vpop.f32.mrb[0].mxu0
    %v1644 = vadd.f32 %v1539, %v1643
    %v1645 = vpop.f32.mrb[0].mxu0
    %1646 = vmatprep.mubr.f32.mxu0 0.0
    %v1647 = vand.u32 %v112, 4294901760
    %1648 = vmatmul.mubr.f32.gmra.mrb[0].mxu0 %v1647
    %v1649 = vpop.f32.mrb[0].mxu0
    %v1650 = vadd.f32 %v1545, %v1649
    %v1651 = vpop.f32.mrb[0].mxu0
    %1652 = vdwg.mxu0
    %v1653 = vmul.f32 %v862, %v862
    %v1654 = vmul.f32 %v868, %v868
    %v1655 = vmul.f32 %v874, %v874
    %v1656 = vmul.f32 %v880, %v880
    %v1657 = vadd.f32 %v1653, 1.0
    %v1658 = vadd.f32 %v1654, 1.0
    %v1659 = vadd.f32 %v1655, 1.0
    %v1660 = vadd.f32 %v1656, 1.0
    %v1661 = vmul.f32 %v1632, %v1632
    %v1662 = vmul.f32 %v1638, %v1638
    %v1663 = vmul.f32 %v1644, %v1644
    %v1664 = vmul.f32 %v1650, %v1650
    %v1665 = vadd.f32 %v1657, %v1661
    %v1666 = vadd.f32 %v1658, %v1662
    %v1667 = vadd.f32 %v1659, %v1663
    %v1668 = vadd.f32 %v1660, %v1664
    %v1669 = vrsqrt.pop %v1665
    %v1670 = vrsqrt.pop %v1666
    %v1671 = vrsqrt.pop %v1667
    %v1672 = vrsqrt.pop %v1668
    %v1673 = vmul.f32 %v862, %v1669
    %v1674 = vmul.f32 %v868, %v1670
    %v1675 = vmul.f32 %v874, %v1671
    %v1676 = vmul.f32 %v880, %v1672
    %v1677 = vmul.f32 %v1632, %v1669
    %v1678 = vmul.f32 %v1638, %v1670
    %v1679 = vmul.f32 %v1644, %v1671
    %v1680 = vmul.f32 %v1650, %v1672
    %v1681 = vrot.slane %v1673, 7
    %v1682 = vrot.slane %v1674, 7
    %v1683 = vrot.slane %v1675, 7
    %v1684 = vrot.slane %v1676, 7
    %v1685 = vsel %vm75, %v1683, %v1684
    %v1686 = vsel %vm75, %v1682, %v1683
    %v1687 = vsel %vm75, %v1681, %v1682
    %v1688 = vsel %vm75, %v1684, %v1681
    %v1689 = vsel %vm63, 0.0, %v1688
    %v1690 = vsel %vm64, 0.0, %v1687
    %v1691 = vsel %vm65, 0.0, %v1686
    %v1692 = vsel %vm66, 0.0, %v1685
    %v1693 = vrot.slane %v1673, 1
    %v1694 = vrot.slane %v1674, 1
    %v1695 = vrot.slane %v1675, 1
    %v1696 = vrot.slane %v1676, 1
    %v1697 = vsel %vm88, %v1695, %v1696
    %v1698 = vsel %vm88, %v1694, %v1695
    %v1699 = vsel %vm88, %v1693, %v1694
    %v1700 = vsel %vm88, %v1696, %v1693
    %v1701 = vsel %vm67, 0.0, %v1699
    %v1702 = vsel %vm68, 0.0, %v1698
    %v1703 = vsel %vm69, 0.0, %v1697
    %v1704 = vsel %vm70, 0.0, %v1700
    %v1705 = vmul.f32 %v1673, 2.0
    %v1706 = vmul.f32 %v1674, 2.0
    %v1707 = vmul.f32 %v1675, 2.0
    %v1708 = vmul.f32 %v1676, 2.0
    %v1709 = vadd.f32 %v1689, %v1705
    %v1710 = vadd.f32 %v1690, %v1706
    %v1711 = vadd.f32 %v1691, %v1707
    %v1712 = vadd.f32 %v1692, %v1708
    %v1713 = vadd.f32 %v1709, %v1701
    %v1714 = vadd.f32 %v1710, %v1702
    %v1715 = vadd.f32 %v1711, %v1703
    %v1716 = vadd.f32 %v1712, %v1704
    %v1717 = vrot.slane %v1677, 7
    %v1718 = vrot.slane %v1678, 7
    %v1719 = vrot.slane %v1679, 7
    %v1720 = vrot.slane %v1680, 7
    %v1721 = vsel %vm75, %v1719, %v1720
    %v1722 = vsel %vm75, %v1718, %v1719
    %v1723 = vsel %vm75, %v1717, %v1718
    %v1724 = vsel %vm75, %v1720, %v1717
    %v1725 = vsel %vm63, 0.0, %v1724
    %v1726 = vsel %vm64, 0.0, %v1723
    %v1727 = vsel %vm65, 0.0, %v1722
    %v1728 = vsel %vm66, 0.0, %v1721
    %v1729 = vrot.slane %v1677, 1
    %v1730 = vrot.slane %v1678, 1
    %v1731 = vrot.slane %v1679, 1
    %v1732 = vrot.slane %v1680, 1
    %v1733 = vsel %vm88, %v1731, %v1732
    %v1734 = vsel %vm88, %v1730, %v1731
    %v1735 = vsel %vm88, %v1729, %v1730
    %v1736 = vsel %vm88, %v1732, %v1729
    %v1737 = vsel %vm67, 0.0, %v1735
    %v1738 = vsel %vm68, 0.0, %v1734
    %v1739 = vsel %vm69, 0.0, %v1733
    %v1740 = vsel %vm70, 0.0, %v1736
    %v1741 = vsub.f32 %v1725, %v1737
    %v1742 = vsub.f32 %v1726, %v1738
    %v1743 = vsub.f32 %v1727, %v1739
    %v1744 = vsub.f32 %v1728, %v1740
    %1745 = vmatprep.subr.mxu0 0.0
    %v1746 = vand.u32 %v34, 4294901760
    %1747 = vmatpush1.msra.mxu0 %v1746
    %1748 = vmatprep.subr.mxu0 0.0
    %v1749 = vand.u32 %v35, 4294901760
    %1750 = vmatpush1.msra.mxu0 %v1749
    %1751 = vmatprep.subr.mxu0 0.0
    %v1752 = vand.u32 %v36, 4294901760
    %1753 = vmatpush1.msra.mxu0 %v1752
    %1754 = vmatprep.subr.mxu0 0.0
    %v1755 = vand.u32 %v37, 4294901760
    %1756 = vmatpush1.msra.mxu0 %v1755
    %1757 = vmatprep.subr.mxu0 0.0
    %v1758 = vand.u32 %v38, 4294901760
    %1759 = vmatpush1.msra.mxu0 %v1758
    %1760 = vmatprep.subr.mxu0 0.0
    %v1761 = vand.u32 %v39, 4294901760
    %1762 = vmatpush1.msra.mxu0 %v1761
    %1763 = vmatprep.subr.mxu0 0.0
    %v1764 = vand.u32 %v40, 4294901760
    %1765 = vmatpush1.msra.mxu0 %v1764
    %1766 = vmatprep.subr.mxu0 0.0
    %v1767 = vand.u32 %v41, 4294901760
    %1768 = vmatpush1.msra.mxu0 %v1767
    %1769 = vmatprep.subr.mxu0 0.0
    %v1770 = vand.u32 %v42, 4294901760
    %1771 = vmatpush1.msra.mxu0 %v1770
    %1772 = vmatprep.subr.mxu0 0.0
    %v1773 = vand.u32 %v43, 4294901760
    %1774 = vmatpush1.msra.mxu0 %v1773
    %1775 = vmatprep.subr.mxu0 0.0
    %v1776 = vand.u32 %v44, 4294901760
    %1777 = vmatpush1.msra.mxu0 %v1776
    %1778 = vmatprep.subr.mxu0 0.0
    %v1779 = vand.u32 %v45, 4294901760
    %1780 = vmatpush1.msra.mxu0 %v1779
    %1781 = vmatprep.subr.mxu0 0.0
    %v1782 = vand.u32 %v46, 4294901760
    %1783 = vmatpush1.msra.mxu0 %v1782
    %1784 = vmatprep.subr.mxu0 0.0
    %v1785 = vand.u32 %v47, 4294901760
    %1786 = vmatpush1.msra.mxu0 %v1785
    %1787 = vmatprep.subr.mxu0 0.0
    %v1788 = vand.u32 %v48, 4294901760
    %1789 = vmatpush1.msra.mxu0 %v1788
    %1790 = vmatprep.subr.mxu0 0.0
    %v1791 = vand.u32 %v49, 4294901760
    %1792 = vmatpush1.msra.mxu0 %v1791
    %1793 = vmatprep.subr.mxu0 0.0
    %1794 = vmatpush1.msra.mxu0 0.0
    %1795 = vmatprep.subr.mxu0 0.0
    %1796 = vmatpush1.msra.mxu0 0.0
    %1797 = vmatprep.subr.mxu0 0.0
    %1798 = vmatpush1.msra.mxu0 0.0
    %1799 = vmatprep.subr.mxu0 0.0
    %1800 = vmatpush1.msra.mxu0 0.0
    %1801 = vmatprep.subr.mxu0 0.0
    %1802 = vmatpush1.msra.mxu0 0.0
    %1803 = vmatprep.subr.mxu0 0.0
    %1804 = vmatpush1.msra.mxu0 0.0
    %1805 = vmatprep.subr.mxu0 0.0
    %1806 = vmatpush1.msra.mxu0 0.0
    %1807 = vmatprep.subr.mxu0 0.0
    %1808 = vmatpush1.msra.mxu0 0.0
    %1809 = vmatprep.subr.mxu0 0.0
    %1810 = vmatpush1.msra.mxu0 0.0
    %1811 = vmatprep.subr.mxu0 0.0
    %1812 = vmatpush1.msra.mxu0 0.0
    %1813 = vmatprep.subr.mxu0 0.0
    %1814 = vmatpush1.msra.mxu0 0.0
    %1815 = vmatprep.subr.mxu0 0.0
    %1816 = vmatpush1.msra.mxu0 0.0
    %1817 = vmatprep.subr.mxu0 0.0
    %1818 = vmatpush1.msra.mxu0 0.0
    %1819 = vmatprep.subr.mxu0 0.0
    %1820 = vmatpush1.msra.mxu0 0.0
    %1821 = vmatprep.subr.mxu0 0.0
    %1822 = vmatpush1.msra.mxu0 0.0
    %1823 = vmatprep.subr.mxu0 0.0
    %1824 = vmatpush1.msra.mxu0 0.0
    %1825 = vmatprep.mubr.f32.mxu0 0.0
    %v1826 = vand.u32 %v1741, 4294901760
    %v1827 = vsub.f32 %v1741, %v1826
    %v1828 = vand.u32 %v1827, 4294901760
    %v1829 = vsub.f32 %v1827, %v1828
    %v1830 = vand.u32 %v1829, 4294901760
    %1831 = vmatmul.mubr.f32.gmra.mrb[0].mxu0 %v1830
    %v1832 = vpop.f32.mrb[0].mxu0
    %v1833 = vadd.f32 0.0, %v1832
    %v1834 = vpop.f32.mrb[0].mxu0
    %1835 = vmatprep.mubr.f32.mxu0 0.0
    %v1836 = vand.u32 %v1742, 4294901760
    %v1837 = vsub.f32 %v1742, %v1836
    %v1838 = vand.u32 %v1837, 4294901760
    %v1839 = vsub.f32 %v1837, %v1838
    %v1840 = vand.u32 %v1839, 4294901760
    %1841 = vmatmul.mubr.f32.gmra.mrb[0].mxu0 %v1840
    %v1842 = vpop.f32.mrb[0].mxu0
    %v1843 = vadd.f32 0.0, %v1842
    %v1844 = vpop.f32.mrb[0].mxu0
    %1845 = vmatprep.mubr.f32.mxu0 0.0
    %v1846 = vand.u32 %v1743, 4294901760
    %v1847 = vsub.f32 %v1743, %v1846
    %v1848 = vand.u32 %v1847, 4294901760
    %v1849 = vsub.f32 %v1847, %v1848
    %v1850 = vand.u32 %v1849, 4294901760
    %1851 = vmatmul.mubr.f32.gmra.mrb[0].mxu0 %v1850
    %v1852 = vpop.f32.mrb[0].mxu0
    %v1853 = vadd.f32 0.0, %v1852
    %v1854 = vpop.f32.mrb[0].mxu0
    %1855 = vmatprep.mubr.f32.mxu0 0.0
    %v1856 = vand.u32 %v1744, 4294901760
    %v1857 = vsub.f32 %v1744, %v1856
    %v1858 = vand.u32 %v1857, 4294901760
    %v1859 = vsub.f32 %v1857, %v1858
    %v1860 = vand.u32 %v1859, 4294901760
    %1861 = vmatmul.mubr.f32.gmra.mrb[0].mxu0 %v1860
    %v1862 = vpop.f32.mrb[0].mxu0
    %v1863 = vadd.f32 0.0, %v1862
    %v1864 = vpop.f32.mrb[0].mxu0
    %1865 = vdwg.mxu0
    %1866 = vmatprep.subr.mxu0 0.0
    %v1867 = vand.u32 %v34, 4294901760
    %v1868 = vsub.f32 %v34, %v1867
    %v1869 = vand.u32 %v1868, 4294901760
    %v1870 = vsub.f32 %v1868, %v1869
    %v1871 = vand.u32 %v1870, 4294901760
    %1872 = vmatpush1.msra.mxu0 %v1871
    %1873 = vmatprep.subr.mxu0 0.0
    %v1874 = vand.u32 %v35, 4294901760
    %v1875 = vsub.f32 %v35, %v1874
    %v1876 = vand.u32 %v1875, 4294901760
    %v1877 = vsub.f32 %v1875, %v1876
    %v1878 = vand.u32 %v1877, 4294901760
    %1879 = vmatpush1.msra.mxu0 %v1878
    %1880 = vmatprep.subr.mxu0 0.0
    %v1881 = vand.u32 %v36, 4294901760
    %v1882 = vsub.f32 %v36, %v1881
    %v1883 = vand.u32 %v1882, 4294901760
    %v1884 = vsub.f32 %v1882, %v1883
    %v1885 = vand.u32 %v1884, 4294901760
    %1886 = vmatpush1.msra.mxu0 %v1885
    %1887 = vmatprep.subr.mxu0 0.0
    %v1888 = vand.u32 %v37, 4294901760
    %v1889 = vsub.f32 %v37, %v1888
    %v1890 = vand.u32 %v1889, 4294901760
    %v1891 = vsub.f32 %v1889, %v1890
    %v1892 = vand.u32 %v1891, 4294901760
    %1893 = vmatpush1.msra.mxu0 %v1892
    %1894 = vmatprep.subr.mxu0 0.0
    %v1895 = vand.u32 %v38, 4294901760
    %v1896 = vsub.f32 %v38, %v1895
    %v1897 = vand.u32 %v1896, 4294901760
    %v1898 = vsub.f32 %v1896, %v1897
    %v1899 = vand.u32 %v1898, 4294901760
    %1900 = vmatpush1.msra.mxu0 %v1899
    %1901 = vmatprep.subr.mxu0 0.0
    %v1902 = vand.u32 %v39, 4294901760
    %v1903 = vsub.f32 %v39, %v1902
    %v1904 = vand.u32 %v1903, 4294901760
    %v1905 = vsub.f32 %v1903, %v1904
    %v1906 = vand.u32 %v1905, 4294901760
    %1907 = vmatpush1.msra.mxu0 %v1906
    %1908 = vmatprep.subr.mxu0 0.0
    %v1909 = vand.u32 %v40, 4294901760
    %v1910 = vsub.f32 %v40, %v1909
    %v1911 = vand.u32 %v1910, 4294901760
    %v1912 = vsub.f32 %v1910, %v1911
    %v1913 = vand.u32 %v1912, 4294901760
    %1914 = vmatpush1.msra.mxu0 %v1913
    %1915 = vmatprep.subr.mxu0 0.0
    %v1916 = vand.u32 %v41, 4294901760
    %v1917 = vsub.f32 %v41, %v1916
    %v1918 = vand.u32 %v1917, 4294901760
    %v1919 = vsub.f32 %v1917, %v1918
    %v1920 = vand.u32 %v1919, 4294901760
    %1921 = vmatpush1.msra.mxu0 %v1920
    %1922 = vmatprep.subr.mxu0 0.0
    %v1923 = vand.u32 %v42, 4294901760
    %v1924 = vsub.f32 %v42, %v1923
    %v1925 = vand.u32 %v1924, 4294901760
    %v1926 = vsub.f32 %v1924, %v1925
    %v1927 = vand.u32 %v1926, 4294901760
    %1928 = vmatpush1.msra.mxu0 %v1927
    %1929 = vmatprep.subr.mxu0 0.0
    %v1930 = vand.u32 %v43, 4294901760
    %v1931 = vsub.f32 %v43, %v1930
    %v1932 = vand.u32 %v1931, 4294901760
    %v1933 = vsub.f32 %v1931, %v1932
    %v1934 = vand.u32 %v1933, 4294901760
    %1935 = vmatpush1.msra.mxu0 %v1934
    %1936 = vmatprep.subr.mxu0 0.0
    %v1937 = vand.u32 %v44, 4294901760
    %v1938 = vsub.f32 %v44, %v1937
    %v1939 = vand.u32 %v1938, 4294901760
    %v1940 = vsub.f32 %v1938, %v1939
    %v1941 = vand.u32 %v1940, 4294901760
    %1942 = vmatpush1.msra.mxu0 %v1941
    %1943 = vmatprep.subr.mxu0 0.0
    %v1944 = vand.u32 %v45, 4294901760
    %v1945 = vsub.f32 %v45, %v1944
    %v1946 = vand.u32 %v1945, 4294901760
    %v1947 = vsub.f32 %v1945, %v1946
    %v1948 = vand.u32 %v1947, 4294901760
    %1949 = vmatpush1.msra.mxu0 %v1948
    %1950 = vmatprep.subr.mxu0 0.0
    %v1951 = vand.u32 %v46, 4294901760
    %v1952 = vsub.f32 %v46, %v1951
    %v1953 = vand.u32 %v1952, 4294901760
    %v1954 = vsub.f32 %v1952, %v1953
    %v1955 = vand.u32 %v1954, 4294901760
    %1956 = vmatpush1.msra.mxu0 %v1955
    %1957 = vmatprep.subr.mxu0 0.0
    %v1958 = vand.u32 %v47, 4294901760
    %v1959 = vsub.f32 %v47, %v1958
    %v1960 = vand.u32 %v1959, 4294901760
    %v1961 = vsub.f32 %v1959, %v1960
    %v1962 = vand.u32 %v1961, 4294901760
    %1963 = vmatpush1.msra.mxu0 %v1962
    %1964 = vmatprep.subr.mxu0 0.0
    %v1965 = vand.u32 %v48, 4294901760
    %v1966 = vsub.f32 %v48, %v1965
    %v1967 = vand.u32 %v1966, 4294901760
    %v1968 = vsub.f32 %v1966, %v1967
    %v1969 = vand.u32 %v1968, 4294901760
    %1970 = vmatpush1.msra.mxu0 %v1969
    %1971 = vmatprep.subr.mxu0 0.0
    %v1972 = vand.u32 %v49, 4294901760
    %v1973 = vsub.f32 %v49, %v1972
    %v1974 = vand.u32 %v1973, 4294901760
    %v1975 = vsub.f32 %v1973, %v1974
    %v1976 = vand.u32 %v1975, 4294901760
    %1977 = vmatpush1.msra.mxu0 %v1976
    %1978 = vmatprep.subr.mxu0 0.0
    %1979 = vmatpush1.msra.mxu0 0.0
    %1980 = vmatprep.subr.mxu0 0.0
    %1981 = vmatpush1.msra.mxu0 0.0
    %1982 = vmatprep.subr.mxu0 0.0
    %1983 = vmatpush1.msra.mxu0 0.0
    %1984 = vmatprep.subr.mxu0 0.0
    %1985 = vmatpush1.msra.mxu0 0.0
    %1986 = vmatprep.subr.mxu0 0.0
    %1987 = vmatpush1.msra.mxu0 0.0
    %1988 = vmatprep.subr.mxu0 0.0
    %1989 = vmatpush1.msra.mxu0 0.0
    %1990 = vmatprep.subr.mxu0 0.0
    %1991 = vmatpush1.msra.mxu0 0.0
    %1992 = vmatprep.subr.mxu0 0.0
    %1993 = vmatpush1.msra.mxu0 0.0
    %1994 = vmatprep.subr.mxu0 0.0
    %1995 = vmatpush1.msra.mxu0 0.0
    %1996 = vmatprep.subr.mxu0 0.0
    %1997 = vmatpush1.msra.mxu0 0.0
    %1998 = vmatprep.subr.mxu0 0.0
    %1999 = vmatpush1.msra.mxu0 0.0
    %2000 = vmatprep.subr.mxu0 0.0
    %2001 = vmatpush1.msra.mxu0 0.0
    %2002 = vmatprep.subr.mxu0 0.0
    %2003 = vmatpush1.msra.mxu0 0.0
    %2004 = vmatprep.subr.mxu0 0.0
    %2005 = vmatpush1.msra.mxu0 0.0
    %2006 = vmatprep.subr.mxu0 0.0
    %2007 = vmatpush1.msra.mxu0 0.0
    %2008 = vmatprep.subr.mxu0 0.0
    %2009 = vmatpush1.msra.mxu0 0.0
    %2010 = vmatprep.mubr.f32.mxu0 0.0
    %v2011 = vand.u32 %v1741, 4294901760
    %2012 = vmatmul.mubr.f32.gmra.mrb[0].mxu0 %v2011
    %v2013 = vpop.f32.mrb[0].mxu0
    %v2014 = vadd.f32 %v1833, %v2013
    %v2015 = vpop.f32.mrb[0].mxu0
    %2016 = vmatprep.mubr.f32.mxu0 0.0
    %v2017 = vand.u32 %v1742, 4294901760
    %2018 = vmatmul.mubr.f32.gmra.mrb[0].mxu0 %v2017
    %v2019 = vpop.f32.mrb[0].mxu0
    %v2020 = vadd.f32 %v1843, %v2019
    %v2021 = vpop.f32.mrb[0].mxu0
    %2022 = vmatprep.mubr.f32.mxu0 0.0
    %v2023 = vand.u32 %v1743, 4294901760
    %2024 = vmatmul.mubr.f32.gmra.mrb[0].mxu0 %v2023
    %v2025 = vpop.f32.mrb[0].mxu0
    %v2026 = vadd.f32 %v1853, %v2025
    %v2027 = vpop.f32.mrb[0].mxu0
    %2028 = vmatprep.mubr.f32.mxu0 0.0
    %v2029 = vand.u32 %v1744, 4294901760
    %2030 = vmatmul.mubr.f32.gmra.mrb[0].mxu0 %v2029
    %v2031 = vpop.f32.mrb[0].mxu0
    %v2032 = vadd.f32 %v1863, %v2031
    %v2033 = vpop.f32.mrb[0].mxu0
    %2034 = vdwg.mxu0
    %2035 = vmatprep.subr.mxu0 0.0
    %v2036 = vand.u32 %v34, 4294901760
    %v2037 = vsub.f32 %v34, %v2036
    %2038 = vmatpush1.msra.mxu0 %v2037
    %2039 = vmatprep.subr.mxu0 0.0
    %v2040 = vand.u32 %v35, 4294901760
    %v2041 = vsub.f32 %v35, %v2040
    %2042 = vmatpush1.msra.mxu0 %v2041
    %2043 = vmatprep.subr.mxu0 0.0
    %v2044 = vand.u32 %v36, 4294901760
    %v2045 = vsub.f32 %v36, %v2044
    %2046 = vmatpush1.msra.mxu0 %v2045
    %2047 = vmatprep.subr.mxu0 0.0
    %v2048 = vand.u32 %v37, 4294901760
    %v2049 = vsub.f32 %v37, %v2048
    %2050 = vmatpush1.msra.mxu0 %v2049
    %2051 = vmatprep.subr.mxu0 0.0
    %v2052 = vand.u32 %v38, 4294901760
    %v2053 = vsub.f32 %v38, %v2052
    %2054 = vmatpush1.msra.mxu0 %v2053
    %2055 = vmatprep.subr.mxu0 0.0
    %v2056 = vand.u32 %v39, 4294901760
    %v2057 = vsub.f32 %v39, %v2056
    %2058 = vmatpush1.msra.mxu0 %v2057
    %2059 = vmatprep.subr.mxu0 0.0
    %v2060 = vand.u32 %v40, 4294901760
    %v2061 = vsub.f32 %v40, %v2060
    %2062 = vmatpush1.msra.mxu0 %v2061
    %2063 = vmatprep.subr.mxu0 0.0
    %v2064 = vand.u32 %v41, 4294901760
    %v2065 = vsub.f32 %v41, %v2064
    %2066 = vmatpush1.msra.mxu0 %v2065
    %2067 = vmatprep.subr.mxu0 0.0
    %v2068 = vand.u32 %v42, 4294901760
    %v2069 = vsub.f32 %v42, %v2068
    %2070 = vmatpush1.msra.mxu0 %v2069
    %2071 = vmatprep.subr.mxu0 0.0
    %v2072 = vand.u32 %v43, 4294901760
    %v2073 = vsub.f32 %v43, %v2072
    %2074 = vmatpush1.msra.mxu0 %v2073
    %2075 = vmatprep.subr.mxu0 0.0
    %v2076 = vand.u32 %v44, 4294901760
    %v2077 = vsub.f32 %v44, %v2076
    %2078 = vmatpush1.msra.mxu0 %v2077
    %2079 = vmatprep.subr.mxu0 0.0
    %v2080 = vand.u32 %v45, 4294901760
    %v2081 = vsub.f32 %v45, %v2080
    %2082 = vmatpush1.msra.mxu0 %v2081
    %2083 = vmatprep.subr.mxu0 0.0
    %v2084 = vand.u32 %v46, 4294901760
    %v2085 = vsub.f32 %v46, %v2084
    %2086 = vmatpush1.msra.mxu0 %v2085
    %2087 = vmatprep.subr.mxu0 0.0
    %v2088 = vand.u32 %v47, 4294901760
    %v2089 = vsub.f32 %v47, %v2088
    %2090 = vmatpush1.msra.mxu0 %v2089
    %2091 = vmatprep.subr.mxu0 0.0
    %v2092 = vand.u32 %v48, 4294901760
    %v2093 = vsub.f32 %v48, %v2092
    %2094 = vmatpush1.msra.mxu0 %v2093
    %2095 = vmatprep.subr.mxu0 0.0
    %v2096 = vand.u32 %v49, 4294901760
    %v2097 = vsub.f32 %v49, %v2096
    %2098 = vmatpush1.msra.mxu0 %v2097
    %2099 = vmatprep.subr.mxu0 0.0
    %2100 = vmatpush1.msra.mxu0 0.0
    %2101 = vmatprep.subr.mxu0 0.0
    %2102 = vmatpush1.msra.mxu0 0.0
    %2103 = vmatprep.subr.mxu0 0.0
    %2104 = vmatpush1.msra.mxu0 0.0
    %2105 = vmatprep.subr.mxu0 0.0
    %2106 = vmatpush1.msra.mxu0 0.0
    %2107 = vmatprep.subr.mxu0 0.0
    %2108 = vmatpush1.msra.mxu0 0.0
    %2109 = vmatprep.subr.mxu0 0.0
    %2110 = vmatpush1.msra.mxu0 0.0
    %2111 = vmatprep.subr.mxu0 0.0
    %2112 = vmatpush1.msra.mxu0 0.0
    %2113 = vmatprep.subr.mxu0 0.0
    %2114 = vmatpush1.msra.mxu0 0.0
    %2115 = vmatprep.subr.mxu0 0.0
    %2116 = vmatpush1.msra.mxu0 0.0
    %2117 = vmatprep.subr.mxu0 0.0
    %2118 = vmatpush1.msra.mxu0 0.0
    %2119 = vmatprep.subr.mxu0 0.0
    %2120 = vmatpush1.msra.mxu0 0.0
    %2121 = vmatprep.subr.mxu0 0.0
    %2122 = vmatpush1.msra.mxu0 0.0
    %2123 = vmatprep.subr.mxu0 0.0
    %2124 = vmatpush1.msra.mxu0 0.0
    %2125 = vmatprep.subr.mxu0 0.0
    %2126 = vmatpush1.msra.mxu0 0.0
    %2127 = vmatprep.subr.mxu0 0.0
    %2128 = vmatpush1.msra.mxu0 0.0
    %2129 = vmatprep.subr.mxu0 0.0
    %2130 = vmatpush1.msra.mxu0 0.0
    %2131 = vmatprep.mubr.f32.mxu0 0.0
    %v2132 = vand.u32 %v1741, 4294901760
    %v2133 = vsub.f32 %v1741, %v2132
    %2134 = vmatmul.mubr.f32.gmra.mrb[0].mxu0 %v2133
    %v2135 = vpop.f32.mrb[0].mxu0
    %v2136 = vadd.f32 %v2014, %v2135
    %v2137 = vpop.f32.mrb[0].mxu0
    %2138 = vmatprep.mubr.f32.mxu0 0.0
    %v2139 = vand.u32 %v1742, 4294901760
    %v2140 = vsub.f32 %v1742, %v2139
    %2141 = vmatmul.mubr.f32.gmra.mrb[0].mxu0 %v2140
    %v2142 = vpop.f32.mrb[0].mxu0
    %v2143 = vadd.f32 %v2020, %v2142
    %v2144 = vpop.f32.mrb[0].mxu0
    %2145 = vmatprep.mubr.f32.mxu0 0.0
    %v2146 = vand.u32 %v1743, 4294901760
    %v2147 = vsub.f32 %v1743, %v2146
    %2148 = vmatmul.mubr.f32.gmra.mrb[0].mxu0 %v2147
    %v2149 = vpop.f32.mrb[0].mxu0
    %v2150 = vadd.f32 %v2026, %v2149
    %v2151 = vpop.f32.mrb[0].mxu0
    %2152 = vmatprep.mubr.f32.mxu0 0.0
    %v2153 = vand.u32 %v1744, 4294901760
    %v2154 = vsub.f32 %v1744, %v2153
    %2155 = vmatmul.mubr.f32.gmra.mrb[0].mxu0 %v2154
    %v2156 = vpop.f32.mrb[0].mxu0
    %v2157 = vadd.f32 %v2032, %v2156
    %v2158 = vpop.f32.mrb[0].mxu0
    %2159 = vdwg.mxu0
    %2160 = vmatprep.subr.mxu0 0.0
    %v2161 = vand.u32 %v34, 4294901760
    %2162 = vmatpush1.msra.mxu0 %v2161
    %2163 = vmatprep.subr.mxu0 0.0
    %v2164 = vand.u32 %v35, 4294901760
    %2165 = vmatpush1.msra.mxu0 %v2164
    %2166 = vmatprep.subr.mxu0 0.0
    %v2167 = vand.u32 %v36, 4294901760
    %2168 = vmatpush1.msra.mxu0 %v2167
    %2169 = vmatprep.subr.mxu0 0.0
    %v2170 = vand.u32 %v37, 4294901760
    %2171 = vmatpush1.msra.mxu0 %v2170
    %2172 = vmatprep.subr.mxu0 0.0
    %v2173 = vand.u32 %v38, 4294901760
    %2174 = vmatpush1.msra.mxu0 %v2173
    %2175 = vmatprep.subr.mxu0 0.0
    %v2176 = vand.u32 %v39, 4294901760
    %2177 = vmatpush1.msra.mxu0 %v2176
    %2178 = vmatprep.subr.mxu0 0.0
    %v2179 = vand.u32 %v40, 4294901760
    %2180 = vmatpush1.msra.mxu0 %v2179
    %2181 = vmatprep.subr.mxu0 0.0
    %v2182 = vand.u32 %v41, 4294901760
    %2183 = vmatpush1.msra.mxu0 %v2182
    %2184 = vmatprep.subr.mxu0 0.0
    %v2185 = vand.u32 %v42, 4294901760
    %2186 = vmatpush1.msra.mxu0 %v2185
    %2187 = vmatprep.subr.mxu0 0.0
    %v2188 = vand.u32 %v43, 4294901760
    %2189 = vmatpush1.msra.mxu0 %v2188
    %2190 = vmatprep.subr.mxu0 0.0
    %v2191 = vand.u32 %v44, 4294901760
    %2192 = vmatpush1.msra.mxu0 %v2191
    %2193 = vmatprep.subr.mxu0 0.0
    %v2194 = vand.u32 %v45, 4294901760
    %2195 = vmatpush1.msra.mxu0 %v2194
    %2196 = vmatprep.subr.mxu0 0.0
    %v2197 = vand.u32 %v46, 4294901760
    %2198 = vmatpush1.msra.mxu0 %v2197
    %2199 = vmatprep.subr.mxu0 0.0
    %v2200 = vand.u32 %v47, 4294901760
    %2201 = vmatpush1.msra.mxu0 %v2200
    %2202 = vmatprep.subr.mxu0 0.0
    %v2203 = vand.u32 %v48, 4294901760
    %2204 = vmatpush1.msra.mxu0 %v2203
    %2205 = vmatprep.subr.mxu0 0.0
    %v2206 = vand.u32 %v49, 4294901760
    %2207 = vmatpush1.msra.mxu0 %v2206
    %2208 = vmatprep.subr.mxu0 0.0
    %2209 = vmatpush1.msra.mxu0 0.0
    %2210 = vmatprep.subr.mxu0 0.0
    %2211 = vmatpush1.msra.mxu0 0.0
    %2212 = vmatprep.subr.mxu0 0.0
    %2213 = vmatpush1.msra.mxu0 0.0
    %2214 = vmatprep.subr.mxu0 0.0
    %2215 = vmatpush1.msra.mxu0 0.0
    %2216 = vmatprep.subr.mxu0 0.0
    %2217 = vmatpush1.msra.mxu0 0.0
    %2218 = vmatprep.subr.mxu0 0.0
    %2219 = vmatpush1.msra.mxu0 0.0
    %2220 = vmatprep.subr.mxu0 0.0
    %2221 = vmatpush1.msra.mxu0 0.0
    %2222 = vmatprep.subr.mxu0 0.0
    %2223 = vmatpush1.msra.mxu0 0.0
    %2224 = vmatprep.subr.mxu0 0.0
    %2225 = vmatpush1.msra.mxu0 0.0
    %2226 = vmatprep.subr.mxu0 0.0
    %2227 = vmatpush1.msra.mxu0 0.0
    %2228 = vmatprep.subr.mxu0 0.0
    %2229 = vmatpush1.msra.mxu0 0.0
    %2230 = vmatprep.subr.mxu0 0.0
    %2231 = vmatpush1.msra.mxu0 0.0
    %2232 = vmatprep.subr.mxu0 0.0
    %2233 = vmatpush1.msra.mxu0 0.0
    %2234 = vmatprep.subr.mxu0 0.0
    %2235 = vmatpush1.msra.mxu0 0.0
    %2236 = vmatprep.subr.mxu0 0.0
    %2237 = vmatpush1.msra.mxu0 0.0
    %2238 = vmatprep.subr.mxu0 0.0
    %2239 = vmatpush1.msra.mxu0 0.0
    %2240 = vmatprep.mubr.f32.mxu0 0.0
    %v2241 = vand.u32 %v1741, 4294901760
    %v2242 = vsub.f32 %v1741, %v2241
    %v2243 = vand.u32 %v2242, 4294901760
    %2244 = vmatmul.mubr.f32.gmra.mrb[0].mxu0 %v2243
    %v2245 = vpop.f32.mrb[0].mxu0
    %v2246 = vadd.f32 %v2136, %v2245
    %v2247 = vpop.f32.mrb[0].mxu0
    %2248 = vmatprep.mubr.f32.mxu0 0.0
    %v2249 = vand.u32 %v1742, 4294901760
    %v2250 = vsub.f32 %v1742, %v2249
    %v2251 = vand.u32 %v2250, 4294901760
    %2252 = vmatmul.mubr.f32.gmra.mrb[0].mxu0 %v2251
    %v2253 = vpop.f32.mrb[0].mxu0
    %v2254 = vadd.f32 %v2143, %v2253
    %v2255 = vpop.f32.mrb[0].mxu0
    %2256 = vmatprep.mubr.f32.mxu0 0.0
    %v2257 = vand.u32 %v1743, 4294901760
    %v2258 = vsub.f32 %v1743, %v2257
    %v2259 = vand.u32 %v2258, 4294901760
    %2260 = vmatmul.mubr.f32.gmra.mrb[0].mxu0 %v2259
    %v2261 = vpop.f32.mrb[0].mxu0
    %v2262 = vadd.f32 %v2150, %v2261
    %v2263 = vpop.f32.mrb[0].mxu0
    %2264 = vmatprep.mubr.f32.mxu0 0.0
    %v2265 = vand.u32 %v1744, 4294901760
    %v2266 = vsub.f32 %v1744, %v2265
    %v2267 = vand.u32 %v2266, 4294901760
    %2268 = vmatmul.mubr.f32.gmra.mrb[0].mxu0 %v2267
    %v2269 = vpop.f32.mrb[0].mxu0
    %v2270 = vadd.f32 %v2157, %v2269
    %v2271 = vpop.f32.mrb[0].mxu0
    %2272 = vdwg.mxu0
    %2273 = vmatprep.subr.mxu0 0.0
    %v2274 = vand.u32 %v34, 4294901760
    %v2275 = vsub.f32 %v34, %v2274
    %v2276 = vand.u32 %v2275, 4294901760
    %2277 = vmatpush1.msra.mxu0 %v2276
    %2278 = vmatprep.subr.mxu0 0.0
    %v2279 = vand.u32 %v35, 4294901760
    %v2280 = vsub.f32 %v35, %v2279
    %v2281 = vand.u32 %v2280, 4294901760
    %2282 = vmatpush1.msra.mxu0 %v2281
    %2283 = vmatprep.subr.mxu0 0.0
    %v2284 = vand.u32 %v36, 4294901760
    %v2285 = vsub.f32 %v36, %v2284
    %v2286 = vand.u32 %v2285, 4294901760
    %2287 = vmatpush1.msra.mxu0 %v2286
    %2288 = vmatprep.subr.mxu0 0.0
    %v2289 = vand.u32 %v37, 4294901760
    %v2290 = vsub.f32 %v37, %v2289
    %v2291 = vand.u32 %v2290, 4294901760
    %2292 = vmatpush1.msra.mxu0 %v2291
    %2293 = vmatprep.subr.mxu0 0.0
    %v2294 = vand.u32 %v38, 4294901760
    %v2295 = vsub.f32 %v38, %v2294
    %v2296 = vand.u32 %v2295, 4294901760
    %2297 = vmatpush1.msra.mxu0 %v2296
    %2298 = vmatprep.subr.mxu0 0.0
    %v2299 = vand.u32 %v39, 4294901760
    %v2300 = vsub.f32 %v39, %v2299
    %v2301 = vand.u32 %v2300, 4294901760
    %2302 = vmatpush1.msra.mxu0 %v2301
    %2303 = vmatprep.subr.mxu0 0.0
    %v2304 = vand.u32 %v40, 4294901760
    %v2305 = vsub.f32 %v40, %v2304
    %v2306 = vand.u32 %v2305, 4294901760
    %2307 = vmatpush1.msra.mxu0 %v2306
    %2308 = vmatprep.subr.mxu0 0.0
    %v2309 = vand.u32 %v41, 4294901760
    %v2310 = vsub.f32 %v41, %v2309
    %v2311 = vand.u32 %v2310, 4294901760
    %2312 = vmatpush1.msra.mxu0 %v2311
    %2313 = vmatprep.subr.mxu0 0.0
    %v2314 = vand.u32 %v42, 4294901760
    %v2315 = vsub.f32 %v42, %v2314
    %v2316 = vand.u32 %v2315, 4294901760
    %2317 = vmatpush1.msra.mxu0 %v2316
    %2318 = vmatprep.subr.mxu0 0.0
    %v2319 = vand.u32 %v43, 4294901760
    %v2320 = vsub.f32 %v43, %v2319
    %v2321 = vand.u32 %v2320, 4294901760
    %2322 = vmatpush1.msra.mxu0 %v2321
    %2323 = vmatprep.subr.mxu0 0.0
    %v2324 = vand.u32 %v44, 4294901760
    %v2325 = vsub.f32 %v44, %v2324
    %v2326 = vand.u32 %v2325, 4294901760
    %2327 = vmatpush1.msra.mxu0 %v2326
    %2328 = vmatprep.subr.mxu0 0.0
    %v2329 = vand.u32 %v45, 4294901760
    %v2330 = vsub.f32 %v45, %v2329
    %v2331 = vand.u32 %v2330, 4294901760
    %2332 = vmatpush1.msra.mxu0 %v2331
    %2333 = vmatprep.subr.mxu0 0.0
    %v2334 = vand.u32 %v46, 4294901760
    %v2335 = vsub.f32 %v46, %v2334
    %v2336 = vand.u32 %v2335, 4294901760
    %2337 = vmatpush1.msra.mxu0 %v2336
    %2338 = vmatprep.subr.mxu0 0.0
    %v2339 = vand.u32 %v47, 4294901760
    %v2340 = vsub.f32 %v47, %v2339
    %v2341 = vand.u32 %v2340, 4294901760
    %2342 = vmatpush1.msra.mxu0 %v2341
    %2343 = vmatprep.subr.mxu0 0.0
    %v2344 = vand.u32 %v48, 4294901760
    %v2345 = vsub.f32 %v48, %v2344
    %v2346 = vand.u32 %v2345, 4294901760
    %2347 = vmatpush1.msra.mxu0 %v2346
    %2348 = vmatprep.subr.mxu0 0.0
    %v2349 = vand.u32 %v49, 4294901760
    %v2350 = vsub.f32 %v49, %v2349
    %v2351 = vand.u32 %v2350, 4294901760
    %2352 = vmatpush1.msra.mxu0 %v2351
    %2353 = vmatprep.subr.mxu0 0.0
    %2354 = vmatpush1.msra.mxu0 0.0
    %2355 = vmatprep.subr.mxu0 0.0
    %2356 = vmatpush1.msra.mxu0 0.0
    %2357 = vmatprep.subr.mxu0 0.0
    %2358 = vmatpush1.msra.mxu0 0.0
    %2359 = vmatprep.subr.mxu0 0.0
    %2360 = vmatpush1.msra.mxu0 0.0
    %2361 = vmatprep.subr.mxu0 0.0
    %2362 = vmatpush1.msra.mxu0 0.0
    %2363 = vmatprep.subr.mxu0 0.0
    %2364 = vmatpush1.msra.mxu0 0.0
    %2365 = vmatprep.subr.mxu0 0.0
    %2366 = vmatpush1.msra.mxu0 0.0
    %2367 = vmatprep.subr.mxu0 0.0
    %2368 = vmatpush1.msra.mxu0 0.0
    %2369 = vmatprep.subr.mxu0 0.0
    %2370 = vmatpush1.msra.mxu0 0.0
    %2371 = vmatprep.subr.mxu0 0.0
    %2372 = vmatpush1.msra.mxu0 0.0
    %2373 = vmatprep.subr.mxu0 0.0
    %2374 = vmatpush1.msra.mxu0 0.0
    %2375 = vmatprep.subr.mxu0 0.0
    %2376 = vmatpush1.msra.mxu0 0.0
    %2377 = vmatprep.subr.mxu0 0.0
    %2378 = vmatpush1.msra.mxu0 0.0
    %2379 = vmatprep.subr.mxu0 0.0
    %2380 = vmatpush1.msra.mxu0 0.0
    %2381 = vmatprep.subr.mxu0 0.0
    %2382 = vmatpush1.msra.mxu0 0.0
    %2383 = vmatprep.subr.mxu0 0.0
    %2384 = vmatpush1.msra.mxu0 0.0
    %2385 = vmatprep.mubr.f32.mxu0 0.0
    %v2386 = vand.u32 %v1741, 4294901760
    %2387 = vmatmul.mubr.f32.gmra.mrb[0].mxu0 %v2386
    %v2388 = vpop.f32.mrb[0].mxu0
    %v2389 = vadd.f32 %v2246, %v2388
    %v2390 = vpop.f32.mrb[0].mxu0
    %2391 = vmatprep.mubr.f32.mxu0 0.0
    %v2392 = vand.u32 %v1742, 4294901760
    %2393 = vmatmul.mubr.f32.gmra.mrb[0].mxu0 %v2392
    %v2394 = vpop.f32.mrb[0].mxu0
    %v2395 = vadd.f32 %v2254, %v2394
    %v2396 = vpop.f32.mrb[0].mxu0
    %2397 = vmatprep.mubr.f32.mxu0 0.0
    %v2398 = vand.u32 %v1743, 4294901760
    %2399 = vmatmul.mubr.f32.gmra.mrb[0].mxu0 %v2398
    %v2400 = vpop.f32.mrb[0].mxu0
    %v2401 = vadd.f32 %v2262, %v2400
    %v2402 = vpop.f32.mrb[0].mxu0
    %2403 = vmatprep.mubr.f32.mxu0 0.0
    %v2404 = vand.u32 %v1744, 4294901760
    %2405 = vmatmul.mubr.f32.gmra.mrb[0].mxu0 %v2404
    %v2406 = vpop.f32.mrb[0].mxu0
    %v2407 = vadd.f32 %v2270, %v2406
    %v2408 = vpop.f32.mrb[0].mxu0
    %2409 = vdwg.mxu0
    %2410 = vmatprep.subr.mxu0 0.0
    %v2411 = vand.u32 %v34, 4294901760
    %2412 = vmatpush1.msra.mxu0 %v2411
    %2413 = vmatprep.subr.mxu0 0.0
    %v2414 = vand.u32 %v35, 4294901760
    %2415 = vmatpush1.msra.mxu0 %v2414
    %2416 = vmatprep.subr.mxu0 0.0
    %v2417 = vand.u32 %v36, 4294901760
    %2418 = vmatpush1.msra.mxu0 %v2417
    %2419 = vmatprep.subr.mxu0 0.0
    %v2420 = vand.u32 %v37, 4294901760
    %2421 = vmatpush1.msra.mxu0 %v2420
    %2422 = vmatprep.subr.mxu0 0.0
    %v2423 = vand.u32 %v38, 4294901760
    %2424 = vmatpush1.msra.mxu0 %v2423
    %2425 = vmatprep.subr.mxu0 0.0
    %v2426 = vand.u32 %v39, 4294901760
    %2427 = vmatpush1.msra.mxu0 %v2426
    %2428 = vmatprep.subr.mxu0 0.0
    %v2429 = vand.u32 %v40, 4294901760
    %2430 = vmatpush1.msra.mxu0 %v2429
    %2431 = vmatprep.subr.mxu0 0.0
    %v2432 = vand.u32 %v41, 4294901760
    %2433 = vmatpush1.msra.mxu0 %v2432
    %2434 = vmatprep.subr.mxu0 0.0
    %v2435 = vand.u32 %v42, 4294901760
    %2436 = vmatpush1.msra.mxu0 %v2435
    %2437 = vmatprep.subr.mxu0 0.0
    %v2438 = vand.u32 %v43, 4294901760
    %2439 = vmatpush1.msra.mxu0 %v2438
    %2440 = vmatprep.subr.mxu0 0.0
    %v2441 = vand.u32 %v44, 4294901760
    %2442 = vmatpush1.msra.mxu0 %v2441
    %2443 = vmatprep.subr.mxu0 0.0
    %v2444 = vand.u32 %v45, 4294901760
    %2445 = vmatpush1.msra.mxu0 %v2444
    %2446 = vmatprep.subr.mxu0 0.0
    %v2447 = vand.u32 %v46, 4294901760
    %2448 = vmatpush1.msra.mxu0 %v2447
    %2449 = vmatprep.subr.mxu0 0.0
    %v2450 = vand.u32 %v47, 4294901760
    %2451 = vmatpush1.msra.mxu0 %v2450
    %2452 = vmatprep.subr.mxu0 0.0
    %v2453 = vand.u32 %v48, 4294901760
    %2454 = vmatpush1.msra.mxu0 %v2453
    %2455 = vmatprep.subr.mxu0 0.0
    %v2456 = vand.u32 %v49, 4294901760
    %2457 = vmatpush1.msra.mxu0 %v2456
    %2458 = vmatprep.subr.mxu0 0.0
    %2459 = vmatpush1.msra.mxu0 0.0
    %2460 = vmatprep.subr.mxu0 0.0
    %2461 = vmatpush1.msra.mxu0 0.0
    %2462 = vmatprep.subr.mxu0 0.0
    %2463 = vmatpush1.msra.mxu0 0.0
    %2464 = vmatprep.subr.mxu0 0.0
    %2465 = vmatpush1.msra.mxu0 0.0
    %2466 = vmatprep.subr.mxu0 0.0
    %2467 = vmatpush1.msra.mxu0 0.0
    %2468 = vmatprep.subr.mxu0 0.0
    %2469 = vmatpush1.msra.mxu0 0.0
    %2470 = vmatprep.subr.mxu0 0.0
    %2471 = vmatpush1.msra.mxu0 0.0
    %2472 = vmatprep.subr.mxu0 0.0
    %2473 = vmatpush1.msra.mxu0 0.0
    %2474 = vmatprep.subr.mxu0 0.0
    %2475 = vmatpush1.msra.mxu0 0.0
    %2476 = vmatprep.subr.mxu0 0.0
    %2477 = vmatpush1.msra.mxu0 0.0
    %2478 = vmatprep.subr.mxu0 0.0
    %2479 = vmatpush1.msra.mxu0 0.0
    %2480 = vmatprep.subr.mxu0 0.0
    %2481 = vmatpush1.msra.mxu0 0.0
    %2482 = vmatprep.subr.mxu0 0.0
    %2483 = vmatpush1.msra.mxu0 0.0
    %2484 = vmatprep.subr.mxu0 0.0
    %2485 = vmatpush1.msra.mxu0 0.0
    %2486 = vmatprep.subr.mxu0 0.0
    %2487 = vmatpush1.msra.mxu0 0.0
    %2488 = vmatprep.subr.mxu0 0.0
    %2489 = vmatpush1.msra.mxu0 0.0
    %2490 = vmatprep.mubr.f32.mxu0 0.0
    %v2491 = vand.u32 %v1741, 4294901760
    %2492 = vmatmul.mubr.f32.gmra.mrb[0].mxu0 %v2491
    %v2493 = vpop.f32.mrb[0].mxu0
    %v2494 = vadd.f32 %v2389, %v2493
    %v2495 = vpop.f32.mrb[0].mxu0
    %2496 = vmatprep.mubr.f32.mxu0 0.0
    %v2497 = vand.u32 %v1742, 4294901760
    %2498 = vmatmul.mubr.f32.gmra.mrb[0].mxu0 %v2497
    %v2499 = vpop.f32.mrb[0].mxu0
    %v2500 = vadd.f32 %v2395, %v2499
    %v2501 = vpop.f32.mrb[0].mxu0
    %2502 = vmatprep.mubr.f32.mxu0 0.0
    %v2503 = vand.u32 %v1743, 4294901760
    %2504 = vmatmul.mubr.f32.gmra.mrb[0].mxu0 %v2503
    %v2505 = vpop.f32.mrb[0].mxu0
    %v2506 = vadd.f32 %v2401, %v2505
    %v2507 = vpop.f32.mrb[0].mxu0
    %2508 = vmatprep.mubr.f32.mxu0 0.0
    %v2509 = vand.u32 %v1744, 4294901760
    %2510 = vmatmul.mubr.f32.gmra.mrb[0].mxu0 %v2509
    %v2511 = vpop.f32.mrb[0].mxu0
    %v2512 = vadd.f32 %v2407, %v2511
    %v2513 = vpop.f32.mrb[0].mxu0
    %2514 = vdwg.mxu0
    %2515 = vmatprep.subr.mxu0 0.0
    %v2516 = vand.u32 %v18, 4294901760
    %2517 = vmatpush1.msra.mxu0 %v2516
    %2518 = vmatprep.subr.mxu0 0.0
    %v2519 = vand.u32 %v19, 4294901760
    %2520 = vmatpush1.msra.mxu0 %v2519
    %2521 = vmatprep.subr.mxu0 0.0
    %v2522 = vand.u32 %v20, 4294901760
    %2523 = vmatpush1.msra.mxu0 %v2522
    %2524 = vmatprep.subr.mxu0 0.0
    %v2525 = vand.u32 %v21, 4294901760
    %2526 = vmatpush1.msra.mxu0 %v2525
    %2527 = vmatprep.subr.mxu0 0.0
    %v2528 = vand.u32 %v22, 4294901760
    %2529 = vmatpush1.msra.mxu0 %v2528
    %2530 = vmatprep.subr.mxu0 0.0
    %v2531 = vand.u32 %v23, 4294901760
    %2532 = vmatpush1.msra.mxu0 %v2531
    %2533 = vmatprep.subr.mxu0 0.0
    %v2534 = vand.u32 %v24, 4294901760
    %2535 = vmatpush1.msra.mxu0 %v2534
    %2536 = vmatprep.subr.mxu0 0.0
    %v2537 = vand.u32 %v25, 4294901760
    %2538 = vmatpush1.msra.mxu0 %v2537
    %2539 = vmatprep.subr.mxu0 0.0
    %v2540 = vand.u32 %v26, 4294901760
    %2541 = vmatpush1.msra.mxu0 %v2540
    %2542 = vmatprep.subr.mxu0 0.0
    %v2543 = vand.u32 %v27, 4294901760
    %2544 = vmatpush1.msra.mxu0 %v2543
    %2545 = vmatprep.subr.mxu0 0.0
    %v2546 = vand.u32 %v28, 4294901760
    %2547 = vmatpush1.msra.mxu0 %v2546
    %2548 = vmatprep.subr.mxu0 0.0
    %v2549 = vand.u32 %v29, 4294901760
    %2550 = vmatpush1.msra.mxu0 %v2549
    %2551 = vmatprep.subr.mxu0 0.0
    %v2552 = vand.u32 %v30, 4294901760
    %2553 = vmatpush1.msra.mxu0 %v2552
    %2554 = vmatprep.subr.mxu0 0.0
    %v2555 = vand.u32 %v31, 4294901760
    %2556 = vmatpush1.msra.mxu0 %v2555
    %2557 = vmatprep.subr.mxu0 0.0
    %v2558 = vand.u32 %v32, 4294901760
    %2559 = vmatpush1.msra.mxu0 %v2558
    %2560 = vmatprep.subr.mxu0 0.0
    %v2561 = vand.u32 %v33, 4294901760
    %2562 = vmatpush1.msra.mxu0 %v2561
    %2563 = vmatprep.subr.mxu0 0.0
    %2564 = vmatpush1.msra.mxu0 0.0
    %2565 = vmatprep.subr.mxu0 0.0
    %2566 = vmatpush1.msra.mxu0 0.0
    %2567 = vmatprep.subr.mxu0 0.0
    %2568 = vmatpush1.msra.mxu0 0.0
    %2569 = vmatprep.subr.mxu0 0.0
    %2570 = vmatpush1.msra.mxu0 0.0
    %2571 = vmatprep.subr.mxu0 0.0
    %2572 = vmatpush1.msra.mxu0 0.0
    %2573 = vmatprep.subr.mxu0 0.0
    %2574 = vmatpush1.msra.mxu0 0.0
    %2575 = vmatprep.subr.mxu0 0.0
    %2576 = vmatpush1.msra.mxu0 0.0
    %2577 = vmatprep.subr.mxu0 0.0
    %2578 = vmatpush1.msra.mxu0 0.0
    %2579 = vmatprep.subr.mxu0 0.0
    %2580 = vmatpush1.msra.mxu0 0.0
    %2581 = vmatprep.subr.mxu0 0.0
    %2582 = vmatpush1.msra.mxu0 0.0
    %2583 = vmatprep.subr.mxu0 0.0
    %2584 = vmatpush1.msra.mxu0 0.0
    %2585 = vmatprep.subr.mxu0 0.0
    %2586 = vmatpush1.msra.mxu0 0.0
    %2587 = vmatprep.subr.mxu0 0.0
    %2588 = vmatpush1.msra.mxu0 0.0
    %2589 = vmatprep.subr.mxu0 0.0
    %2590 = vmatpush1.msra.mxu0 0.0
    %2591 = vmatprep.subr.mxu0 0.0
    %2592 = vmatpush1.msra.mxu0 0.0
    %2593 = vmatprep.subr.mxu0 0.0
    %2594 = vmatpush1.msra.mxu0 0.0
    %2595 = vmatprep.mubr.f32.mxu0 0.0
    %v2596 = vand.u32 %v1713, 4294901760
    %v2597 = vsub.f32 %v1713, %v2596
    %v2598 = vand.u32 %v2597, 4294901760
    %v2599 = vsub.f32 %v2597, %v2598
    %v2600 = vand.u32 %v2599, 4294901760
    %2601 = vmatmul.mubr.f32.gmra.mrb[0].mxu0 %v2600
    %v2602 = vpop.f32.mrb[0].mxu0
    %v2603 = vadd.f32 %v2494, %v2602
    %v2604 = vpop.f32.mrb[0].mxu0
    %2605 = vmatprep.mubr.f32.mxu0 0.0
    %v2606 = vand.u32 %v1714, 4294901760
    %v2607 = vsub.f32 %v1714, %v2606
    %v2608 = vand.u32 %v2607, 4294901760
    %v2609 = vsub.f32 %v2607, %v2608
    %v2610 = vand.u32 %v2609, 4294901760
    %2611 = vmatmul.mubr.f32.gmra.mrb[0].mxu0 %v2610
    %v2612 = vpop.f32.mrb[0].mxu0
    %v2613 = vadd.f32 %v2500, %v2612
    %v2614 = vpop.f32.mrb[0].mxu0
    %2615 = vmatprep.mubr.f32.mxu0 0.0
    %v2616 = vand.u32 %v1715, 4294901760
    %v2617 = vsub.f32 %v1715, %v2616
    %v2618 = vand.u32 %v2617, 4294901760
    %v2619 = vsub.f32 %v2617, %v2618
    %v2620 = vand.u32 %v2619, 4294901760
    %2621 = vmatmul.mubr.f32.gmra.mrb[0].mxu0 %v2620
    %v2622 = vpop.f32.mrb[0].mxu0
    %v2623 = vadd.f32 %v2506, %v2622
    %v2624 = vpop.f32.mrb[0].mxu0
    %2625 = vmatprep.mubr.f32.mxu0 0.0
    %v2626 = vand.u32 %v1716, 4294901760
    %v2627 = vsub.f32 %v1716, %v2626
    %v2628 = vand.u32 %v2627, 4294901760
    %v2629 = vsub.f32 %v2627, %v2628
    %v2630 = vand.u32 %v2629, 4294901760
    %2631 = vmatmul.mubr.f32.gmra.mrb[0].mxu0 %v2630
    %v2632 = vpop.f32.mrb[0].mxu0
    %v2633 = vadd.f32 %v2512, %v2632
    %v2634 = vpop.f32.mrb[0].mxu0
    %2635 = vdwg.mxu0
    %2636 = vmatprep.subr.mxu0 0.0
    %v2637 = vand.u32 %v18, 4294901760
    %v2638 = vsub.f32 %v18, %v2637
    %v2639 = vand.u32 %v2638, 4294901760
    %v2640 = vsub.f32 %v2638, %v2639
    %v2641 = vand.u32 %v2640, 4294901760
    %2642 = vmatpush1.msra.mxu0 %v2641
    %2643 = vmatprep.subr.mxu0 0.0
    %v2644 = vand.u32 %v19, 4294901760
    %v2645 = vsub.f32 %v19, %v2644
    %v2646 = vand.u32 %v2645, 4294901760
    %v2647 = vsub.f32 %v2645, %v2646
    %v2648 = vand.u32 %v2647, 4294901760
    %2649 = vmatpush1.msra.mxu0 %v2648
    %2650 = vmatprep.subr.mxu0 0.0
    %v2651 = vand.u32 %v20, 4294901760
    %v2652 = vsub.f32 %v20, %v2651
    %v2653 = vand.u32 %v2652, 4294901760
    %v2654 = vsub.f32 %v2652, %v2653
    %v2655 = vand.u32 %v2654, 4294901760
    %2656 = vmatpush1.msra.mxu0 %v2655
    %2657 = vmatprep.subr.mxu0 0.0
    %v2658 = vand.u32 %v21, 4294901760
    %v2659 = vsub.f32 %v21, %v2658
    %v2660 = vand.u32 %v2659, 4294901760
    %v2661 = vsub.f32 %v2659, %v2660
    %v2662 = vand.u32 %v2661, 4294901760
    %2663 = vmatpush1.msra.mxu0 %v2662
    %2664 = vmatprep.subr.mxu0 0.0
    %v2665 = vand.u32 %v22, 4294901760
    %v2666 = vsub.f32 %v22, %v2665
    %v2667 = vand.u32 %v2666, 4294901760
    %v2668 = vsub.f32 %v2666, %v2667
    %v2669 = vand.u32 %v2668, 4294901760
    %2670 = vmatpush1.msra.mxu0 %v2669
    %2671 = vmatprep.subr.mxu0 0.0
    %v2672 = vand.u32 %v23, 4294901760
    %v2673 = vsub.f32 %v23, %v2672
    %v2674 = vand.u32 %v2673, 4294901760
    %v2675 = vsub.f32 %v2673, %v2674
    %v2676 = vand.u32 %v2675, 4294901760
    %2677 = vmatpush1.msra.mxu0 %v2676
    %2678 = vmatprep.subr.mxu0 0.0
    %v2679 = vand.u32 %v24, 4294901760
    %v2680 = vsub.f32 %v24, %v2679
    %v2681 = vand.u32 %v2680, 4294901760
    %v2682 = vsub.f32 %v2680, %v2681
    %v2683 = vand.u32 %v2682, 4294901760
    %2684 = vmatpush1.msra.mxu0 %v2683
    %2685 = vmatprep.subr.mxu0 0.0
    %v2686 = vand.u32 %v25, 4294901760
    %v2687 = vsub.f32 %v25, %v2686
    %v2688 = vand.u32 %v2687, 4294901760
    %v2689 = vsub.f32 %v2687, %v2688
    %v2690 = vand.u32 %v2689, 4294901760
    %2691 = vmatpush1.msra.mxu0 %v2690
    %2692 = vmatprep.subr.mxu0 0.0
    %v2693 = vand.u32 %v26, 4294901760
    %v2694 = vsub.f32 %v26, %v2693
    %v2695 = vand.u32 %v2694, 4294901760
    %v2696 = vsub.f32 %v2694, %v2695
    %v2697 = vand.u32 %v2696, 4294901760
    %2698 = vmatpush1.msra.mxu0 %v2697
    %2699 = vmatprep.subr.mxu0 0.0
    %v2700 = vand.u32 %v27, 4294901760
    %v2701 = vsub.f32 %v27, %v2700
    %v2702 = vand.u32 %v2701, 4294901760
    %v2703 = vsub.f32 %v2701, %v2702
    %v2704 = vand.u32 %v2703, 4294901760
    %2705 = vmatpush1.msra.mxu0 %v2704
    %2706 = vmatprep.subr.mxu0 0.0
    %v2707 = vand.u32 %v28, 4294901760
    %v2708 = vsub.f32 %v28, %v2707
    %v2709 = vand.u32 %v2708, 4294901760
    %v2710 = vsub.f32 %v2708, %v2709
    %v2711 = vand.u32 %v2710, 4294901760
    %2712 = vmatpush1.msra.mxu0 %v2711
    %2713 = vmatprep.subr.mxu0 0.0
    %v2714 = vand.u32 %v29, 4294901760
    %v2715 = vsub.f32 %v29, %v2714
    %v2716 = vand.u32 %v2715, 4294901760
    %v2717 = vsub.f32 %v2715, %v2716
    %v2718 = vand.u32 %v2717, 4294901760
    %2719 = vmatpush1.msra.mxu0 %v2718
    %2720 = vmatprep.subr.mxu0 0.0
    %v2721 = vand.u32 %v30, 4294901760
    %v2722 = vsub.f32 %v30, %v2721
    %v2723 = vand.u32 %v2722, 4294901760
    %v2724 = vsub.f32 %v2722, %v2723
    %v2725 = vand.u32 %v2724, 4294901760
    %2726 = vmatpush1.msra.mxu0 %v2725
    %2727 = vmatprep.subr.mxu0 0.0
    %v2728 = vand.u32 %v31, 4294901760
    %v2729 = vsub.f32 %v31, %v2728
    %v2730 = vand.u32 %v2729, 4294901760
    %v2731 = vsub.f32 %v2729, %v2730
    %v2732 = vand.u32 %v2731, 4294901760
    %2733 = vmatpush1.msra.mxu0 %v2732
    %2734 = vmatprep.subr.mxu0 0.0
    %v2735 = vand.u32 %v32, 4294901760
    %v2736 = vsub.f32 %v32, %v2735
    %v2737 = vand.u32 %v2736, 4294901760
    %v2738 = vsub.f32 %v2736, %v2737
    %v2739 = vand.u32 %v2738, 4294901760
    %2740 = vmatpush1.msra.mxu0 %v2739
    %2741 = vmatprep.subr.mxu0 0.0
    %v2742 = vand.u32 %v33, 4294901760
    %v2743 = vsub.f32 %v33, %v2742
    %v2744 = vand.u32 %v2743, 4294901760
    %v2745 = vsub.f32 %v2743, %v2744
    %v2746 = vand.u32 %v2745, 4294901760
    %2747 = vmatpush1.msra.mxu0 %v2746
    %2748 = vmatprep.subr.mxu0 0.0
    %2749 = vmatpush1.msra.mxu0 0.0
    %2750 = vmatprep.subr.mxu0 0.0
    %2751 = vmatpush1.msra.mxu0 0.0
    %2752 = vmatprep.subr.mxu0 0.0
    %2753 = vmatpush1.msra.mxu0 0.0
    %2754 = vmatprep.subr.mxu0 0.0
    %2755 = vmatpush1.msra.mxu0 0.0
    %2756 = vmatprep.subr.mxu0 0.0
    %2757 = vmatpush1.msra.mxu0 0.0
    %2758 = vmatprep.subr.mxu0 0.0
    %2759 = vmatpush1.msra.mxu0 0.0
    %2760 = vmatprep.subr.mxu0 0.0
    %2761 = vmatpush1.msra.mxu0 0.0
    %2762 = vmatprep.subr.mxu0 0.0
    %2763 = vmatpush1.msra.mxu0 0.0
    %2764 = vmatprep.subr.mxu0 0.0
    %2765 = vmatpush1.msra.mxu0 0.0
    %2766 = vmatprep.subr.mxu0 0.0
    %2767 = vmatpush1.msra.mxu0 0.0
    %2768 = vmatprep.subr.mxu0 0.0
    %2769 = vmatpush1.msra.mxu0 0.0
    %2770 = vmatprep.subr.mxu0 0.0
    %2771 = vmatpush1.msra.mxu0 0.0
    %2772 = vmatprep.subr.mxu0 0.0
    %2773 = vmatpush1.msra.mxu0 0.0
    %2774 = vmatprep.subr.mxu0 0.0
    %2775 = vmatpush1.msra.mxu0 0.0
    %2776 = vmatprep.subr.mxu0 0.0
    %2777 = vmatpush1.msra.mxu0 0.0
    %2778 = vmatprep.subr.mxu0 0.0
    %2779 = vmatpush1.msra.mxu0 0.0
    %2780 = vmatprep.mubr.f32.mxu0 0.0
    %v2781 = vand.u32 %v1713, 4294901760
    %2782 = vmatmul.mubr.f32.gmra.mrb[0].mxu0 %v2781
    %v2783 = vpop.f32.mrb[0].mxu0
    %v2784 = vadd.f32 %v2603, %v2783
    %v2785 = vpop.f32.mrb[0].mxu0
    %2786 = vmatprep.mubr.f32.mxu0 0.0
    %v2787 = vand.u32 %v1714, 4294901760
    %2788 = vmatmul.mubr.f32.gmra.mrb[0].mxu0 %v2787
    %v2789 = vpop.f32.mrb[0].mxu0
    %v2790 = vadd.f32 %v2613, %v2789
    %v2791 = vpop.f32.mrb[0].mxu0
    %2792 = vmatprep.mubr.f32.mxu0 0.0
    %v2793 = vand.u32 %v1715, 4294901760
    %2794 = vmatmul.mubr.f32.gmra.mrb[0].mxu0 %v2793
    %v2795 = vpop.f32.mrb[0].mxu0
    %v2796 = vadd.f32 %v2623, %v2795
    %v2797 = vpop.f32.mrb[0].mxu0
    %2798 = vmatprep.mubr.f32.mxu0 0.0
    %v2799 = vand.u32 %v1716, 4294901760
    %2800 = vmatmul.mubr.f32.gmra.mrb[0].mxu0 %v2799
    %v2801 = vpop.f32.mrb[0].mxu0
    %v2802 = vadd.f32 %v2633, %v2801
    %v2803 = vpop.f32.mrb[0].mxu0
    %2804 = vdwg.mxu0
    %2805 = vmatprep.subr.mxu0 0.0
    %v2806 = vand.u32 %v18, 4294901760
    %v2807 = vsub.f32 %v18, %v2806
    %2808 = vmatpush1.msra.mxu0 %v2807
    %2809 = vmatprep.subr.mxu0 0.0
    %v2810 = vand.u32 %v19, 4294901760
    %v2811 = vsub.f32 %v19, %v2810
    %2812 = vmatpush1.msra.mxu0 %v2811
    %2813 = vmatprep.subr.mxu0 0.0
    %v2814 = vand.u32 %v20, 4294901760
    %v2815 = vsub.f32 %v20, %v2814
    %2816 = vmatpush1.msra.mxu0 %v2815
    %2817 = vmatprep.subr.mxu0 0.0
    %v2818 = vand.u32 %v21, 4294901760
    %v2819 = vsub.f32 %v21, %v2818
    %2820 = vmatpush1.msra.mxu0 %v2819
    %2821 = vmatprep.subr.mxu0 0.0
    %v2822 = vand.u32 %v22, 4294901760
    %v2823 = vsub.f32 %v22, %v2822
    %2824 = vmatpush1.msra.mxu0 %v2823
    %2825 = vmatprep.subr.mxu0 0.0
    %v2826 = vand.u32 %v23, 4294901760
    %v2827 = vsub.f32 %v23, %v2826
    %2828 = vmatpush1.msra.mxu0 %v2827
    %2829 = vmatprep.subr.mxu0 0.0
    %v2830 = vand.u32 %v24, 4294901760
    %v2831 = vsub.f32 %v24, %v2830
    %2832 = vmatpush1.msra.mxu0 %v2831
    %2833 = vmatprep.subr.mxu0 0.0
    %v2834 = vand.u32 %v25, 4294901760
    %v2835 = vsub.f32 %v25, %v2834
    %2836 = vmatpush1.msra.mxu0 %v2835
    %2837 = vmatprep.subr.mxu0 0.0
    %v2838 = vand.u32 %v26, 4294901760
    %v2839 = vsub.f32 %v26, %v2838
    %2840 = vmatpush1.msra.mxu0 %v2839
    %2841 = vmatprep.subr.mxu0 0.0
    %v2842 = vand.u32 %v27, 4294901760
    %v2843 = vsub.f32 %v27, %v2842
    %2844 = vmatpush1.msra.mxu0 %v2843
    %2845 = vmatprep.subr.mxu0 0.0
    %v2846 = vand.u32 %v28, 4294901760
    %v2847 = vsub.f32 %v28, %v2846
    %2848 = vmatpush1.msra.mxu0 %v2847
    %2849 = vmatprep.subr.mxu0 0.0
    %v2850 = vand.u32 %v29, 4294901760
    %v2851 = vsub.f32 %v29, %v2850
    %2852 = vmatpush1.msra.mxu0 %v2851
    %2853 = vmatprep.subr.mxu0 0.0
    %v2854 = vand.u32 %v30, 4294901760
    %v2855 = vsub.f32 %v30, %v2854
    %2856 = vmatpush1.msra.mxu0 %v2855
    %2857 = vmatprep.subr.mxu0 0.0
    %v2858 = vand.u32 %v31, 4294901760
    %v2859 = vsub.f32 %v31, %v2858
    %2860 = vmatpush1.msra.mxu0 %v2859
    %2861 = vmatprep.subr.mxu0 0.0
    %v2862 = vand.u32 %v32, 4294901760
    %v2863 = vsub.f32 %v32, %v2862
    %2864 = vmatpush1.msra.mxu0 %v2863
    %2865 = vmatprep.subr.mxu0 0.0
    %v2866 = vand.u32 %v33, 4294901760
    %v2867 = vsub.f32 %v33, %v2866
    %2868 = vmatpush1.msra.mxu0 %v2867
    %2869 = vmatprep.subr.mxu0 0.0
    %2870 = vmatpush1.msra.mxu0 0.0
    %2871 = vmatprep.subr.mxu0 0.0
    %2872 = vmatpush1.msra.mxu0 0.0
    %2873 = vmatprep.subr.mxu0 0.0
    %2874 = vmatpush1.msra.mxu0 0.0
    %2875 = vmatprep.subr.mxu0 0.0
    %2876 = vmatpush1.msra.mxu0 0.0
    %2877 = vmatprep.subr.mxu0 0.0
    %2878 = vmatpush1.msra.mxu0 0.0
    %2879 = vmatprep.subr.mxu0 0.0
    %2880 = vmatpush1.msra.mxu0 0.0
    %2881 = vmatprep.subr.mxu0 0.0
    %2882 = vmatpush1.msra.mxu0 0.0
    %2883 = vmatprep.subr.mxu0 0.0
    %2884 = vmatpush1.msra.mxu0 0.0
    %2885 = vmatprep.subr.mxu0 0.0
    %2886 = vmatpush1.msra.mxu0 0.0
    %2887 = vmatprep.subr.mxu0 0.0
    %2888 = vmatpush1.msra.mxu0 0.0
    %2889 = vmatprep.subr.mxu0 0.0
    %2890 = vmatpush1.msra.mxu0 0.0
    %2891 = vmatprep.subr.mxu0 0.0
    %2892 = vmatpush1.msra.mxu0 0.0
    %2893 = vmatprep.subr.mxu0 0.0
    %2894 = vmatpush1.msra.mxu0 0.0
    %2895 = vmatprep.subr.mxu0 0.0
    %2896 = vmatpush1.msra.mxu0 0.0
    %2897 = vmatprep.subr.mxu0 0.0
    %2898 = vmatpush1.msra.mxu0 0.0
    %2899 = vmatprep.subr.mxu0 0.0
    %2900 = vmatpush1.msra.mxu0 0.0
    %2901 = vmatprep.mubr.f32.mxu0 0.0
    %v2902 = vand.u32 %v1713, 4294901760
    %v2903 = vsub.f32 %v1713, %v2902
    %2904 = vmatmul.mubr.f32.gmra.mrb[0].mxu0 %v2903
    %v2905 = vpop.f32.mrb[0].mxu0
    %v2906 = vadd.f32 %v2784, %v2905
    %v2907 = vpop.f32.mrb[0].mxu0
    %2908 = vmatprep.mubr.f32.mxu0 0.0
    %v2909 = vand.u32 %v1714, 4294901760
    %v2910 = vsub.f32 %v1714, %v2909
    %2911 = vmatmul.mubr.f32.gmra.mrb[0].mxu0 %v2910
    %v2912 = vpop.f32.mrb[0].mxu0
    %v2913 = vadd.f32 %v2790, %v2912
    %v2914 = vpop.f32.mrb[0].mxu0
    %2915 = vmatprep.mubr.f32.mxu0 0.0
    %v2916 = vand.u32 %v1715, 4294901760
    %v2917 = vsub.f32 %v1715, %v2916
    %2918 = vmatmul.mubr.f32.gmra.mrb[0].mxu0 %v2917
    %v2919 = vpop.f32.mrb[0].mxu0
    %v2920 = vadd.f32 %v2796, %v2919
    %v2921 = vpop.f32.mrb[0].mxu0
    %2922 = vmatprep.mubr.f32.mxu0 0.0
    %v2923 = vand.u32 %v1716, 4294901760
    %v2924 = vsub.f32 %v1716, %v2923
    %2925 = vmatmul.mubr.f32.gmra.mrb[0].mxu0 %v2924
    %v2926 = vpop.f32.mrb[0].mxu0
    %v2927 = vadd.f32 %v2802, %v2926
    %v2928 = vpop.f32.mrb[0].mxu0
    %2929 = vdwg.mxu0
    %2930 = vmatprep.subr.mxu0 0.0
    %v2931 = vand.u32 %v18, 4294901760
    %2932 = vmatpush1.msra.mxu0 %v2931
    %2933 = vmatprep.subr.mxu0 0.0
    %v2934 = vand.u32 %v19, 4294901760
    %2935 = vmatpush1.msra.mxu0 %v2934
    %2936 = vmatprep.subr.mxu0 0.0
    %v2937 = vand.u32 %v20, 4294901760
    %2938 = vmatpush1.msra.mxu0 %v2937
    %2939 = vmatprep.subr.mxu0 0.0
    %v2940 = vand.u32 %v21, 4294901760
    %2941 = vmatpush1.msra.mxu0 %v2940
    %2942 = vmatprep.subr.mxu0 0.0
    %v2943 = vand.u32 %v22, 4294901760
    %2944 = vmatpush1.msra.mxu0 %v2943
    %2945 = vmatprep.subr.mxu0 0.0
    %v2946 = vand.u32 %v23, 4294901760
    %2947 = vmatpush1.msra.mxu0 %v2946
    %2948 = vmatprep.subr.mxu0 0.0
    %v2949 = vand.u32 %v24, 4294901760
    %2950 = vmatpush1.msra.mxu0 %v2949
    %2951 = vmatprep.subr.mxu0 0.0
    %v2952 = vand.u32 %v25, 4294901760
    %2953 = vmatpush1.msra.mxu0 %v2952
    %2954 = vmatprep.subr.mxu0 0.0
    %v2955 = vand.u32 %v26, 4294901760
    %2956 = vmatpush1.msra.mxu0 %v2955
    %2957 = vmatprep.subr.mxu0 0.0
    %v2958 = vand.u32 %v27, 4294901760
    %2959 = vmatpush1.msra.mxu0 %v2958
    %2960 = vmatprep.subr.mxu0 0.0
    %v2961 = vand.u32 %v28, 4294901760
    %2962 = vmatpush1.msra.mxu0 %v2961
    %2963 = vmatprep.subr.mxu0 0.0
    %v2964 = vand.u32 %v29, 4294901760
    %2965 = vmatpush1.msra.mxu0 %v2964
    %2966 = vmatprep.subr.mxu0 0.0
    %v2967 = vand.u32 %v30, 4294901760
    %2968 = vmatpush1.msra.mxu0 %v2967
    %2969 = vmatprep.subr.mxu0 0.0
    %v2970 = vand.u32 %v31, 4294901760
    %2971 = vmatpush1.msra.mxu0 %v2970
    %2972 = vmatprep.subr.mxu0 0.0
    %v2973 = vand.u32 %v32, 4294901760
    %2974 = vmatpush1.msra.mxu0 %v2973
    %2975 = vmatprep.subr.mxu0 0.0
    %v2976 = vand.u32 %v33, 4294901760
    %2977 = vmatpush1.msra.mxu0 %v2976
    %2978 = vmatprep.subr.mxu0 0.0
    %2979 = vmatpush1.msra.mxu0 0.0
    %2980 = vmatprep.subr.mxu0 0.0
    %2981 = vmatpush1.msra.mxu0 0.0
    %2982 = vmatprep.subr.mxu0 0.0
    %2983 = vmatpush1.msra.mxu0 0.0
    %2984 = vmatprep.subr.mxu0 0.0
    %2985 = vmatpush1.msra.mxu0 0.0
    %2986 = vmatprep.subr.mxu0 0.0
    %2987 = vmatpush1.msra.mxu0 0.0
    %2988 = vmatprep.subr.mxu0 0.0
    %2989 = vmatpush1.msra.mxu0 0.0
    %2990 = vmatprep.subr.mxu0 0.0
    %2991 = vmatpush1.msra.mxu0 0.0
    %2992 = vmatprep.subr.mxu0 0.0
    %2993 = vmatpush1.msra.mxu0 0.0
    %2994 = vmatprep.subr.mxu0 0.0
    %2995 = vmatpush1.msra.mxu0 0.0
    %2996 = vmatprep.subr.mxu0 0.0
    %2997 = vmatpush1.msra.mxu0 0.0
    %2998 = vmatprep.subr.mxu0 0.0
    %2999 = vmatpush1.msra.mxu0 0.0
    %3000 = vmatprep.subr.mxu0 0.0
    %3001 = vmatpush1.msra.mxu0 0.0
    %3002 = vmatprep.subr.mxu0 0.0
    %3003 = vmatpush1.msra.mxu0 0.0
    %3004 = vmatprep.subr.mxu0 0.0
    %3005 = vmatpush1.msra.mxu0 0.0
    %3006 = vmatprep.subr.mxu0 0.0
    %3007 = vmatpush1.msra.mxu0 0.0
    %3008 = vmatprep.subr.mxu0 0.0
    %3009 = vmatpush1.msra.mxu0 0.0
    %3010 = vmatprep.mubr.f32.mxu0 0.0
    %v3011 = vand.u32 %v1713, 4294901760
    %v3012 = vsub.f32 %v1713, %v3011
    %v3013 = vand.u32 %v3012, 4294901760
    %3014 = vmatmul.mubr.f32.gmra.mrb[0].mxu0 %v3013
    %v3015 = vpop.f32.mrb[0].mxu0
    %v3016 = vadd.f32 %v2906, %v3015
    %v3017 = vpop.f32.mrb[0].mxu0
    %3018 = vmatprep.mubr.f32.mxu0 0.0
    %v3019 = vand.u32 %v1714, 4294901760
    %v3020 = vsub.f32 %v1714, %v3019
    %v3021 = vand.u32 %v3020, 4294901760
    %3022 = vmatmul.mubr.f32.gmra.mrb[0].mxu0 %v3021
    %v3023 = vpop.f32.mrb[0].mxu0
    %v3024 = vadd.f32 %v2913, %v3023
    %v3025 = vpop.f32.mrb[0].mxu0
    %3026 = vmatprep.mubr.f32.mxu0 0.0
    %v3027 = vand.u32 %v1715, 4294901760
    %v3028 = vsub.f32 %v1715, %v3027
    %v3029 = vand.u32 %v3028, 4294901760
    %3030 = vmatmul.mubr.f32.gmra.mrb[0].mxu0 %v3029
    %v3031 = vpop.f32.mrb[0].mxu0
    %v3032 = vadd.f32 %v2920, %v3031
    %v3033 = vpop.f32.mrb[0].mxu0
    %3034 = vmatprep.mubr.f32.mxu0 0.0
    %v3035 = vand.u32 %v1716, 4294901760
    %v3036 = vsub.f32 %v1716, %v3035
    %v3037 = vand.u32 %v3036, 4294901760
    %3038 = vmatmul.mubr.f32.gmra.mrb[0].mxu0 %v3037
    %v3039 = vpop.f32.mrb[0].mxu0
    %v3040 = vadd.f32 %v2927, %v3039
    %v3041 = vpop.f32.mrb[0].mxu0
    %3042 = vdwg.mxu0
    %3043 = vmatprep.subr.mxu0 0.0
    %v3044 = vand.u32 %v18, 4294901760
    %v3045 = vsub.f32 %v18, %v3044
    %v3046 = vand.u32 %v3045, 4294901760
    %3047 = vmatpush1.msra.mxu0 %v3046
    %3048 = vmatprep.subr.mxu0 0.0
    %v3049 = vand.u32 %v19, 4294901760
    %v3050 = vsub.f32 %v19, %v3049
    %v3051 = vand.u32 %v3050, 4294901760
    %3052 = vmatpush1.msra.mxu0 %v3051
    %3053 = vmatprep.subr.mxu0 0.0
    %v3054 = vand.u32 %v20, 4294901760
    %v3055 = vsub.f32 %v20, %v3054
    %v3056 = vand.u32 %v3055, 4294901760
    %3057 = vmatpush1.msra.mxu0 %v3056
    %3058 = vmatprep.subr.mxu0 0.0
    %v3059 = vand.u32 %v21, 4294901760
    %v3060 = vsub.f32 %v21, %v3059
    %v3061 = vand.u32 %v3060, 4294901760
    %3062 = vmatpush1.msra.mxu0 %v3061
    %3063 = vmatprep.subr.mxu0 0.0
    %v3064 = vand.u32 %v22, 4294901760
    %v3065 = vsub.f32 %v22, %v3064
    %v3066 = vand.u32 %v3065, 4294901760
    %3067 = vmatpush1.msra.mxu0 %v3066
    %3068 = vmatprep.subr.mxu0 0.0
    %v3069 = vand.u32 %v23, 4294901760
    %v3070 = vsub.f32 %v23, %v3069
    %v3071 = vand.u32 %v3070, 4294901760
    %3072 = vmatpush1.msra.mxu0 %v3071
    %3073 = vmatprep.subr.mxu0 0.0
    %v3074 = vand.u32 %v24, 4294901760
    %v3075 = vsub.f32 %v24, %v3074
    %v3076 = vand.u32 %v3075, 4294901760
    %3077 = vmatpush1.msra.mxu0 %v3076
    %3078 = vmatprep.subr.mxu0 0.0
    %v3079 = vand.u32 %v25, 4294901760
    %v3080 = vsub.f32 %v25, %v3079
    %v3081 = vand.u32 %v3080, 4294901760
    %3082 = vmatpush1.msra.mxu0 %v3081
    %3083 = vmatprep.subr.mxu0 0.0
    %v3084 = vand.u32 %v26, 4294901760
    %v3085 = vsub.f32 %v26, %v3084
    %v3086 = vand.u32 %v3085, 4294901760
    %3087 = vmatpush1.msra.mxu0 %v3086
    %3088 = vmatprep.subr.mxu0 0.0
    %v3089 = vand.u32 %v27, 4294901760
    %v3090 = vsub.f32 %v27, %v3089
    %v3091 = vand.u32 %v3090, 4294901760
    %3092 = vmatpush1.msra.mxu0 %v3091
    %3093 = vmatprep.subr.mxu0 0.0
    %v3094 = vand.u32 %v28, 4294901760
    %v3095 = vsub.f32 %v28, %v3094
    %v3096 = vand.u32 %v3095, 4294901760
    %3097 = vmatpush1.msra.mxu0 %v3096
    %3098 = vmatprep.subr.mxu0 0.0
    %v3099 = vand.u32 %v29, 4294901760
    %v3100 = vsub.f32 %v29, %v3099
    %v3101 = vand.u32 %v3100, 4294901760
    %3102 = vmatpush1.msra.mxu0 %v3101
    %3103 = vmatprep.subr.mxu0 0.0
    %v3104 = vand.u32 %v30, 4294901760
    %v3105 = vsub.f32 %v30, %v3104
    %v3106 = vand.u32 %v3105, 4294901760
    %3107 = vmatpush1.msra.mxu0 %v3106
    %3108 = vmatprep.subr.mxu0 0.0
    %v3109 = vand.u32 %v31, 4294901760
    %v3110 = vsub.f32 %v31, %v3109
    %v3111 = vand.u32 %v3110, 4294901760
    %3112 = vmatpush1.msra.mxu0 %v3111
    %3113 = vmatprep.subr.mxu0 0.0
    %v3114 = vand.u32 %v32, 4294901760
    %v3115 = vsub.f32 %v32, %v3114
    %v3116 = vand.u32 %v3115, 4294901760
    %3117 = vmatpush1.msra.mxu0 %v3116
    %3118 = vmatprep.subr.mxu0 0.0
    %v3119 = vand.u32 %v33, 4294901760
    %v3120 = vsub.f32 %v33, %v3119
    %v3121 = vand.u32 %v3120, 4294901760
    %3122 = vmatpush1.msra.mxu0 %v3121
    %3123 = vmatprep.subr.mxu0 0.0
    %3124 = vmatpush1.msra.mxu0 0.0
    %3125 = vmatprep.subr.mxu0 0.0
    %3126 = vmatpush1.msra.mxu0 0.0
    %3127 = vmatprep.subr.mxu0 0.0
    %3128 = vmatpush1.msra.mxu0 0.0
    %3129 = vmatprep.subr.mxu0 0.0
    %3130 = vmatpush1.msra.mxu0 0.0
    %3131 = vmatprep.subr.mxu0 0.0
    %3132 = vmatpush1.msra.mxu0 0.0
    %3133 = vmatprep.subr.mxu0 0.0
    %3134 = vmatpush1.msra.mxu0 0.0
    %3135 = vmatprep.subr.mxu0 0.0
    %3136 = vmatpush1.msra.mxu0 0.0
    %3137 = vmatprep.subr.mxu0 0.0
    %3138 = vmatpush1.msra.mxu0 0.0
    %3139 = vmatprep.subr.mxu0 0.0
    %3140 = vmatpush1.msra.mxu0 0.0
    %3141 = vmatprep.subr.mxu0 0.0
    %3142 = vmatpush1.msra.mxu0 0.0
    %3143 = vmatprep.subr.mxu0 0.0
    %3144 = vmatpush1.msra.mxu0 0.0
    %3145 = vmatprep.subr.mxu0 0.0
    %3146 = vmatpush1.msra.mxu0 0.0
    %3147 = vmatprep.subr.mxu0 0.0
    %3148 = vmatpush1.msra.mxu0 0.0
    %3149 = vmatprep.subr.mxu0 0.0
    %3150 = vmatpush1.msra.mxu0 0.0
    %3151 = vmatprep.subr.mxu0 0.0
    %3152 = vmatpush1.msra.mxu0 0.0
    %3153 = vmatprep.subr.mxu0 0.0
    %3154 = vmatpush1.msra.mxu0 0.0
    %3155 = vmatprep.mubr.f32.mxu0 0.0
    %v3156 = vand.u32 %v1713, 4294901760
    %3157 = vmatmul.mubr.f32.gmra.mrb[0].mxu0 %v3156
    %v3158 = vpop.f32.mrb[0].mxu0
    %v3159 = vadd.f32 %v3016, %v3158
    %v3160 = vpop.f32.mrb[0].mxu0
    %3161 = vmatprep.mubr.f32.mxu0 0.0
    %v3162 = vand.u32 %v1714, 4294901760
    %3163 = vmatmul.mubr.f32.gmra.mrb[0].mxu0 %v3162
    %v3164 = vpop.f32.mrb[0].mxu0
    %v3165 = vadd.f32 %v3024, %v3164
    %v3166 = vpop.f32.mrb[0].mxu0
    %3167 = vmatprep.mubr.f32.mxu0 0.0
    %v3168 = vand.u32 %v1715, 4294901760
    %3169 = vmatmul.mubr.f32.gmra.mrb[0].mxu0 %v3168
    %v3170 = vpop.f32.mrb[0].mxu0
    %v3171 = vadd.f32 %v3032, %v3170
    %v3172 = vpop.f32.mrb[0].mxu0
    %3173 = vmatprep.mubr.f32.mxu0 0.0
    %v3174 = vand.u32 %v1716, 4294901760
    %3175 = vmatmul.mubr.f32.gmra.mrb[0].mxu0 %v3174
    %v3176 = vpop.f32.mrb[0].mxu0
    %v3177 = vadd.f32 %v3040, %v3176
    %v3178 = vpop.f32.mrb[0].mxu0
    %3179 = vdwg.mxu0
    %3180 = vmatprep.subr.mxu0 0.0
    %v3181 = vand.u32 %v18, 4294901760
    %3182 = vmatpush1.msra.mxu0 %v3181
    %3183 = vmatprep.subr.mxu0 0.0
    %v3184 = vand.u32 %v19, 4294901760
    %3185 = vmatpush1.msra.mxu0 %v3184
    %3186 = vmatprep.subr.mxu0 0.0
    %v3187 = vand.u32 %v20, 4294901760
    %3188 = vmatpush1.msra.mxu0 %v3187
    %3189 = vmatprep.subr.mxu0 0.0
    %v3190 = vand.u32 %v21, 4294901760
    %3191 = vmatpush1.msra.mxu0 %v3190
    %3192 = vmatprep.subr.mxu0 0.0
    %v3193 = vand.u32 %v22, 4294901760
    %3194 = vmatpush1.msra.mxu0 %v3193
    %3195 = vmatprep.subr.mxu0 0.0
    %v3196 = vand.u32 %v23, 4294901760
    %3197 = vmatpush1.msra.mxu0 %v3196
    %3198 = vmatprep.subr.mxu0 0.0
    %v3199 = vand.u32 %v24, 4294901760
    %3200 = vmatpush1.msra.mxu0 %v3199
    %3201 = vmatprep.subr.mxu0 0.0
    %v3202 = vand.u32 %v25, 4294901760
    %3203 = vmatpush1.msra.mxu0 %v3202
    %3204 = vmatprep.subr.mxu0 0.0
    %v3205 = vand.u32 %v26, 4294901760
    %3206 = vmatpush1.msra.mxu0 %v3205
    %3207 = vmatprep.subr.mxu0 0.0
    %v3208 = vand.u32 %v27, 4294901760
    %3209 = vmatpush1.msra.mxu0 %v3208
    %3210 = vmatprep.subr.mxu0 0.0
    %v3211 = vand.u32 %v28, 4294901760
    %3212 = vmatpush1.msra.mxu0 %v3211
    %3213 = vmatprep.subr.mxu0 0.0
    %v3214 = vand.u32 %v29, 4294901760
    %3215 = vmatpush1.msra.mxu0 %v3214
    %3216 = vmatprep.subr.mxu0 0.0
    %v3217 = vand.u32 %v30, 4294901760
    %3218 = vmatpush1.msra.mxu0 %v3217
    %3219 = vmatprep.subr.mxu0 0.0
    %v3220 = vand.u32 %v31, 4294901760
    %3221 = vmatpush1.msra.mxu0 %v3220
    %3222 = vmatprep.subr.mxu0 0.0
    %v3223 = vand.u32 %v32, 4294901760
    %3224 = vmatpush1.msra.mxu0 %v3223
    %3225 = vmatprep.subr.mxu0 0.0
    %v3226 = vand.u32 %v33, 4294901760
    %3227 = vmatpush1.msra.mxu0 %v3226
    %3228 = vmatprep.subr.mxu0 0.0
    %3229 = vmatpush1.msra.mxu0 0.0
    %3230 = vmatprep.subr.mxu0 0.0
    %3231 = vmatpush1.msra.mxu0 0.0
    %3232 = vmatprep.subr.mxu0 0.0
    %3233 = vmatpush1.msra.mxu0 0.0
    %3234 = vmatprep.subr.mxu0 0.0
    %3235 = vmatpush1.msra.mxu0 0.0
    %3236 = vmatprep.subr.mxu0 0.0
    %3237 = vmatpush1.msra.mxu0 0.0
    %3238 = vmatprep.subr.mxu0 0.0
    %3239 = vmatpush1.msra.mxu0 0.0
    %3240 = vmatprep.subr.mxu0 0.0
    %3241 = vmatpush1.msra.mxu0 0.0
    %3242 = vmatprep.subr.mxu0 0.0
    %3243 = vmatpush1.msra.mxu0 0.0
    %3244 = vmatprep.subr.mxu0 0.0
    %3245 = vmatpush1.msra.mxu0 0.0
    %3246 = vmatprep.subr.mxu0 0.0
    %3247 = vmatpush1.msra.mxu0 0.0
    %3248 = vmatprep.subr.mxu0 0.0
    %3249 = vmatpush1.msra.mxu0 0.0
    %3250 = vmatprep.subr.mxu0 0.0
    %3251 = vmatpush1.msra.mxu0 0.0
    %3252 = vmatprep.subr.mxu0 0.0
    %3253 = vmatpush1.msra.mxu0 0.0
    %3254 = vmatprep.subr.mxu0 0.0
    %3255 = vmatpush1.msra.mxu0 0.0
    %3256 = vmatprep.subr.mxu0 0.0
    %3257 = vmatpush1.msra.mxu0 0.0
    %3258 = vmatprep.subr.mxu0 0.0
    %3259 = vmatpush1.msra.mxu0 0.0
    %3260 = vmatprep.mubr.f32.mxu0 0.0
    %v3261 = vand.u32 %v1713, 4294901760
    %3262 = vmatmul.mubr.f32.gmra.mrb[0].mxu0 %v3261
    %v3263 = vpop.f32.mrb[0].mxu0
    %v3264 = vadd.f32 %v3159, %v3263
    %v3265 = vpop.f32.mrb[0].mxu0
    %3266 = vmatprep.mubr.f32.mxu0 0.0
    %v3267 = vand.u32 %v1714, 4294901760
    %3268 = vmatmul.mubr.f32.gmra.mrb[0].mxu0 %v3267
    %v3269 = vpop.f32.mrb[0].mxu0
    %v3270 = vadd.f32 %v3165, %v3269
    %v3271 = vpop.f32.mrb[0].mxu0
    %3272 = vmatprep.mubr.f32.mxu0 0.0
    %v3273 = vand.u32 %v1715, 4294901760
    %3274 = vmatmul.mubr.f32.gmra.mrb[0].mxu0 %v3273
    %v3275 = vpop.f32.mrb[0].mxu0
    %v3276 = vadd.f32 %v3171, %v3275
    %v3277 = vpop.f32.mrb[0].mxu0
    %3278 = vmatprep.mubr.f32.mxu0 0.0
    %v3279 = vand.u32 %v1716, 4294901760
    %3280 = vmatmul.mubr.f32.gmra.mrb[0].mxu0 %v3279
    %v3281 = vpop.f32.mrb[0].mxu0
    %v3282 = vadd.f32 %v3177, %v3281
    %v3283 = vpop.f32.mrb[0].mxu0
    %3284 = vdwg.mxu0
    %v3285 = vmax.f32 %v3264, 0.0
    %v3286 = vmax.f32 %v3270, 0.0
    %v3287 = vmax.f32 %v3276, 0.0
    %v3288 = vmax.f32 %v3282, 0.0
    %v3289 = vsub.f32 %v3285, %v3287
    %v3290 = vsub.f32 %v3286, %v3288
    %v3291 = vand.u32 2147483647, %v3289
    %v3292 = vand.u32 2147483647, %v3290
    %v3293 = vadd.f32 %v3291, %v3292
    %3294 = vadd.xlane.f32.xlu0 %v3293
    %v3295 = vpop.xlane.xlu0 %3294
    %v3296 = vrot.slane %v3295, 4
    %v3297 = vadd.f32 %v3295, %v3296
    %v3298 = vrot.slane %v3297, 2
    %v3299 = vadd.f32 %v3297, %v3298
    %v3300 = vrot.slane %v3299, 1
    %v3301 = vadd.f32 %v3299, %v3300
    %s3302 = vtos %v3301
    %v3303 = vstv %s3302
    %vm3304 = vcmask 0
    %3305 = vst.msk [vmem:[#allocation2] sm:$0x1] %vm3304, %v3303
    // Predicated region
    $region18: #{soft_edge_loss.1} parent=1 // pred_check
      _
    $region19: #{soft_edge_loss.1} parent=1 // pred_check_branch
      %3307 = sbr.rel (0) target = $region21
    $region20: #{soft_edge_loss.1} parent=1 // pred_region
      %s3309 = ssub.s32 16, 16
      %3310 = vsyncadd [#allocation3], %s3309
      %s3312 = sshll.u32 [#allocation2], 4
      %s3313 = int_to_ptr.vmem [resolvable:$true] %s3312
      %3315 = dma.vmem_to_hbm [thread:$0]  %s3313, 16, %s4, [#allocation3]
    $region21: #{soft_edge_loss.1} parent=1 // pred_fallthru
      _
    // Predicated region
    $region22: #{soft_edge_loss.1} parent=1 // pred_check
      _
    $region23: #{soft_edge_loss.1} parent=1 // pred_check_branch
      %3317 = sbr.rel (0) target = $region25
    $region24: #{soft_edge_loss.1} parent=1 // pred_region
      %3318 = dma.done [#allocation3], 16
    $region25: #{soft_edge_loss.1} parent=1 // pred_fallthru
      _
    %3319 = vsyncpa [#allocation3], 1

</llo_original>
